<compile_context>
chip_gen: v7x
topology: tpu7x:2x2x1
jax: 0.10.0
libtpu: 0.0.40
codegen_flags: <defaults>
</compile_context>

<pallas_src>
import jax
import jax.numpy as jnp
import numpy as np
from jax import lax
from jax.experimental import pallas as pl
from jax.experimental.pallas import tpu as pltpu


# --------------------------- static problem sizes ---------------------------
H0, W0, C0 = 32, 32, 3                     # input image (NHWC)
K = 5                                      # conv kernel size
C1 = 8                                     # conv1 out channels
OH1, OW1 = H0 - K + 1, W0 - K + 1          # 28, 28
PH1, PW1 = OH1 // 2, OW1 // 2              # 14, 14
C2 = 16                                    # conv2 out channels
OH2, OW2 = PH1 - K + 1, PW1 - K + 1        # 10, 10
PH2, PW2 = OH2 // 2, OW2 // 2              # 5, 5
F1, F2, F3 = 120, 84, 10


# ------------------------------ fused kernel --------------------------------

def net1_kernel(x_ref, w1e_ref, w1o_ref, b1_ref, r1_ref,
                w2e_ref, w2o_ref, b2_ref, r2_ref,
                wf1_ref, bf1_ref, wf2_ref, bf2_ref, wf3_ref, bf3_ref,
                o_ref):
    f32, bf16 = jnp.float32, jnp.bfloat16

    x = x_ref[0]                                              # (32, 96) f32, col = w*3 + c

    # ---- conv1 (5x5, 3->8) + ReLU + maxpool 2x2 (all in VMEM) -------------
    acc_e = jnp.zeros((OH1, PW1 * C1), f32)                   # even-width-parity outputs
    acc_o = jnp.zeros((OH1, PW1 * C1), f32)                   # odd-width-parity outputs
    for kh in range(K):
        rows = x[kh:kh + OH1, :].astype(bf16)                 # (28, 96)
        acc_e += jnp.dot(rows, w1e_ref[kh], preferred_element_type=f32)
        acc_o += jnp.dot(rows, w1o_ref[kh], preferred_element_type=f32)
    # width pooling = parity max; bias identical for both parities, relu after
    a1 = jnp.maximum(jnp.maximum(acc_e, acc_o) + b1_ref[...], 0.0)   # (28, 112)
    a1 = a1.astype(bf16)
    # height pooling via 0/1 row-selection matmuls (rows 2*ph / 2*ph+1)
    p1 = jnp.maximum(jnp.dot(r1_ref[0], a1, preferred_element_type=f32),
                     jnp.dot(r1_ref[1], a1, preferred_element_type=f32))
    # p1: (14, 112) == (H, W*C) layout feeding conv2

    # ---- conv2 (5x5, 8->16) + ReLU + maxpool 2x2 ---------------------------
    acc_e = jnp.zeros((OH2, PW2 * C2), f32)
    acc_o = jnp.zeros((OH2, PW2 * C2), f32)
    for kh in range(K):
        rows = p1[kh:kh + OH2, :].astype(bf16)                # (10, 112)
        acc_e += jnp.dot(rows, w2e_ref[kh], preferred_element_type=f32)
        acc_o += jnp.dot(rows, w2o_ref[kh], preferred_element_type=f32)
    a2 = jnp.maximum(jnp.maximum(acc_e, acc_o) + b2_ref[...], 0.0)   # (10, 80)
    a2 = a2.astype(bf16)
    p2 = jnp.maximum(jnp.dot(r2_ref[0], a2, preferred_element_type=f32),
                     jnp.dot(r2_ref[1], a2, preferred_element_type=f32))
    # p2: (5, 80) == (H, W*C) of the final 5x5x16 feature map

    # ---- fc1 -> relu -> fc2 -> relu -> fc3 ---------------------------------
    # torch's view(-1, 400) NCHW flatten is folded into wf1's row ordering.
    h = jnp.zeros((1, F1), f32)
    for ph in range(PH2):
        h += jnp.dot(p2[ph:ph + 1, :].astype(bf16), wf1_ref[ph],
                     preferred_element_type=f32)
    h = jnp.maximum(h + bf1_ref[...], 0.0)                    # (1, 120)
    h = jnp.maximum(jnp.dot(h.astype(bf16), wf2_ref[...],
                            preferred_element_type=f32) + bf2_ref[...], 0.0)  # (1, 84)
    y = jnp.dot(h.astype(bf16), wf3_ref[...],
                preferred_element_type=f32) + bf3_ref[...]    # (1, 10)
    o_ref[0] = y.astype(o_ref.dtype)


# ----------------------- host-side weight preprocessing ---------------------

def _conv_banded(w_oihw, width):
    """Lower a (Cout,Cin,K,K) conv weight to per-kh banded GEMM matrices.

    For input presented as (H, width*Cin) with col = w*Cin + c:
        conv_out[oh, pw*Cout + co] at ow = 2*pw + parity
          = sum_kh  input[oh+kh, :] @ w{e,o}[kh]
    Returns (we, wo), each of shape (K, width*Cin, (OW//2)*Cout).
    """
    w = np.asarray(w_oihw, np.float32)
    cout, cin, k, _ = w.shape
    ow = width - k + 1
    pw = ow // 2
    w_r = np.transpose(w, (2, 3, 1, 0)).reshape(k, k * cin, cout)   # (kh, kw*cin, cout)
    wp = np.zeros((k, width * cin, ow * cout), np.float32)
    for o in range(ow):
        wp[:, o * cin:o * cin + k * cin, o * cout:(o + 1) * cout] = w_r
    we = np.concatenate([wp[:, :, (2 * j) * cout:(2 * j + 1) * cout]
                         for j in range(pw)], axis=2)
    wo = np.concatenate([wp[:, :, (2 * j + 1) * cout:(2 * j + 2) * cout]
                         for j in range(pw)], axis=2)
    return we, wo


def _pool_row_select(oh):
    """(2, oh//2, oh) 0/1 matrices selecting rows 2*ph and 2*ph+1."""
    ph = oh // 2
    r = np.zeros((2, ph, oh), np.float32)
    r[0, np.arange(ph), 2 * np.arange(ph)] = 1.0
    r[1, np.arange(ph), 2 * np.arange(ph) + 1] = 1.0
    return r


def prepare_params(params):
    """One-time repack of torch-layout params into kernel-ready layout."""
    bf16 = jnp.bfloat16
    w1e, w1o = _conv_banded(params["conv1_w"], W0)            # (5, 96, 112) each
    w2e, w2o = _conv_banded(params["conv2_w"], PW1)           # (5, 112, 80) each
    wf1 = np.asarray(params["fc1_w"], np.float32).reshape(F1, C2, PH2, PW2)
    wf1 = np.transpose(wf1, (2, 3, 1, 0)).reshape(PH2, PW2 * C2, F1)  # (5, 80, 120)
    wf2 = np.asarray(params["fc2_w"], np.float32).T           # (120, 84)
    wf3 = np.asarray(params["fc3_w"], np.float32).T           # (84, 10)
    return dict(
        w1e=jnp.asarray(w1e, bf16), w1o=jnp.asarray(w1o, bf16),
        b1=jnp.asarray(np.tile(np.asarray(params["conv1_b"], np.float32), PW1)[None, :]),
        r1=jnp.asarray(_pool_row_select(OH1), bf16),
        w2e=jnp.asarray(w2e, bf16), w2o=jnp.asarray(w2o, bf16),
        b2=jnp.asarray(np.tile(np.asarray(params["conv2_b"], np.float32), PW2)[None, :]),
        r2=jnp.asarray(_pool_row_select(OH2), bf16),
        wf1=jnp.asarray(wf1, bf16),
        bf1=jnp.asarray(np.asarray(params["fc1_b"], np.float32)[None, :]),
        wf2=jnp.asarray(wf2, bf16),
        bf2=jnp.asarray(np.asarray(params["fc2_b"], np.float32)[None, :]),
        wf3=jnp.asarray(wf3, bf16),
        bf3=jnp.asarray(np.asarray(params["fc3_b"], np.float32)[None, :]),
    )


# ------------------------------- the model ----------------------------------

def init_params(key):
    """Deterministic init using the PyTorch shapes & U(-1/sqrt(fan_in), +) rule."""
    def uniform(k, shape, fan_in):
        bound = 1.0 / float(np.sqrt(fan_in))
        return jax.random.uniform(k, shape, jnp.float32, -bound, bound)

    ks = jax.random.split(key, 10)
    return {
        "conv1_w": uniform(ks[0], (C1, C0, K, K), C0 * K * K),
        "conv1_b": uniform(ks[1], (C1,), C0 * K * K),
        "conv2_w": uniform(ks[2], (C2, C1, K, K), C1 * K * K),
        "conv2_b": uniform(ks[3], (C2,), C1 * K * K),
        "fc1_w": uniform(ks[4], (F1, C2 * PH2 * PW2), C2 * PH2 * PW2),
        "fc1_b": uniform(ks[5], (F1,), C2 * PH2 * PW2),
        "fc2_w": uniform(ks[6], (F2, F1), F1),
        "fc2_b": uniform(ks[7], (F2,), F1),
        "fc3_w": uniform(ks[8], (F3, F2), F2),
        "fc3_b": uniform(ks[9], (F3,), F2),
    }


@jax.jit
def net1_forward(prepped, x_nchw):
    n = x_nchw.shape[0]
    # NCHW -> (N, H, W*C): row = h, col = w*Cin + c (the layout the kernel expects)
    x3 = jnp.transpose(x_nchw.astype(jnp.float32), (0, 2, 3, 1)).reshape(n, H0, W0 * C0)

    def const3(i):
        return (0, 0, 0)

    def const2(i):
        return (0, 0)

    out = pl.pallas_call(
        net1_kernel,
        out_shape=jax.ShapeDtypeStruct((n, 1, F3), jnp.float32),
        grid=(n,),
        in_specs=[
            pl.BlockSpec((1, H0, W0 * C0), lambda i: (i, 0, 0)),      # x (per image)
            pl.BlockSpec((K, W0 * C0, PW1 * C1), const3),             # w1 even parity
            pl.BlockSpec((K, W0 * C0, PW1 * C1), const3),             # w1 odd parity
            pl.BlockSpec((1, PW1 * C1), const2),                      # conv1 bias (tiled)
            pl.BlockSpec((2, PH1, OH1), const3),                      # pool1 row selectors
            pl.BlockSpec((K, PW1 * C1, PW2 * C2), const3),            # w2 even parity
            pl.BlockSpec((K, PW1 * C1, PW2 * C2), const3),            # w2 odd parity
            pl.BlockSpec((1, PW2 * C2), const2),                      # conv2 bias (tiled)
            pl.BlockSpec((2, PH2, OH2), const3),                      # pool2 row selectors
            pl.BlockSpec((PH2, PW2 * C2, F1), const3),                # fc1 weight blocks
            pl.BlockSpec((1, F1), const2),                            # fc1 bias
            pl.BlockSpec((F1, F2), const2),                           # fc2 weight
            pl.BlockSpec((1, F2), const2),                            # fc2 bias
            pl.BlockSpec((F2, F3), const2),                           # fc3 weight
            pl.BlockSpec((1, F3), const2),                            # fc3 bias
        ],
        out_specs=pl.BlockSpec((1, 1, F3), lambda i: (i, 0, 0)),
        compiler_params=pltpu.CompilerParams(
            dimension_semantics=("parallel",)),                       # 2 TCs on v7x
    )(x3, prepped["w1e"], prepped["w1o"], prepped["b1"], prepped["r1"],
      prepped["w2e"], prepped["w2o"], prepped["b2"], prepped["r2"],
      prepped["wf1"], prepped["bf1"], prepped["wf2"], prepped["bf2"],
      prepped["wf3"], prepped["bf3"])
    return out.reshape(n, F3)


# ------------------------- pure-JAX reference check --------------------------

def net1_reference(params, x_nchw):
    def conv(x, w, b):
        y = lax.conv_general_dilated(
            x, w, window_strides=(1, 1), padding="VALID",
            dimension_numbers=("NCHW", "OIHW", "NCHW"))
        return jax.nn.relu(y + b.reshape(1, -1, 1, 1))

    def pool(x):
        return lax.reduce_window(x, -jnp.inf, lax.max,
                                 (1, 1, 2, 2), (1, 1, 2, 2), "VALID")

    x = conv(x_nchw.astype(jnp.float32), params["conv1_w"], params["conv1_b"])
    x = pool(x)
    x = conv(x, params["conv2_w"], params["conv2_b"])
    x = pool(x)
    x = x.reshape(x.shape[0], -1)
    x = jax.nn.relu(x @ params["fc1_w"].T + params["fc1_b"])
    x = jax.nn.relu(x @ params["fc2_w"].T + params["fc2_b"])
    return x @ params["fc3_w"].T + params["fc3_b"]


if __name__ == "__main__":
    x = jax.random.normal(jax.random.PRNGKey(0), (4, 3, 32, 32), jnp.float32)
    params = init_params(jax.random.PRNGKey(42))
    prepped = prepare_params(params)

    y = jax.block_until_ready(net1_forward(prepped, x))
    assert y.shape == (4, 10) and y.dtype == jnp.float32

    y_ref = jax.block_until_ready(net1_reference(params, x))
    # tolerance accommodates bf16 MXU operands (f32 accumulation)
    np.testing.assert_allclose(np.asarray(y), np.asarray(y_ref),
                               rtol=3e-2, atol=3e-2)
    print("KERNEL_OK")
</pallas_src>

<mosaic_0001>
module attributes {stable_mosaic.version = 11 : i64} {
  func.func @net1_kernel(%arg0: i32, %arg1: memref<1x32x96xf32, #tpu.memory_space<vmem>>, %arg2: memref<5x96x112xbf16, #tpu.memory_space<vmem>>, %arg3: memref<5x96x112xbf16, #tpu.memory_space<vmem>>, %arg4: memref<1x112xf32, #tpu.memory_space<vmem>>, %arg5: memref<2x14x28xbf16, #tpu.memory_space<vmem>>, %arg6: memref<5x112x80xbf16, #tpu.memory_space<vmem>>, %arg7: memref<5x112x80xbf16, #tpu.memory_space<vmem>>, %arg8: memref<1x80xf32, #tpu.memory_space<vmem>>, %arg9: memref<2x5x10xbf16, #tpu.memory_space<vmem>>, %arg10: memref<5x80x120xbf16, #tpu.memory_space<vmem>>, %arg11: memref<1x120xf32, #tpu.memory_space<vmem>>, %arg12: memref<120x84xbf16, #tpu.memory_space<vmem>>, %arg13: memref<1x84xf32, #tpu.memory_space<vmem>>, %arg14: memref<84x10xbf16, #tpu.memory_space<vmem>>, %arg15: memref<1x10xf32, #tpu.memory_space<vmem>>, %arg16: memref<1x1x10xf32, #tpu.memory_space<vmem>>) attributes {dimension_semantics = [#tpu.dimension_semantics<parallel>], iteration_bounds = array<i64: 4>, scalar_prefetch = 0 : i64, scratch_operands = 0 : i64, tpu.core_type = #tpu.core_type<tc>, window_params = [{transform_indices = @transform_0, window_bounds = array<i64: 1, 32, 96>}, {pipeline_mode = #tpu.pipeline_mode<synchronous>, transform_indices = @transform_1, window_bounds = array<i64: 5, 96, 112>}, {pipeline_mode = #tpu.pipeline_mode<synchronous>, transform_indices = @transform_2, window_bounds = array<i64: 5, 96, 112>}, {pipeline_mode = #tpu.pipeline_mode<synchronous>, transform_indices = @transform_3, window_bounds = array<i64: 1, 112>}, {pipeline_mode = #tpu.pipeline_mode<synchronous>, transform_indices = @transform_4, window_bounds = array<i64: 2, 14, 28>}, {pipeline_mode = #tpu.pipeline_mode<synchronous>, transform_indices = @transform_5, window_bounds = array<i64: 5, 112, 80>}, {pipeline_mode = #tpu.pipeline_mode<synchronous>, transform_indices = @transform_6, window_bounds = array<i64: 5, 112, 80>}, {pipeline_mode = #tpu.pipeline_mode<synchronous>, transform_indices = @transform_7, window_bounds = array<i64: 1, 80>}, {pipeline_mode = #tpu.pipeline_mode<synchronous>, transform_indices = @transform_8, window_bounds = array<i64: 2, 5, 10>}, {pipeline_mode = #tpu.pipeline_mode<synchronous>, transform_indices = @transform_9, window_bounds = array<i64: 5, 80, 120>}, {pipeline_mode = #tpu.pipeline_mode<synchronous>, transform_indices = @transform_10, window_bounds = array<i64: 1, 120>}, {pipeline_mode = #tpu.pipeline_mode<synchronous>, transform_indices = @transform_11, window_bounds = array<i64: 120, 84>}, {pipeline_mode = #tpu.pipeline_mode<synchronous>, transform_indices = @transform_12, window_bounds = array<i64: 1, 84>}, {pipeline_mode = #tpu.pipeline_mode<synchronous>, transform_indices = @transform_13, window_bounds = array<i64: 84, 10>}, {pipeline_mode = #tpu.pipeline_mode<synchronous>, transform_indices = @transform_14, window_bounds = array<i64: 1, 10>}, {transform_indices = @transform_15, window_bounds = array<i64: 1, 1, 10>}]} {
    %c0 = arith.constant 0 : index
    %c0_0 = arith.constant 0 : index
    %c0_1 = arith.constant 0 : index
    %0 = vector.load %arg1[%c0, %c0_0, %c0_1] : memref<1x32x96xf32, #tpu.memory_space<vmem>>, vector<1x32x96xf32>
    %1 = vector.shape_cast %0 : vector<1x32x96xf32> to vector<32x96xf32>
    %cst = arith.constant 0.000000e+00 : f32
    %2 = vector.broadcast %cst : f32 to vector<28x112xf32>
    %cst_2 = arith.constant 0.000000e+00 : f32
    %3 = vector.broadcast %cst_2 : f32 to vector<28x112xf32>
    %4 = vector.extract_strided_slice %1 {offsets = [0, 0], sizes = [28, 96], strides = [1, 1]} : vector<32x96xf32> to vector<28x96xf32>
    %5 = arith.truncf %4 : vector<28x96xf32> to vector<28x96xbf16>
    %c0_3 = arith.constant 0 : index
    %c0_4 = arith.constant 0 : index
    %c0_5 = arith.constant 0 : index
    %6 = vector.load %arg2[%c0_3, %c0_4, %c0_5] : memref<5x96x112xbf16, #tpu.memory_space<vmem>>, vector<1x96x112xbf16>
    %7 = vector.shape_cast %6 : vector<1x96x112xbf16> to vector<96x112xbf16>
    %cst_6 = arith.constant dense<0.000000e+00> : vector<28x112xf32>
    %8 = tpu.matmul %5, %7, %cst_6 {dimension_numbers = #tpu.dot_dimension_numbers<[1], [0], [0], [1], [0, 0, 1, 1], [], []>} : vector<28x96xbf16>, vector<96x112xbf16>, vector<28x112xf32> -> vector<28x112xf32>
    %9 = arith.addf %2, %8 : vector<28x112xf32>
    %c0_7 = arith.constant 0 : index
    %c0_8 = arith.constant 0 : index
    %c0_9 = arith.constant 0 : index
    %10 = vector.load %arg3[%c0_7, %c0_8, %c0_9] : memref<5x96x112xbf16, #tpu.memory_space<vmem>>, vector<1x96x112xbf16>
    %11 = vector.shape_cast %10 : vector<1x96x112xbf16> to vector<96x112xbf16>
    %cst_10 = arith.constant dense<0.000000e+00> : vector<28x112xf32>
    %12 = tpu.matmul %5, %11, %cst_10 {dimension_numbers = #tpu.dot_dimension_numbers<[1], [0], [0], [1], [0, 0, 1, 1], [], []>} : vector<28x96xbf16>, vector<96x112xbf16>, vector<28x112xf32> -> vector<28x112xf32>
    %13 = arith.addf %3, %12 : vector<28x112xf32>
    %14 = vector.extract_strided_slice %1 {offsets = [1, 0], sizes = [28, 96], strides = [1, 1]} : vector<32x96xf32> to vector<28x96xf32>
    %15 = arith.truncf %14 : vector<28x96xf32> to vector<28x96xbf16>
    %c1 = arith.constant 1 : index
    %c0_11 = arith.constant 0 : index
    %c0_12 = arith.constant 0 : index
    %16 = vector.load %arg2[%c1, %c0_11, %c0_12] : memref<5x96x112xbf16, #tpu.memory_space<vmem>>, vector<1x96x112xbf16>
    %17 = vector.shape_cast %16 : vector<1x96x112xbf16> to vector<96x112xbf16>
    %cst_13 = arith.constant dense<0.000000e+00> : vector<28x112xf32>
    %18 = tpu.matmul %15, %17, %cst_13 {dimension_numbers = #tpu.dot_dimension_numbers<[1], [0], [0], [1], [0, 0, 1, 1], [], []>} : vector<28x96xbf16>, vector<96x112xbf16>, vector<28x112xf32> -> vector<28x112xf32>
    %19 = arith.addf %9, %18 : vector<28x112xf32>
    %c1_14 = arith.constant 1 : index
    %c0_15 = arith.constant 0 : index
    %c0_16 = arith.constant 0 : index
    %20 = vector.load %arg3[%c1_14, %c0_15, %c0_16] : memref<5x96x112xbf16, #tpu.memory_space<vmem>>, vector<1x96x112xbf16>
    %21 = vector.shape_cast %20 : vector<1x96x112xbf16> to vector<96x112xbf16>
    %cst_17 = arith.constant dense<0.000000e+00> : vector<28x112xf32>
    %22 = tpu.matmul %15, %21, %cst_17 {dimension_numbers = #tpu.dot_dimension_numbers<[1], [0], [0], [1], [0, 0, 1, 1], [], []>} : vector<28x96xbf16>, vector<96x112xbf16>, vector<28x112xf32> -> vector<28x112xf32>
    %23 = arith.addf %13, %22 : vector<28x112xf32>
    %24 = vector.extract_strided_slice %1 {offsets = [2, 0], sizes = [28, 96], strides = [1, 1]} : vector<32x96xf32> to vector<28x96xf32>
    %25 = arith.truncf %24 : vector<28x96xf32> to vector<28x96xbf16>
    %c2 = arith.constant 2 : index
    %c0_18 = arith.constant 0 : index
    %c0_19 = arith.constant 0 : index
    %26 = vector.load %arg2[%c2, %c0_18, %c0_19] : memref<5x96x112xbf16, #tpu.memory_space<vmem>>, vector<1x96x112xbf16>
    %27 = vector.shape_cast %26 : vector<1x96x112xbf16> to vector<96x112xbf16>
    %cst_20 = arith.constant dense<0.000000e+00> : vector<28x112xf32>
    %28 = tpu.matmul %25, %27, %cst_20 {dimension_numbers = #tpu.dot_dimension_numbers<[1], [0], [0], [1], [0, 0, 1, 1], [], []>} : vector<28x96xbf16>, vector<96x112xbf16>, vector<28x112xf32> -> vector<28x112xf32>
    %29 = arith.addf %19, %28 : vector<28x112xf32>
    %c2_21 = arith.constant 2 : index
    %c0_22 = arith.constant 0 : index
    %c0_23 = arith.constant 0 : index
    %30 = vector.load %arg3[%c2_21, %c0_22, %c0_23] : memref<5x96x112xbf16, #tpu.memory_space<vmem>>, vector<1x96x112xbf16>
    %31 = vector.shape_cast %30 : vector<1x96x112xbf16> to vector<96x112xbf16>
    %cst_24 = arith.constant dense<0.000000e+00> : vector<28x112xf32>
    %32 = tpu.matmul %25, %31, %cst_24 {dimension_numbers = #tpu.dot_dimension_numbers<[1], [0], [0], [1], [0, 0, 1, 1], [], []>} : vector<28x96xbf16>, vector<96x112xbf16>, vector<28x112xf32> -> vector<28x112xf32>
    %33 = arith.addf %23, %32 : vector<28x112xf32>
    %34 = vector.extract_strided_slice %1 {offsets = [3, 0], sizes = [28, 96], strides = [1, 1]} : vector<32x96xf32> to vector<28x96xf32>
    %35 = arith.truncf %34 : vector<28x96xf32> to vector<28x96xbf16>
    %c3 = arith.constant 3 : index
    %c0_25 = arith.constant 0 : index
    %c0_26 = arith.constant 0 : index
    %36 = vector.load %arg2[%c3, %c0_25, %c0_26] : memref<5x96x112xbf16, #tpu.memory_space<vmem>>, vector<1x96x112xbf16>
    %37 = vector.shape_cast %36 : vector<1x96x112xbf16> to vector<96x112xbf16>
    %cst_27 = arith.constant dense<0.000000e+00> : vector<28x112xf32>
    %38 = tpu.matmul %35, %37, %cst_27 {dimension_numbers = #tpu.dot_dimension_numbers<[1], [0], [0], [1], [0, 0, 1, 1], [], []>} : vector<28x96xbf16>, vector<96x112xbf16>, vector<28x112xf32> -> vector<28x112xf32>
    %39 = arith.addf %29, %38 : vector<28x112xf32>
    %c3_28 = arith.constant 3 : index
    %c0_29 = arith.constant 0 : index
    %c0_30 = arith.constant 0 : index
    %40 = vector.load %arg3[%c3_28, %c0_29, %c0_30] : memref<5x96x112xbf16, #tpu.memory_space<vmem>>, vector<1x96x112xbf16>
    %41 = vector.shape_cast %40 : vector<1x96x112xbf16> to vector<96x112xbf16>
    %cst_31 = arith.constant dense<0.000000e+00> : vector<28x112xf32>
    %42 = tpu.matmul %35, %41, %cst_31 {dimension_numbers = #tpu.dot_dimension_numbers<[1], [0], [0], [1], [0, 0, 1, 1], [], []>} : vector<28x96xbf16>, vector<96x112xbf16>, vector<28x112xf32> -> vector<28x112xf32>
    %43 = arith.addf %33, %42 : vector<28x112xf32>
    %44 = vector.extract_strided_slice %1 {offsets = [4, 0], sizes = [28, 96], strides = [1, 1]} : vector<32x96xf32> to vector<28x96xf32>
    %45 = arith.truncf %44 : vector<28x96xf32> to vector<28x96xbf16>
    %c4 = arith.constant 4 : index
    %c0_32 = arith.constant 0 : index
    %c0_33 = arith.constant 0 : index
    %46 = vector.load %arg2[%c4, %c0_32, %c0_33] : memref<5x96x112xbf16, #tpu.memory_space<vmem>>, vector<1x96x112xbf16>
    %47 = vector.shape_cast %46 : vector<1x96x112xbf16> to vector<96x112xbf16>
    %cst_34 = arith.constant dense<0.000000e+00> : vector<28x112xf32>
    %48 = tpu.matmul %45, %47, %cst_34 {dimension_numbers = #tpu.dot_dimension_numbers<[1], [0], [0], [1], [0, 0, 1, 1], [], []>} : vector<28x96xbf16>, vector<96x112xbf16>, vector<28x112xf32> -> vector<28x112xf32>
    %49 = arith.addf %39, %48 : vector<28x112xf32>
    %c4_35 = arith.constant 4 : index
    %c0_36 = arith.constant 0 : index
    %c0_37 = arith.constant 0 : index
    %50 = vector.load %arg3[%c4_35, %c0_36, %c0_37] : memref<5x96x112xbf16, #tpu.memory_space<vmem>>, vector<1x96x112xbf16>
    %51 = vector.shape_cast %50 : vector<1x96x112xbf16> to vector<96x112xbf16>
    %cst_38 = arith.constant dense<0.000000e+00> : vector<28x112xf32>
    %52 = tpu.matmul %45, %51, %cst_38 {dimension_numbers = #tpu.dot_dimension_numbers<[1], [0], [0], [1], [0, 0, 1, 1], [], []>} : vector<28x96xbf16>, vector<96x112xbf16>, vector<28x112xf32> -> vector<28x112xf32>
    %53 = arith.addf %43, %52 : vector<28x112xf32>
    %54 = arith.maximumf %49, %53 : vector<28x112xf32>
    %c0_39 = arith.constant 0 : index
    %c0_40 = arith.constant 0 : index
    %55 = vector.load %arg4[%c0_39, %c0_40] : memref<1x112xf32, #tpu.memory_space<vmem>>, vector<1x112xf32>
    %56 = vector.broadcast %55 : vector<1x112xf32> to vector<28x112xf32>
    %57 = arith.addf %54, %56 : vector<28x112xf32>
    %cst_41 = arith.constant 0.000000e+00 : f32
    %58 = vector.broadcast %cst_41 : f32 to vector<28x112xf32>
    %59 = arith.maximumf %57, %58 : vector<28x112xf32>
    %60 = arith.truncf %59 : vector<28x112xf32> to vector<28x112xbf16>
    %c0_42 = arith.constant 0 : index
    %c0_43 = arith.constant 0 : index
    %c0_44 = arith.constant 0 : index
    %61 = vector.load %arg5[%c0_42, %c0_43, %c0_44] : memref<2x14x28xbf16, #tpu.memory_space<vmem>>, vector<1x14x28xbf16>
    %62 = vector.shape_cast %61 : vector<1x14x28xbf16> to vector<14x28xbf16>
    %cst_45 = arith.constant dense<0.000000e+00> : vector<14x112xf32>
    %63 = tpu.matmul %62, %60, %cst_45 {dimension_numbers = #tpu.dot_dimension_numbers<[1], [0], [0], [1], [0, 0, 1, 1], [], []>} : vector<14x28xbf16>, vector<28x112xbf16>, vector<14x112xf32> -> vector<14x112xf32>
    %c1_46 = arith.constant 1 : index
    %c0_47 = arith.constant 0 : index
    %c0_48 = arith.constant 0 : index
    %64 = vector.load %arg5[%c1_46, %c0_47, %c0_48] : memref<2x14x28xbf16, #tpu.memory_space<vmem>>, vector<1x14x28xbf16>
    %65 = vector.shape_cast %64 : vector<1x14x28xbf16> to vector<14x28xbf16>
    %cst_49 = arith.constant dense<0.000000e+00> : vector<14x112xf32>
    %66 = tpu.matmul %65, %60, %cst_49 {dimension_numbers = #tpu.dot_dimension_numbers<[1], [0], [0], [1], [0, 0, 1, 1], [], []>} : vector<14x28xbf16>, vector<28x112xbf16>, vector<14x112xf32> -> vector<14x112xf32>
    %67 = arith.maximumf %63, %66 : vector<14x112xf32>
    %cst_50 = arith.constant 0.000000e+00 : f32
    %68 = vector.broadcast %cst_50 : f32 to vector<10x80xf32>
    %cst_51 = arith.constant 0.000000e+00 : f32
    %69 = vector.broadcast %cst_51 : f32 to vector<10x80xf32>
    %70 = vector.extract_strided_slice %67 {offsets = [0, 0], sizes = [10, 112], strides = [1, 1]} : vector<14x112xf32> to vector<10x112xf32>
    %71 = arith.truncf %70 : vector<10x112xf32> to vector<10x112xbf16>
    %c0_52 = arith.constant 0 : index
    %c0_53 = arith.constant 0 : index
    %c0_54 = arith.constant 0 : index
    %72 = vector.load %arg6[%c0_52, %c0_53, %c0_54] : memref<5x112x80xbf16, #tpu.memory_space<vmem>>, vector<1x112x80xbf16>
    %73 = vector.shape_cast %72 : vector<1x112x80xbf16> to vector<112x80xbf16>
    %cst_55 = arith.constant dense<0.000000e+00> : vector<10x80xf32>
    %74 = tpu.matmul %71, %73, %cst_55 {dimension_numbers = #tpu.dot_dimension_numbers<[1], [0], [0], [1], [0, 0, 1, 1], [], []>} : vector<10x112xbf16>, vector<112x80xbf16>, vector<10x80xf32> -> vector<10x80xf32>
    %75 = arith.addf %68, %74 : vector<10x80xf32>
    %c0_56 = arith.constant 0 : index
    %c0_57 = arith.constant 0 : index
    %c0_58 = arith.constant 0 : index
    %76 = vector.load %arg7[%c0_56, %c0_57, %c0_58] : memref<5x112x80xbf16, #tpu.memory_space<vmem>>, vector<1x112x80xbf16>
    %77 = vector.shape_cast %76 : vector<1x112x80xbf16> to vector<112x80xbf16>
    %cst_59 = arith.constant dense<0.000000e+00> : vector<10x80xf32>
    %78 = tpu.matmul %71, %77, %cst_59 {dimension_numbers = #tpu.dot_dimension_numbers<[1], [0], [0], [1], [0, 0, 1, 1], [], []>} : vector<10x112xbf16>, vector<112x80xbf16>, vector<10x80xf32> -> vector<10x80xf32>
    %79 = arith.addf %69, %78 : vector<10x80xf32>
    %80 = vector.extract_strided_slice %67 {offsets = [1, 0], sizes = [10, 112], strides = [1, 1]} : vector<14x112xf32> to vector<10x112xf32>
    %81 = arith.truncf %80 : vector<10x112xf32> to vector<10x112xbf16>
    %c1_60 = arith.constant 1 : index
    %c0_61 = arith.constant 0 : index
    %c0_62 = arith.constant 0 : index
    %82 = vector.load %arg6[%c1_60, %c0_61, %c0_62] : memref<5x112x80xbf16, #tpu.memory_space<vmem>>, vector<1x112x80xbf16>
    %83 = vector.shape_cast %82 : vector<1x112x80xbf16> to vector<112x80xbf16>
    %cst_63 = arith.constant dense<0.000000e+00> : vector<10x80xf32>
    %84 = tpu.matmul %81, %83, %cst_63 {dimension_numbers = #tpu.dot_dimension_numbers<[1], [0], [0], [1], [0, 0, 1, 1], [], []>} : vector<10x112xbf16>, vector<112x80xbf16>, vector<10x80xf32> -> vector<10x80xf32>
    %85 = arith.addf %75, %84 : vector<10x80xf32>
    %c1_64 = arith.constant 1 : index
    %c0_65 = arith.constant 0 : index
    %c0_66 = arith.constant 0 : index
    %86 = vector.load %arg7[%c1_64, %c0_65, %c0_66] : memref<5x112x80xbf16, #tpu.memory_space<vmem>>, vector<1x112x80xbf16>
    %87 = vector.shape_cast %86 : vector<1x112x80xbf16> to vector<112x80xbf16>
    %cst_67 = arith.constant dense<0.000000e+00> : vector<10x80xf32>
    %88 = tpu.matmul %81, %87, %cst_67 {dimension_numbers = #tpu.dot_dimension_numbers<[1], [0], [0], [1], [0, 0, 1, 1], [], []>} : vector<10x112xbf16>, vector<112x80xbf16>, vector<10x80xf32> -> vector<10x80xf32>
    %89 = arith.addf %79, %88 : vector<10x80xf32>
    %90 = vector.extract_strided_slice %67 {offsets = [2, 0], sizes = [10, 112], strides = [1, 1]} : vector<14x112xf32> to vector<10x112xf32>
    %91 = arith.truncf %90 : vector<10x112xf32> to vector<10x112xbf16>
    %c2_68 = arith.constant 2 : index
    %c0_69 = arith.constant 0 : index
    %c0_70 = arith.constant 0 : index
    %92 = vector.load %arg6[%c2_68, %c0_69, %c0_70] : memref<5x112x80xbf16, #tpu.memory_space<vmem>>, vector<1x112x80xbf16>
    %93 = vector.shape_cast %92 : vector<1x112x80xbf16> to vector<112x80xbf16>
    %cst_71 = arith.constant dense<0.000000e+00> : vector<10x80xf32>
    %94 = tpu.matmul %91, %93, %cst_71 {dimension_numbers = #tpu.dot_dimension_numbers<[1], [0], [0], [1], [0, 0, 1, 1], [], []>} : vector<10x112xbf16>, vector<112x80xbf16>, vector<10x80xf32> -> vector<10x80xf32>
    %95 = arith.addf %85, %94 : vector<10x80xf32>
    %c2_72 = arith.constant 2 : index
    %c0_73 = arith.constant 0 : index
    %c0_74 = arith.constant 0 : index
    %96 = vector.load %arg7[%c2_72, %c0_73, %c0_74] : memref<5x112x80xbf16, #tpu.memory_space<vmem>>, vector<1x112x80xbf16>
    %97 = vector.shape_cast %96 : vector<1x112x80xbf16> to vector<112x80xbf16>
    %cst_75 = arith.constant dense<0.000000e+00> : vector<10x80xf32>
    %98 = tpu.matmul %91, %97, %cst_75 {dimension_numbers = #tpu.dot_dimension_numbers<[1], [0], [0], [1], [0, 0, 1, 1], [], []>} : vector<10x112xbf16>, vector<112x80xbf16>, vector<10x80xf32> -> vector<10x80xf32>
    %99 = arith.addf %89, %98 : vector<10x80xf32>
    %100 = vector.extract_strided_slice %67 {offsets = [3, 0], sizes = [10, 112], strides = [1, 1]} : vector<14x112xf32> to vector<10x112xf32>
    %101 = arith.truncf %100 : vector<10x112xf32> to vector<10x112xbf16>
    %c3_76 = arith.constant 3 : index
    %c0_77 = arith.constant 0 : index
    %c0_78 = arith.constant 0 : index
    %102 = vector.load %arg6[%c3_76, %c0_77, %c0_78] : memref<5x112x80xbf16, #tpu.memory_space<vmem>>, vector<1x112x80xbf16>
    %103 = vector.shape_cast %102 : vector<1x112x80xbf16> to vector<112x80xbf16>
    %cst_79 = arith.constant dense<0.000000e+00> : vector<10x80xf32>
    %104 = tpu.matmul %101, %103, %cst_79 {dimension_numbers = #tpu.dot_dimension_numbers<[1], [0], [0], [1], [0, 0, 1, 1], [], []>} : vector<10x112xbf16>, vector<112x80xbf16>, vector<10x80xf32> -> vector<10x80xf32>
    %105 = arith.addf %95, %104 : vector<10x80xf32>
    %c3_80 = arith.constant 3 : index
    %c0_81 = arith.constant 0 : index
    %c0_82 = arith.constant 0 : index
    %106 = vector.load %arg7[%c3_80, %c0_81, %c0_82] : memref<5x112x80xbf16, #tpu.memory_space<vmem>>, vector<1x112x80xbf16>
    %107 = vector.shape_cast %106 : vector<1x112x80xbf16> to vector<112x80xbf16>
    %cst_83 = arith.constant dense<0.000000e+00> : vector<10x80xf32>
    %108 = tpu.matmul %101, %107, %cst_83 {dimension_numbers = #tpu.dot_dimension_numbers<[1], [0], [0], [1], [0, 0, 1, 1], [], []>} : vector<10x112xbf16>, vector<112x80xbf16>, vector<10x80xf32> -> vector<10x80xf32>
    %109 = arith.addf %99, %108 : vector<10x80xf32>
    %110 = vector.extract_strided_slice %67 {offsets = [4, 0], sizes = [10, 112], strides = [1, 1]} : vector<14x112xf32> to vector<10x112xf32>
    %111 = arith.truncf %110 : vector<10x112xf32> to vector<10x112xbf16>
    %c4_84 = arith.constant 4 : index
    %c0_85 = arith.constant 0 : index
    %c0_86 = arith.constant 0 : index
    %112 = vector.load %arg6[%c4_84, %c0_85, %c0_86] : memref<5x112x80xbf16, #tpu.memory_space<vmem>>, vector<1x112x80xbf16>
    %113 = vector.shape_cast %112 : vector<1x112x80xbf16> to vector<112x80xbf16>
    %cst_87 = arith.constant dense<0.000000e+00> : vector<10x80xf32>
    %114 = tpu.matmul %111, %113, %cst_87 {dimension_numbers = #tpu.dot_dimension_numbers<[1], [0], [0], [1], [0, 0, 1, 1], [], []>} : vector<10x112xbf16>, vector<112x80xbf16>, vector<10x80xf32> -> vector<10x80xf32>
    %115 = arith.addf %105, %114 : vector<10x80xf32>
    %c4_88 = arith.constant 4 : index
    %c0_89 = arith.constant 0 : index
    %c0_90 = arith.constant 0 : index
    %116 = vector.load %arg7[%c4_88, %c0_89, %c0_90] : memref<5x112x80xbf16, #tpu.memory_space<vmem>>, vector<1x112x80xbf16>
    %117 = vector.shape_cast %116 : vector<1x112x80xbf16> to vector<112x80xbf16>
    %cst_91 = arith.constant dense<0.000000e+00> : vector<10x80xf32>
    %118 = tpu.matmul %111, %117, %cst_91 {dimension_numbers = #tpu.dot_dimension_numbers<[1], [0], [0], [1], [0, 0, 1, 1], [], []>} : vector<10x112xbf16>, vector<112x80xbf16>, vector<10x80xf32> -> vector<10x80xf32>
    %119 = arith.addf %109, %118 : vector<10x80xf32>
    %120 = arith.maximumf %115, %119 : vector<10x80xf32>
    %c0_92 = arith.constant 0 : index
    %c0_93 = arith.constant 0 : index
    %121 = vector.load %arg8[%c0_92, %c0_93] : memref<1x80xf32, #tpu.memory_space<vmem>>, vector<1x80xf32>
    %122 = vector.broadcast %121 : vector<1x80xf32> to vector<10x80xf32>
    %123 = arith.addf %120, %122 : vector<10x80xf32>
    %cst_94 = arith.constant 0.000000e+00 : f32
    %124 = vector.broadcast %cst_94 : f32 to vector<10x80xf32>
    %125 = arith.maximumf %123, %124 : vector<10x80xf32>
    %126 = arith.truncf %125 : vector<10x80xf32> to vector<10x80xbf16>
    %c0_95 = arith.constant 0 : index
    %c0_96 = arith.constant 0 : index
    %c0_97 = arith.constant 0 : index
    %127 = vector.load %arg9[%c0_95, %c0_96, %c0_97] : memref<2x5x10xbf16, #tpu.memory_space<vmem>>, vector<1x5x10xbf16>
    %128 = vector.shape_cast %127 : vector<1x5x10xbf16> to vector<5x10xbf16>
    %cst_98 = arith.constant dense<0.000000e+00> : vector<5x80xf32>
    %129 = tpu.matmul %128, %126, %cst_98 {dimension_numbers = #tpu.dot_dimension_numbers<[1], [0], [0], [1], [0, 0, 1, 1], [], []>} : vector<5x10xbf16>, vector<10x80xbf16>, vector<5x80xf32> -> vector<5x80xf32>
    %c1_99 = arith.constant 1 : index
    %c0_100 = arith.constant 0 : index
    %c0_101 = arith.constant 0 : index
    %130 = vector.load %arg9[%c1_99, %c0_100, %c0_101] : memref<2x5x10xbf16, #tpu.memory_space<vmem>>, vector<1x5x10xbf16>
    %131 = vector.shape_cast %130 : vector<1x5x10xbf16> to vector<5x10xbf16>
    %cst_102 = arith.constant dense<0.000000e+00> : vector<5x80xf32>
    %132 = tpu.matmul %131, %126, %cst_102 {dimension_numbers = #tpu.dot_dimension_numbers<[1], [0], [0], [1], [0, 0, 1, 1], [], []>} : vector<5x10xbf16>, vector<10x80xbf16>, vector<5x80xf32> -> vector<5x80xf32>
    %133 = arith.maximumf %129, %132 : vector<5x80xf32>
    %cst_103 = arith.constant 0.000000e+00 : f32
    %134 = vector.broadcast %cst_103 : f32 to vector<1x120xf32>
    %135 = vector.extract_strided_slice %133 {offsets = [0, 0], sizes = [1, 80], strides = [1, 1]} : vector<5x80xf32> to vector<1x80xf32>
    %136 = arith.truncf %135 : vector<1x80xf32> to vector<1x80xbf16>
    %c0_104 = arith.constant 0 : index
    %c0_105 = arith.constant 0 : index
    %c0_106 = arith.constant 0 : index
    %137 = vector.load %arg10[%c0_104, %c0_105, %c0_106] : memref<5x80x120xbf16, #tpu.memory_space<vmem>>, vector<1x80x120xbf16>
    %138 = vector.shape_cast %137 : vector<1x80x120xbf16> to vector<80x120xbf16>
    %cst_107 = arith.constant dense<0.000000e+00> : vector<1x120xf32>
    %139 = tpu.matmul %136, %138, %cst_107 {dimension_numbers = #tpu.dot_dimension_numbers<[1], [0], [0], [1], [0, 0, 1, 1], [], []>} : vector<1x80xbf16>, vector<80x120xbf16>, vector<1x120xf32> -> vector<1x120xf32>
    %140 = arith.addf %134, %139 : vector<1x120xf32>
    %141 = vector.extract_strided_slice %133 {offsets = [1, 0], sizes = [1, 80], strides = [1, 1]} : vector<5x80xf32> to vector<1x80xf32>
    %142 = arith.truncf %141 : vector<1x80xf32> to vector<1x80xbf16>
    %c1_108 = arith.constant 1 : index
    %c0_109 = arith.constant 0 : index
    %c0_110 = arith.constant 0 : index
    %143 = vector.load %arg10[%c1_108, %c0_109, %c0_110] : memref<5x80x120xbf16, #tpu.memory_space<vmem>>, vector<1x80x120xbf16>
    %144 = vector.shape_cast %143 : vector<1x80x120xbf16> to vector<80x120xbf16>
    %cst_111 = arith.constant dense<0.000000e+00> : vector<1x120xf32>
    %145 = tpu.matmul %142, %144, %cst_111 {dimension_numbers = #tpu.dot_dimension_numbers<[1], [0], [0], [1], [0, 0, 1, 1], [], []>} : vector<1x80xbf16>, vector<80x120xbf16>, vector<1x120xf32> -> vector<1x120xf32>
    %146 = arith.addf %140, %145 : vector<1x120xf32>
    %147 = vector.extract_strided_slice %133 {offsets = [2, 0], sizes = [1, 80], strides = [1, 1]} : vector<5x80xf32> to vector<1x80xf32>
    %148 = arith.truncf %147 : vector<1x80xf32> to vector<1x80xbf16>
    %c2_112 = arith.constant 2 : index
    %c0_113 = arith.constant 0 : index
    %c0_114 = arith.constant 0 : index
    %149 = vector.load %arg10[%c2_112, %c0_113, %c0_114] : memref<5x80x120xbf16, #tpu.memory_space<vmem>>, vector<1x80x120xbf16>
    %150 = vector.shape_cast %149 : vector<1x80x120xbf16> to vector<80x120xbf16>
    %cst_115 = arith.constant dense<0.000000e+00> : vector<1x120xf32>
    %151 = tpu.matmul %148, %150, %cst_115 {dimension_numbers = #tpu.dot_dimension_numbers<[1], [0], [0], [1], [0, 0, 1, 1], [], []>} : vector<1x80xbf16>, vector<80x120xbf16>, vector<1x120xf32> -> vector<1x120xf32>
    %152 = arith.addf %146, %151 : vector<1x120xf32>
    %153 = vector.extract_strided_slice %133 {offsets = [3, 0], sizes = [1, 80], strides = [1, 1]} : vector<5x80xf32> to vector<1x80xf32>
    %154 = arith.truncf %153 : vector<1x80xf32> to vector<1x80xbf16>
    %c3_116 = arith.constant 3 : index
    %c0_117 = arith.constant 0 : index
    %c0_118 = arith.constant 0 : index
    %155 = vector.load %arg10[%c3_116, %c0_117, %c0_118] : memref<5x80x120xbf16, #tpu.memory_space<vmem>>, vector<1x80x120xbf16>
    %156 = vector.shape_cast %155 : vector<1x80x120xbf16> to vector<80x120xbf16>
    %cst_119 = arith.constant dense<0.000000e+00> : vector<1x120xf32>
    %157 = tpu.matmul %154, %156, %cst_119 {dimension_numbers = #tpu.dot_dimension_numbers<[1], [0], [0], [1], [0, 0, 1, 1], [], []>} : vector<1x80xbf16>, vector<80x120xbf16>, vector<1x120xf32> -> vector<1x120xf32>
    %158 = arith.addf %152, %157 : vector<1x120xf32>
    %159 = vector.extract_strided_slice %133 {offsets = [4, 0], sizes = [1, 80], strides = [1, 1]} : vector<5x80xf32> to vector<1x80xf32>
    %160 = arith.truncf %159 : vector<1x80xf32> to vector<1x80xbf16>
    %c4_120 = arith.constant 4 : index
    %c0_121 = arith.constant 0 : index
    %c0_122 = arith.constant 0 : index
    %161 = vector.load %arg10[%c4_120, %c0_121, %c0_122] : memref<5x80x120xbf16, #tpu.memory_space<vmem>>, vector<1x80x120xbf16>
    %162 = vector.shape_cast %161 : vector<1x80x120xbf16> to vector<80x120xbf16>
    %cst_123 = arith.constant dense<0.000000e+00> : vector<1x120xf32>
    %163 = tpu.matmul %160, %162, %cst_123 {dimension_numbers = #tpu.dot_dimension_numbers<[1], [0], [0], [1], [0, 0, 1, 1], [], []>} : vector<1x80xbf16>, vector<80x120xbf16>, vector<1x120xf32> -> vector<1x120xf32>
    %164 = arith.addf %158, %163 : vector<1x120xf32>
    %c0_124 = arith.constant 0 : index
    %c0_125 = arith.constant 0 : index
    %165 = vector.load %arg11[%c0_124, %c0_125] : memref<1x120xf32, #tpu.memory_space<vmem>>, vector<1x120xf32>
    %166 = arith.addf %164, %165 : vector<1x120xf32>
    %cst_126 = arith.constant 0.000000e+00 : f32
    %167 = vector.broadcast %cst_126 : f32 to vector<1x120xf32>
    %168 = arith.maximumf %166, %167 : vector<1x120xf32>
    %169 = arith.truncf %168 : vector<1x120xf32> to vector<1x120xbf16>
    %c0_127 = arith.constant 0 : index
    %c0_128 = arith.constant 0 : index
    %170 = vector.load %arg12[%c0_127, %c0_128] : memref<120x84xbf16, #tpu.memory_space<vmem>>, vector<120x84xbf16>
    %cst_129 = arith.constant dense<0.000000e+00> : vector<1x84xf32>
    %171 = tpu.matmul %169, %170, %cst_129 {dimension_numbers = #tpu.dot_dimension_numbers<[1], [0], [0], [1], [0, 0, 1, 1], [], []>} : vector<1x120xbf16>, vector<120x84xbf16>, vector<1x84xf32> -> vector<1x84xf32>
    %c0_130 = arith.constant 0 : index
    %c0_131 = arith.constant 0 : index
    %172 = vector.load %arg13[%c0_130, %c0_131] : memref<1x84xf32, #tpu.memory_space<vmem>>, vector<1x84xf32>
    %173 = arith.addf %171, %172 : vector<1x84xf32>
    %cst_132 = arith.constant 0.000000e+00 : f32
    %174 = vector.broadcast %cst_132 : f32 to vector<1x84xf32>
    %175 = arith.maximumf %173, %174 : vector<1x84xf32>
    %176 = arith.truncf %175 : vector<1x84xf32> to vector<1x84xbf16>
    %c0_133 = arith.constant 0 : index
    %c0_134 = arith.constant 0 : index
    %177 = vector.load %arg14[%c0_133, %c0_134] : memref<84x10xbf16, #tpu.memory_space<vmem>>, vector<84x10xbf16>
    %cst_135 = arith.constant dense<0.000000e+00> : vector<1x10xf32>
    %178 = tpu.matmul %176, %177, %cst_135 {dimension_numbers = #tpu.dot_dimension_numbers<[1], [0], [0], [1], [0, 0, 1, 1], [], []>} : vector<1x84xbf16>, vector<84x10xbf16>, vector<1x10xf32> -> vector<1x10xf32>
    %c0_136 = arith.constant 0 : index
    %c0_137 = arith.constant 0 : index
    %179 = vector.load %arg15[%c0_136, %c0_137] : memref<1x10xf32, #tpu.memory_space<vmem>>, vector<1x10xf32>
    %180 = arith.addf %178, %179 : vector<1x10xf32>
    %c0_138 = arith.constant 0 : index
    %c0_139 = arith.constant 0 : index
    %c0_140 = arith.constant 0 : index
    %181 = vector.load %arg16[%c0_138, %c0_139, %c0_140] : memref<1x1x10xf32, #tpu.memory_space<vmem>>, vector<1x1x10xf32>
    %182 = vector.shape_cast %181 : vector<1x1x10xf32> to vector<1x10xf32>
    %183 = vector.shape_cast %180 : vector<1x10xf32> to vector<1x1x10xf32>
    tpu.vector_store %arg16[%c0_138, %c0_139, %c0_140], %183 {strides = array<i32>} : memref<1x1x10xf32, #tpu.memory_space<vmem>>, vector<1x1x10xf32>,
    return
  }
  func.func @transform_0(%arg0: i32) -> (i32, i32, i32) {
    %c0_i32 = arith.constant 0 : i32
    %c0_i32_0 = arith.constant 0 : i32
    %c0_i32_1 = arith.constant 0 : i32
    return %arg0, %c0_i32, %c0_i32_0 : i32, i32, i32
  }
  func.func @transform_1(%arg0: i32) -> (i32, i32, i32) {
    %c0_i32 = arith.constant 0 : i32
    %c0_i32_0 = arith.constant 0 : i32
    %c0_i32_1 = arith.constant 0 : i32
    %c0_i32_2 = arith.constant 0 : i32
    return %c0_i32, %c0_i32_0, %c0_i32_1 : i32, i32, i32
  }
  func.func @transform_2(%arg0: i32) -> (i32, i32, i32) {
    %c0_i32 = arith.constant 0 : i32
    %c0_i32_0 = arith.constant 0 : i32
    %c0_i32_1 = arith.constant 0 : i32
    %c0_i32_2 = arith.constant 0 : i32
    return %c0_i32, %c0_i32_0, %c0_i32_1 : i32, i32, i32
  }
  func.func @transform_3(%arg0: i32) -> (i32, i32) {
    %c0_i32 = arith.constant 0 : i32
    %c0_i32_0 = arith.constant 0 : i32
    %c0_i32_1 = arith.constant 0 : i32
    return %c0_i32, %c0_i32_0 : i32, i32
  }
  func.func @transform_4(%arg0: i32) -> (i32, i32, i32) {
    %c0_i32 = arith.constant 0 : i32
    %c0_i32_0 = arith.constant 0 : i32
    %c0_i32_1 = arith.constant 0 : i32
    %c0_i32_2 = arith.constant 0 : i32
    return %c0_i32, %c0_i32_0, %c0_i32_1 : i32, i32, i32
  }
  func.func @transform_5(%arg0: i32) -> (i32, i32, i32) {
    %c0_i32 = arith.constant 0 : i32
    %c0_i32_0 = arith.constant 0 : i32
    %c0_i32_1 = arith.constant 0 : i32
    %c0_i32_2 = arith.constant 0 : i32
    return %c0_i32, %c0_i32_0, %c0_i32_1 : i32, i32, i32
  }
  func.func @transform_6(%arg0: i32) -> (i32, i32, i32) {
    %c0_i32 = arith.constant 0 : i32
    %c0_i32_0 = arith.constant 0 : i32
    %c0_i32_1 = arith.constant 0 : i32
    %c0_i32_2 = arith.constant 0 : i32
    return %c0_i32, %c0_i32_0, %c0_i32_1 : i32, i32, i32
  }
  func.func @transform_7(%arg0: i32) -> (i32, i32) {
    %c0_i32 = arith.constant 0 : i32
    %c0_i32_0 = arith.constant 0 : i32
    %c0_i32_1 = arith.constant 0 : i32
    return %c0_i32, %c0_i32_0 : i32, i32
  }
  func.func @transform_8(%arg0: i32) -> (i32, i32, i32) {
    %c0_i32 = arith.constant 0 : i32
    %c0_i32_0 = arith.constant 0 : i32
    %c0_i32_1 = arith.constant 0 : i32
    %c0_i32_2 = arith.constant 0 : i32
    return %c0_i32, %c0_i32_0, %c0_i32_1 : i32, i32, i32
  }
  func.func @transform_9(%arg0: i32) -> (i32, i32, i32) {
    %c0_i32 = arith.constant 0 : i32
    %c0_i32_0 = arith.constant 0 : i32
    %c0_i32_1 = arith.constant 0 : i32
    %c0_i32_2 = arith.constant 0 : i32
    return %c0_i32, %c0_i32_0, %c0_i32_1 : i32, i32, i32
  }
  func.func @transform_10(%arg0: i32) -> (i32, i32) {
    %c0_i32 = arith.constant 0 : i32
    %c0_i32_0 = arith.constant 0 : i32
    %c0_i32_1 = arith.constant 0 : i32
    return %c0_i32, %c0_i32_0 : i32, i32
  }
  func.func @transform_11(%arg0: i32) -> (i32, i32) {
    %c0_i32 = arith.constant 0 : i32
    %c0_i32_0 = arith.constant 0 : i32
    %c0_i32_1 = arith.constant 0 : i32
    return %c0_i32, %c0_i32_0 : i32, i32
  }
  func.func @transform_12(%arg0: i32) -> (i32, i32) {
    %c0_i32 = arith.constant 0 : i32
    %c0_i32_0 = arith.constant 0 : i32
    %c0_i32_1 = arith.constant 0 : i32
    return %c0_i32, %c0_i32_0 : i32, i32
  }
  func.func @transform_13(%arg0: i32) -> (i32, i32) {
    %c0_i32 = arith.constant 0 : i32
    %c0_i32_0 = arith.constant 0 : i32
    %c0_i32_1 = arith.constant 0 : i32
    return %c0_i32, %c0_i32_0 : i32, i32
  }
  func.func @transform_14(%arg0: i32) -> (i32, i32) {
    %c0_i32 = arith.constant 0 : i32
    %c0_i32_0 = arith.constant 0 : i32
    %c0_i32_1 = arith.constant 0 : i32
    return %c0_i32, %c0_i32_0 : i32, i32
  }
  func.func @transform_15(%arg0: i32) -> (i32, i32, i32) {
    %c0_i32 = arith.constant 0 : i32
    %c0_i32_0 = arith.constant 0 : i32
    %c0_i32_1 = arith.constant 0 : i32
    return %arg0, %c0_i32, %c0_i32_0 : i32, i32, i32
  }
}

</mosaic_0001>

<llo_original>
// kernel: net1_forward.1
$region0: #{net1_forward.1}
  #allocation0 [shape = 'u32[]', space=smem, size = 0x4, offset = 0x4, fixed_abs, tag = 'smem constant byte address 0x4 - core index']
  #allocation1 [shape = 'u32[144,128]{1,0:T(1,128)}', space=vmem, size = 0x12000, scoped, tag = 'internal scratch']
  %s0 = inlined_call_operand.vmem [shape: f32[4,32,96], index: 0, kind: input, shape index: {}]
  %s1 = inlined_call_operand.vmem [shape: bf16[5,96,112], index: 1, kind: input, shape index: {}]
  %s2 = inlined_call_operand.vmem [shape: bf16[5,96,112], index: 2, kind: input, shape index: {}]
  %s3 = inlined_call_operand.vmem [shape: f32[1,112], index: 3, kind: input, shape index: {}]
  %s4 = inlined_call_operand.vmem [shape: bf16[2,14,28], index: 4, kind: input, shape index: {}]
  %s5 = inlined_call_operand.vmem [shape: bf16[5,112,80], index: 5, kind: input, shape index: {}]
  %s6 = inlined_call_operand.vmem [shape: bf16[5,112,80], index: 6, kind: input, shape index: {}]
  %s7 = inlined_call_operand.vmem [shape: f32[1,80], index: 7, kind: input, shape index: {}]
  %s8 = inlined_call_operand.vmem [shape: bf16[2,5,10], index: 8, kind: input, shape index: {}]
  %s9 = inlined_call_operand.vmem [shape: bf16[5,80,120], index: 9, kind: input, shape index: {}]
  %s10 = inlined_call_operand.vmem [shape: f32[1,120], index: 10, kind: input, shape index: {}]
  %s11 = inlined_call_operand.vmem [shape: bf16[120,84], index: 11, kind: input, shape index: {}]
  %s12 = inlined_call_operand.vmem [shape: f32[1,84], index: 12, kind: input, shape index: {}]
  %s13 = inlined_call_operand.vmem [shape: bf16[84,10], index: 13, kind: input, shape index: {}]
  %s14 = inlined_call_operand.vmem [shape: f32[1,10], index: 14, kind: input, shape index: {}]
  %s15 = inlined_call_operand.hbm [shape: f32[4,1,10], index: 15, kind: output, shape index: {}]
  %s16 = sld [smem:[#allocation0]]
  $region93: #{net1_forward.1} parent=0
    _
  %s18 = ssub.s32 1, %s16
  %s19 = scalar_select 0, %s18, %s16
  $region1: #{net1_forward.1} parent=0
    #allocation2 [shape = 'u8[1024]{0}', space=vmem, size = 0x400, scoped, tag = 'output window, operand 0']
    #allocation3 [shape = 's32[2]{0}', space=sflag, size = 0x8, scoped, tag = 'scoped memory for net1_forward.1']
    %20 = vsyncpa [#allocation3], 0
    %s21 = scalar_lea.sflag [#allocation3], 1
    %22 = vsyncpa %s21, 0
    loop: start=0, step=1, limit=6
    $region2: #{net1_forward.1} parent=1 // loop_pre_header
      _
    $region3: #{net1_forward.1} parent=1 // loop_header
      %s24 = sphi 0, %s28
      %p25 = scmp.ge.s32.totalorder %s24, 6
      %s34 = sphi 0, %s36
      %s37 = sphi 0, %s34
      %s38 = sphi 0, %s37
      %s54 = sphi 0, %s38
      %s58 = sphi 0, %s58
      %s60 = sphi 0, %s58
      %s61 = sphi 0, %s60
      %s75 = sphi 0, %s61
      %s79 = sphi 0, %s79
      %s81 = sphi 0, %s79
      %s82 = sphi 0, %s81
      %s96 = sphi 0, %s82
      %s100 = sphi 0, %s100
      %s102 = sphi 0, %s100
      %s103 = sphi 0, %s102
      %s117 = sphi 0, %s103
      %s121 = sphi 0, %s121
      %s123 = sphi 0, %s121
      %s124 = sphi 0, %s123
      %s138 = sphi 0, %s124
      %s142 = sphi 0, %s142
      %s144 = sphi 0, %s142
      %s145 = sphi 0, %s144
      %s159 = sphi 0, %s145
      %s163 = sphi 0, %s163
      %s165 = sphi 0, %s163
      %s166 = sphi 0, %s165
      %s180 = sphi 0, %s166
      %s184 = sphi 0, %s184
      %s186 = sphi 0, %s184
      %s187 = sphi 0, %s186
      %s201 = sphi 0, %s187
      %s205 = sphi 0, %s205
      %s207 = sphi 0, %s205
      %s208 = sphi 0, %s207
      %s222 = sphi 0, %s208
      %s226 = sphi 0, %s226
      %s228 = sphi 0, %s226
      %s229 = sphi 0, %s228
      %s243 = sphi 0, %s229
      %s247 = sphi 0, %s247
      %s249 = sphi 0, %s247
      %s250 = sphi 0, %s249
      %s264 = sphi 0, %s250
      %s268 = sphi 0, %s268
      %s270 = sphi 0, %s268
      %s271 = sphi 0, %s270
      %s285 = sphi 0, %s271
      %s289 = sphi 0, %s289
      %s291 = sphi 0, %s289
      %s292 = sphi 0, %s291
      %s306 = sphi 0, %s292
      %s310 = sphi 0, %s310
      %s312 = sphi 0, %s310
      %s313 = sphi 0, %s312
      %s327 = sphi 0, %s313
      %s331 = sphi 0, %s331
      %s333 = sphi 0, %s331
      %s334 = sphi 0, %s333
      %s348 = sphi 0, %s334
      %s354 = sphi 0, %s356
      %s357 = sphi 0, %s354
      %s358 = sphi 0, %s357
      %s374 = sphi 0, %s358
    $region4: #{net1_forward.1} parent=1 // loop_header_branch
      %27 = sbr.rel (%p25) target = $region8
    $region5: #{net1_forward.1} parent=1 // loop_body
      %s29 = ssub.s32 %s24, 1
      %s30 = ssub.s32 %s24, 2
      %s31 = sadd.s32 %s24, 1
      %s32 = ssub.s32 %s24, %s31
      %p33 = scmp.eq.s32.totalorder %s32, 0
      %s35 = sadd.s32 %s34, 1
      %s36 = scalar_select %p33, %s34, %s35
      %p39 = pneg %p33
      %p40 = scmp.eq.s32.totalorder %s24, 3
      %p41 = por %p39, %p40
      %p42 = scmp.ne.s32.totalorder %s34, %s37
      %p43 = scmp.eq.s32.totalorder %s24, 0
      %p44 = por %p42, %p43
      %p45 = scmp.ne.s32.totalorder %s34, %s37
      %p46 = scmp.eq.s32.totalorder %s29, 3
      %p47 = por %p45, %p46
      %p48 = scmp.ne.s32.totalorder %s37, %s38
      %p49 = scmp.eq.s32.totalorder %s29, 0
      %p50 = por %p48, %p49
      %p51 = scmp.ne.s32.totalorder %s37, %s38
      %p52 = scmp.eq.s32.totalorder %s30, 3
      %p53 = por %p51, %p52
      %p55 = scmp.ne.s32.totalorder %s38, %s54
      %p56 = scmp.eq.s32.totalorder %s30, 0
      %p57 = por %p55, %p56
      %s59 = sadd.s32 %s58, 1
      %p62 = scmp.eq.s32.totalorder %s24, 3
      %p63 = scmp.ne.s32.totalorder %s58, %s60
      %p64 = scmp.eq.s32.totalorder %s24, 0
      %p65 = por %p63, %p64
      %p66 = scmp.ne.s32.totalorder %s58, %s60
      %p67 = scmp.eq.s32.totalorder %s29, 3
      %p68 = por %p66, %p67
      %p69 = scmp.ne.s32.totalorder %s60, %s61
      %p70 = scmp.eq.s32.totalorder %s29, 0
      %p71 = por %p69, %p70
      %p72 = scmp.ne.s32.totalorder %s60, %s61
      %p73 = scmp.eq.s32.totalorder %s30, 3
      %p74 = por %p72, %p73
      %p76 = scmp.ne.s32.totalorder %s61, %s75
      %p77 = scmp.eq.s32.totalorder %s30, 0
      %p78 = por %p76, %p77
      %s80 = sadd.s32 %s79, 1
      %p83 = scmp.eq.s32.totalorder %s24, 3
      %p84 = scmp.ne.s32.totalorder %s79, %s81
      %p85 = scmp.eq.s32.totalorder %s24, 0
      %p86 = por %p84, %p85
      %p87 = scmp.ne.s32.totalorder %s79, %s81
      %p88 = scmp.eq.s32.totalorder %s29, 3
      %p89 = por %p87, %p88
      %p90 = scmp.ne.s32.totalorder %s81, %s82
      %p91 = scmp.eq.s32.totalorder %s29, 0
      %p92 = por %p90, %p91
      %p93 = scmp.ne.s32.totalorder %s81, %s82
      %p94 = scmp.eq.s32.totalorder %s30, 3
      %p95 = por %p93, %p94
      %p97 = scmp.ne.s32.totalorder %s82, %s96
      %p98 = scmp.eq.s32.totalorder %s30, 0
      %p99 = por %p97, %p98
      %s101 = sadd.s32 %s100, 1
      %p104 = scmp.eq.s32.totalorder %s24, 3
      %p105 = scmp.ne.s32.totalorder %s100, %s102
      %p106 = scmp.eq.s32.totalorder %s24, 0
      %p107 = por %p105, %p106
      %p108 = scmp.ne.s32.totalorder %s100, %s102
      %p109 = scmp.eq.s32.totalorder %s29, 3
      %p110 = por %p108, %p109
      %p111 = scmp.ne.s32.totalorder %s102, %s103
      %p112 = scmp.eq.s32.totalorder %s29, 0
      %p113 = por %p111, %p112
      %p114 = scmp.ne.s32.totalorder %s102, %s103
      %p115 = scmp.eq.s32.totalorder %s30, 3
      %p116 = por %p114, %p115
      %p118 = scmp.ne.s32.totalorder %s103, %s117
      %p119 = scmp.eq.s32.totalorder %s30, 0
      %p120 = por %p118, %p119
      %s122 = sadd.s32 %s121, 1
      %p125 = scmp.eq.s32.totalorder %s24, 3
      %p126 = scmp.ne.s32.totalorder %s121, %s123
      %p127 = scmp.eq.s32.totalorder %s24, 0
      %p128 = por %p126, %p127
      %p129 = scmp.ne.s32.totalorder %s121, %s123
      %p130 = scmp.eq.s32.totalorder %s29, 3
      %p131 = por %p129, %p130
      %p132 = scmp.ne.s32.totalorder %s123, %s124
      %p133 = scmp.eq.s32.totalorder %s29, 0
      %p134 = por %p132, %p133
      %p135 = scmp.ne.s32.totalorder %s123, %s124
      %p136 = scmp.eq.s32.totalorder %s30, 3
      %p137 = por %p135, %p136
      %p139 = scmp.ne.s32.totalorder %s124, %s138
      %p140 = scmp.eq.s32.totalorder %s30, 0
      %p141 = por %p139, %p140
      %s143 = sadd.s32 %s142, 1
      %p146 = scmp.eq.s32.totalorder %s24, 3
      %p147 = scmp.ne.s32.totalorder %s142, %s144
      %p148 = scmp.eq.s32.totalorder %s24, 0
      %p149 = por %p147, %p148
      %p150 = scmp.ne.s32.totalorder %s142, %s144
      %p151 = scmp.eq.s32.totalorder %s29, 3
      %p152 = por %p150, %p151
      %p153 = scmp.ne.s32.totalorder %s144, %s145
      %p154 = scmp.eq.s32.totalorder %s29, 0
      %p155 = por %p153, %p154
      %p156 = scmp.ne.s32.totalorder %s144, %s145
      %p157 = scmp.eq.s32.totalorder %s30, 3
      %p158 = por %p156, %p157
      %p160 = scmp.ne.s32.totalorder %s145, %s159
      %p161 = scmp.eq.s32.totalorder %s30, 0
      %p162 = por %p160, %p161
      %s164 = sadd.s32 %s163, 1
      %p167 = scmp.eq.s32.totalorder %s24, 3
      %p168 = scmp.ne.s32.totalorder %s163, %s165
      %p169 = scmp.eq.s32.totalorder %s24, 0
      %p170 = por %p168, %p169
      %p171 = scmp.ne.s32.totalorder %s163, %s165
      %p172 = scmp.eq.s32.totalorder %s29, 3
      %p173 = por %p171, %p172
      %p174 = scmp.ne.s32.totalorder %s165, %s166
      %p175 = scmp.eq.s32.totalorder %s29, 0
      %p176 = por %p174, %p175
      %p177 = scmp.ne.s32.totalorder %s165, %s166
      %p178 = scmp.eq.s32.totalorder %s30, 3
      %p179 = por %p177, %p178
      %p181 = scmp.ne.s32.totalorder %s166, %s180
      %p182 = scmp.eq.s32.totalorder %s30, 0
      %p183 = por %p181, %p182
      %s185 = sadd.s32 %s184, 1
      %p188 = scmp.eq.s32.totalorder %s24, 3
      %p189 = scmp.ne.s32.totalorder %s184, %s186
      %p190 = scmp.eq.s32.totalorder %s24, 0
      %p191 = por %p189, %p190
      %p192 = scmp.ne.s32.totalorder %s184, %s186
      %p193 = scmp.eq.s32.totalorder %s29, 3
      %p194 = por %p192, %p193
      %p195 = scmp.ne.s32.totalorder %s186, %s187
      %p196 = scmp.eq.s32.totalorder %s29, 0
      %p197 = por %p195, %p196
      %p198 = scmp.ne.s32.totalorder %s186, %s187
      %p199 = scmp.eq.s32.totalorder %s30, 3
      %p200 = por %p198, %p199
      %p202 = scmp.ne.s32.totalorder %s187, %s201
      %p203 = scmp.eq.s32.totalorder %s30, 0
      %p204 = por %p202, %p203
      %s206 = sadd.s32 %s205, 1
      %p209 = scmp.eq.s32.totalorder %s24, 3
      %p210 = scmp.ne.s32.totalorder %s205, %s207
      %p211 = scmp.eq.s32.totalorder %s24, 0
      %p212 = por %p210, %p211
      %p213 = scmp.ne.s32.totalorder %s205, %s207
      %p214 = scmp.eq.s32.totalorder %s29, 3
      %p215 = por %p213, %p214
      %p216 = scmp.ne.s32.totalorder %s207, %s208
      %p217 = scmp.eq.s32.totalorder %s29, 0
      %p218 = por %p216, %p217
      %p219 = scmp.ne.s32.totalorder %s207, %s208
      %p220 = scmp.eq.s32.totalorder %s30, 3
      %p221 = por %p219, %p220
      %p223 = scmp.ne.s32.totalorder %s208, %s222
      %p224 = scmp.eq.s32.totalorder %s30, 0
      %p225 = por %p223, %p224
      %s227 = sadd.s32 %s226, 1
      %p230 = scmp.eq.s32.totalorder %s24, 3
      %p231 = scmp.ne.s32.totalorder %s226, %s228
      %p232 = scmp.eq.s32.totalorder %s24, 0
      %p233 = por %p231, %p232
      %p234 = scmp.ne.s32.totalorder %s226, %s228
      %p235 = scmp.eq.s32.totalorder %s29, 3
      %p236 = por %p234, %p235
      %p237 = scmp.ne.s32.totalorder %s228, %s229
      %p238 = scmp.eq.s32.totalorder %s29, 0
      %p239 = por %p237, %p238
      %p240 = scmp.ne.s32.totalorder %s228, %s229
      %p241 = scmp.eq.s32.totalorder %s30, 3
      %p242 = por %p240, %p241
      %p244 = scmp.ne.s32.totalorder %s229, %s243
      %p245 = scmp.eq.s32.totalorder %s30, 0
      %p246 = por %p244, %p245
      %s248 = sadd.s32 %s247, 1
      %p251 = scmp.eq.s32.totalorder %s24, 3
      %p252 = scmp.ne.s32.totalorder %s247, %s249
      %p253 = scmp.eq.s32.totalorder %s24, 0
      %p254 = por %p252, %p253
      %p255 = scmp.ne.s32.totalorder %s247, %s249
      %p256 = scmp.eq.s32.totalorder %s29, 3
      %p257 = por %p255, %p256
      %p258 = scmp.ne.s32.totalorder %s249, %s250
      %p259 = scmp.eq.s32.totalorder %s29, 0
      %p260 = por %p258, %p259
      %p261 = scmp.ne.s32.totalorder %s249, %s250
      %p262 = scmp.eq.s32.totalorder %s30, 3
      %p263 = por %p261, %p262
      %p265 = scmp.ne.s32.totalorder %s250, %s264
      %p266 = scmp.eq.s32.totalorder %s30, 0
      %p267 = por %p265, %p266
      %s269 = sadd.s32 %s268, 1
      %p272 = scmp.eq.s32.totalorder %s24, 3
      %p273 = scmp.ne.s32.totalorder %s268, %s270
      %p274 = scmp.eq.s32.totalorder %s24, 0
      %p275 = por %p273, %p274
      %p276 = scmp.ne.s32.totalorder %s268, %s270
      %p277 = scmp.eq.s32.totalorder %s29, 3
      %p278 = por %p276, %p277
      %p279 = scmp.ne.s32.totalorder %s270, %s271
      %p280 = scmp.eq.s32.totalorder %s29, 0
      %p281 = por %p279, %p280
      %p282 = scmp.ne.s32.totalorder %s270, %s271
      %p283 = scmp.eq.s32.totalorder %s30, 3
      %p284 = por %p282, %p283
      %p286 = scmp.ne.s32.totalorder %s271, %s285
      %p287 = scmp.eq.s32.totalorder %s30, 0
      %p288 = por %p286, %p287
      %s290 = sadd.s32 %s289, 1
      %p293 = scmp.eq.s32.totalorder %s24, 3
      %p294 = scmp.ne.s32.totalorder %s289, %s291
      %p295 = scmp.eq.s32.totalorder %s24, 0
      %p296 = por %p294, %p295
      %p297 = scmp.ne.s32.totalorder %s289, %s291
      %p298 = scmp.eq.s32.totalorder %s29, 3
      %p299 = por %p297, %p298
      %p300 = scmp.ne.s32.totalorder %s291, %s292
      %p301 = scmp.eq.s32.totalorder %s29, 0
      %p302 = por %p300, %p301
      %p303 = scmp.ne.s32.totalorder %s291, %s292
      %p304 = scmp.eq.s32.totalorder %s30, 3
      %p305 = por %p303, %p304
      %p307 = scmp.ne.s32.totalorder %s292, %s306
      %p308 = scmp.eq.s32.totalorder %s30, 0
      %p309 = por %p307, %p308
      %s311 = sadd.s32 %s310, 1
      %p314 = scmp.eq.s32.totalorder %s24, 3
      %p315 = scmp.ne.s32.totalorder %s310, %s312
      %p316 = scmp.eq.s32.totalorder %s24, 0
      %p317 = por %p315, %p316
      %p318 = scmp.ne.s32.totalorder %s310, %s312
      %p319 = scmp.eq.s32.totalorder %s29, 3
      %p320 = por %p318, %p319
      %p321 = scmp.ne.s32.totalorder %s312, %s313
      %p322 = scmp.eq.s32.totalorder %s29, 0
      %p323 = por %p321, %p322
      %p324 = scmp.ne.s32.totalorder %s312, %s313
      %p325 = scmp.eq.s32.totalorder %s30, 3
      %p326 = por %p324, %p325
      %p328 = scmp.ne.s32.totalorder %s313, %s327
      %p329 = scmp.eq.s32.totalorder %s30, 0
      %p330 = por %p328, %p329
      %s332 = sadd.s32 %s331, 1
      %p335 = scmp.eq.s32.totalorder %s24, 3
      %p336 = scmp.ne.s32.totalorder %s331, %s333
      %p337 = scmp.eq.s32.totalorder %s24, 0
      %p338 = por %p336, %p337
      %p339 = scmp.ne.s32.totalorder %s331, %s333
      %p340 = scmp.eq.s32.totalorder %s29, 3
      %p341 = por %p339, %p340
      %p342 = scmp.ne.s32.totalorder %s333, %s334
      %p343 = scmp.eq.s32.totalorder %s29, 0
      %p344 = por %p342, %p343
      %p345 = scmp.ne.s32.totalorder %s333, %s334
      %p346 = scmp.eq.s32.totalorder %s30, 3
      %p347 = por %p345, %p346
      %p349 = scmp.ne.s32.totalorder %s334, %s348
      %p350 = scmp.eq.s32.totalorder %s30, 0
      %p351 = por %p349, %p350
      %s352 = ssub.s32 %s24, %s31
      %p353 = scmp.eq.s32.totalorder %s352, 0
      %s355 = sadd.s32 %s354, 1
      %s356 = scalar_select %p353, %s354, %s355
      %p359 = pneg %p353
      %p360 = scmp.eq.s32.totalorder %s24, 3
      %p361 = por %p359, %p360
      %p362 = scmp.ne.s32.totalorder %s354, %s357
      %p363 = scmp.eq.s32.totalorder %s24, 0
      %p364 = por %p362, %p363
      %p365 = scmp.ne.s32.totalorder %s354, %s357
      %p366 = scmp.eq.s32.totalorder %s29, 3
      %p367 = por %p365, %p366
      %p368 = scmp.ne.s32.totalorder %s357, %s358
      %p369 = scmp.eq.s32.totalorder %s29, 0
      %p370 = por %p368, %p369
      %p371 = scmp.ne.s32.totalorder %s357, %s358
      %p372 = scmp.eq.s32.totalorder %s30, 3
      %p373 = por %p371, %p372
      %p375 = scmp.ne.s32.totalorder %s358, %s374
      %p376 = scmp.eq.s32.totalorder %s30, 0
      %p377 = por %p375, %p376
      %p378 = scmp.le.s32.totalorder 1, %s24
      %p379 = scmp.lt.s32.totalorder %s24, 5
      %p380 = pnand %p378, %p379
      %p381 = pneg %p380
      // Predicated region
      $region9: #{net1_forward.1} parent=5 // pred_check
        _
      $region10: #{net1_forward.1} parent=5 // pred_check_branch
        %383 = sbr.rel (%p380) target = $region12
      $region11: #{net1_forward.1} parent=5 // pred_region
        %s384 = ssub.s32 %s24, 1
        // Predicated region
        $region13: #{net1_forward.1} parent=11 // pred_check
          %p385 = pneg %p71
        $region14: #{net1_forward.1} parent=11 // pred_check_branch
          %387 = sbr.rel (%p385) target = $region16
        $region15: #{net1_forward.1} parent=11 // pred_region
          _
        $region16: #{net1_forward.1} parent=11 // pred_fallthru
          _
        // Predicated region
        $region17: #{net1_forward.1} parent=11 // pred_check
          %p388 = pneg %p92
        $region18: #{net1_forward.1} parent=11 // pred_check_branch
          %390 = sbr.rel (%p388) target = $region20
        $region19: #{net1_forward.1} parent=11 // pred_region
          _
        $region20: #{net1_forward.1} parent=11 // pred_fallthru
          _
        // Predicated region
        $region21: #{net1_forward.1} parent=11 // pred_check
          %p391 = pneg %p113
        $region22: #{net1_forward.1} parent=11 // pred_check_branch
          %393 = sbr.rel (%p391) target = $region24
        $region23: #{net1_forward.1} parent=11 // pred_region
          _
        $region24: #{net1_forward.1} parent=11 // pred_fallthru
          _
        // Predicated region
        $region25: #{net1_forward.1} parent=11 // pred_check
          %p394 = pneg %p134
        $region26: #{net1_forward.1} parent=11 // pred_check_branch
          %396 = sbr.rel (%p394) target = $region28
        $region27: #{net1_forward.1} parent=11 // pred_region
          _
        $region28: #{net1_forward.1} parent=11 // pred_fallthru
          _
        // Predicated region
        $region29: #{net1_forward.1} parent=11 // pred_check
          %p397 = pneg %p155
        $region30: #{net1_forward.1} parent=11 // pred_check_branch
          %399 = sbr.rel (%p397) target = $region32
        $region31: #{net1_forward.1} parent=11 // pred_region
          _
        $region32: #{net1_forward.1} parent=11 // pred_fallthru
          _
        // Predicated region
        $region33: #{net1_forward.1} parent=11 // pred_check
          %p400 = pneg %p176
        $region34: #{net1_forward.1} parent=11 // pred_check_branch
          %402 = sbr.rel (%p400) target = $region36
        $region35: #{net1_forward.1} parent=11 // pred_region
          _
        $region36: #{net1_forward.1} parent=11 // pred_fallthru
          _
        // Predicated region
        $region37: #{net1_forward.1} parent=11 // pred_check
          %p403 = pneg %p197
        $region38: #{net1_forward.1} parent=11 // pred_check_branch
          %405 = sbr.rel (%p403) target = $region40
        $region39: #{net1_forward.1} parent=11 // pred_region
          _
        $region40: #{net1_forward.1} parent=11 // pred_fallthru
          _
        // Predicated region
        $region41: #{net1_forward.1} parent=11 // pred_check
          %p406 = pneg %p218
        $region42: #{net1_forward.1} parent=11 // pred_check_branch
          %408 = sbr.rel (%p406) target = $region44
        $region43: #{net1_forward.1} parent=11 // pred_region
          _
        $region44: #{net1_forward.1} parent=11 // pred_fallthru
          _
        // Predicated region
        $region45: #{net1_forward.1} parent=11 // pred_check
          %p409 = pneg %p239
        $region46: #{net1_forward.1} parent=11 // pred_check_branch
          %411 = sbr.rel (%p409) target = $region48
        $region47: #{net1_forward.1} parent=11 // pred_region
          _
        $region48: #{net1_forward.1} parent=11 // pred_fallthru
          _
        // Predicated region
        $region49: #{net1_forward.1} parent=11 // pred_check
          %p412 = pneg %p260
        $region50: #{net1_forward.1} parent=11 // pred_check_branch
          %414 = sbr.rel (%p412) target = $region52
        $region51: #{net1_forward.1} parent=11 // pred_region
          _
        $region52: #{net1_forward.1} parent=11 // pred_fallthru
          _
        // Predicated region
        $region53: #{net1_forward.1} parent=11 // pred_check
          %p415 = pneg %p281
        $region54: #{net1_forward.1} parent=11 // pred_check_branch
          %417 = sbr.rel (%p415) target = $region56
        $region55: #{net1_forward.1} parent=11 // pred_region
          _
        $region56: #{net1_forward.1} parent=11 // pred_fallthru
          _
        // Predicated region
        $region57: #{net1_forward.1} parent=11 // pred_check
          %p418 = pneg %p302
        $region58: #{net1_forward.1} parent=11 // pred_check_branch
          %420 = sbr.rel (%p418) target = $region60
        $region59: #{net1_forward.1} parent=11 // pred_region
          _
        $region60: #{net1_forward.1} parent=11 // pred_fallthru
          _
        // Predicated region
        $region61: #{net1_forward.1} parent=11 // pred_check
          %p421 = pneg %p323
        $region62: #{net1_forward.1} parent=11 // pred_check_branch
          %423 = sbr.rel (%p421) target = $region64
        $region63: #{net1_forward.1} parent=11 // pred_region
          _
        $region64: #{net1_forward.1} parent=11 // pred_fallthru
          _
        // Predicated region
        $region65: #{net1_forward.1} parent=11 // pred_check
          %p424 = pneg %p344
        $region66: #{net1_forward.1} parent=11 // pred_check_branch
          %426 = sbr.rel (%p424) target = $region68
        $region67: #{net1_forward.1} parent=11 // pred_region
          _
        $region68: #{net1_forward.1} parent=11 // pred_fallthru
          _
      $region12: #{net1_forward.1} parent=5 // pred_fallthru
        _
      %p427 = scmp.lt.s32.totalorder %s24, 4
      // Predicated region
      $region69: #{net1_forward.1} parent=5 // pred_check
        %p428 = pneg %p427
      $region70: #{net1_forward.1} parent=5 // pred_check_branch
        %430 = sbr.rel (%p428) target = $region72
      $region71: #{net1_forward.1} parent=5 // pred_region
        // Predicated region
        $region73: #{net1_forward.1} parent=71 // pred_check
          %p431 = pneg %p44
        $region74: #{net1_forward.1} parent=71 // pred_check_branch
          %433 = sbr.rel (%p431) target = $region76
        $region75: #{net1_forward.1} parent=71 // pred_region
          %p434 = scmp.lt.s32.totalorder %s24, 3
          %s435 = scalar_select %p434, %s24, 3
          %s436 = smul.addr %s435, 4
          %s437 = smul.addr %s436, 8
          %s438 = scalar_lea.vmem %s0, %s437
        $region76: #{net1_forward.1} parent=71 // pred_fallthru
          _
      $region72: #{net1_forward.1} parent=5 // pred_fallthru
        _
      %p439 = scmp.le.s32.totalorder 1, %s24
      %p440 = scmp.lt.s32.totalorder %s24, 5
      %p441 = pnand %p439, %p440
      %p442 = pneg %p441
      // Predicated region
      $region77: #{net1_forward.1} parent=5 // pred_check
        _
      $region78: #{net1_forward.1} parent=5 // pred_check_branch
        %444 = sbr.rel (%p441) target = $region80
      $region79: #{net1_forward.1} parent=5 // pred_region
        %s445 = ssub.s32 %s24, 1
        %p446 = scmp.lt.s32.totalorder %s29, 3
        %s447 = scalar_select %p446, %s29, 3
        %s448 = smul.addr %s447, 4
        %s449 = smul.addr %s448, 8
        %s450 = scalar_lea.vmem %s0, %s449
        %p451 = pneg %p50
        %p452 = pneg %p47
        %p453 = pneg %p71
        %p454 = pneg %p68
        %p455 = pneg %p92
        %p456 = pneg %p89
        %p457 = pneg %p113
        %p458 = pneg %p110
        %p459 = pneg %p134
        %p460 = pneg %p131
        %p461 = pneg %p155
        %p462 = pneg %p152
        %p463 = pneg %p176
        %p464 = pneg %p173
        %p465 = pneg %p197
        %p466 = pneg %p194
        %p467 = pneg %p218
        %p468 = pneg %p215
        %p469 = pneg %p239
        %p470 = pneg %p236
        %p471 = pneg %p260
        %p472 = pneg %p257
        %p473 = pneg %p281
        %p474 = pneg %p278
        %p475 = pneg %p302
        %p476 = pneg %p299
        %p477 = pneg %p323
        %p478 = pneg %p320
        %p479 = pneg %p344
        %p480 = pneg %p341
        %p481 = pneg %p370
        %p482 = pneg %p367
        %s483 = sand.u32 %s357, 1
        %s484 = scalar_lea.sflag [#allocation3], %s483
        %s485 = sand.u32 %s357, 1
        %s486 = scalar_lea.vmem [#allocation2], %s485
        %p487 = scmp.lt.s32.totalorder %s29, 3
        %s488 = scalar_select %p487, %s29, 3
        %s489 = smul.addr %s488, 4
        %s490 = smul.addr %s489, 8
        %s491 = scalar_lea.vmem %s0, %s490
        %v493 = vld [vmem:[%s491] sm:$0xff]
        %v494 = vld [vmem:[%s491 + $0x8] sm:$0xff]
        %v495 = vld [vmem:[%s491 + $0x10] sm:$0xff]
        %v496 = vld [vmem:[%s491 + $0x18] sm:$0xff]
        %v497 = vpack.c.bf16 %v494, %v493
        %v498 = vpack.c.bf16 %v496, %v495
        %v499 = vld [vmem:[%s1] sm:$0xf]
        %v500 = vld [vmem:[%s1 + $0x4] sm:$0xf]
        %v501 = vld [vmem:[%s1 + $0x8] sm:$0xf]
        %v502 = vld [vmem:[%s1 + $0xc] sm:$0xf]
        %v503 = vld [vmem:[%s1 + $0x10] sm:$0xf]
        %v504 = vld [vmem:[%s1 + $0x14] sm:$0xf]
        %v505 = vld [vmem:[%s1 + $0x18] sm:$0xf]
        %v506 = vld [vmem:[%s1 + $0x1c] sm:$0xf]
        %v507 = vld [vmem:[%s1 + $0x20] sm:$0xf]
        %v508 = vld [vmem:[%s1 + $0x24] sm:$0xf]
        %v509 = vld [vmem:[%s1 + $0x28] sm:$0xf]
        %v510 = vld [vmem:[%s1 + $0x2c] sm:$0xf]
        %v511 = vld [vmem:[%s2] sm:$0xf]
        %v512 = vld [vmem:[%s2 + $0x4] sm:$0xf]
        %v513 = vld [vmem:[%s2 + $0x8] sm:$0xf]
        %v514 = vld [vmem:[%s2 + $0xc] sm:$0xf]
        %v515 = vld [vmem:[%s2 + $0x10] sm:$0xf]
        %v516 = vld [vmem:[%s2 + $0x14] sm:$0xf]
        %v517 = vld [vmem:[%s2 + $0x18] sm:$0xf]
        %v518 = vld [vmem:[%s2 + $0x1c] sm:$0xf]
        %v519 = vld [vmem:[%s2 + $0x20] sm:$0xf]
        %v520 = vld [vmem:[%s2 + $0x24] sm:$0xf]
        %v521 = vld [vmem:[%s2 + $0x28] sm:$0xf]
        %v522 = vld [vmem:[%s2 + $0x2c] sm:$0xf]
        %s523 = scalar_lea.vmem %s1, 48
        %v524 = vld [vmem:[%s523] sm:$0xf]
        %v525 = vld [vmem:[%s523 + $0x4] sm:$0xf]
        %v526 = vld [vmem:[%s523 + $0x8] sm:$0xf]
        %v527 = vld [vmem:[%s523 + $0xc] sm:$0xf]
        %v528 = vld [vmem:[%s523 + $0x10] sm:$0xf]
        %v529 = vld [vmem:[%s523 + $0x14] sm:$0xf]
        %v530 = vld [vmem:[%s523 + $0x18] sm:$0xf]
        %v531 = vld [vmem:[%s523 + $0x1c] sm:$0xf]
        %v532 = vld [vmem:[%s523 + $0x20] sm:$0xf]
        %v533 = vld [vmem:[%s523 + $0x24] sm:$0xf]
        %v534 = vld [vmem:[%s523 + $0x28] sm:$0xf]
        %v535 = vld [vmem:[%s523 + $0x2c] sm:$0xf]
        %vm536 = vsmask.f32 7424
        %v538 = vshrl.u32 %v497, 16
        %v540 = vshll.u32 %v497, 16
        %v542 = vrot.slane %v540, 1
        %v543 = vor.u32 %v538, %v542
        %v545 = vshll.u32 %v498, 16
        %v547 = vrot.slane %v545, 1
        %v548 = vsel %vm536, %v543, %v547
        %v549 = vshrl.u32 %v498, 16
        %v551 = vor.u32 %v549, %v547
        %v564 = vunpack.c.l.b16 %v524
        %v565 = vunpack.c.l.b16 %v525
        %v566 = vunpack.c.l.b16 %v526
        %v567 = vunpack.c.l.b16 %v527
        %v568 = vunpack.c.l.b16 %v528
        %v569 = vunpack.c.l.b16 %v529
        %v570 = vunpack.c.l.b16 %v530
        %v571 = vunpack.c.l.b16 %v531
        %v572 = vunpack.c.l.b16 %v532
        %v573 = vunpack.c.l.b16 %v533
        %v574 = vunpack.c.l.b16 %v534
        %v575 = vunpack.c.l.b16 %v535
        %v576 = vpack.c.b16 %v565, %v564
        %v577 = vpack.c.b16 %v567, %v566
        %v578 = vpack.c.b16 %v569, %v568
        %v579 = vpack.c.b16 %v571, %v570
        %v580 = vpack.c.b16 %v573, %v572
        %v581 = vpack.c.b16 %v575, %v574
        %vm588 = vcmask 785408
        %v590 = vsel %vm588, %v548, 0
        %v593 = vsel %vm588, %v551, 0
        %595 = vmatprep.subr.bf16.mxu0 0
        %596 = vmatpush1.bf16.msra.mxu0 %v576
        %597 = vmatprep.subr.bf16.mxu0 0
        %598 = vmatpush1.bf16.msra.mxu0 %v577
        %599 = vmatprep.subr.bf16.mxu0 0
        %600 = vmatpush1.bf16.msra.mxu0 %v578
        %601 = vmatprep.subr.bf16.mxu0 0
        %602 = vmatpush1.bf16.msra.mxu0 %v579
        %603 = vmatprep.subr.bf16.mxu0 0
        %604 = vmatpush1.bf16.msra.mxu0 %v580
        %605 = vmatprep.subr.bf16.mxu0 0
        %606 = vmatpush1.bf16.msra.mxu0 %v581
        %607 = vmatprep.subr.bf16.mxu0 0
        %608 = vmatpush1.bf16.msra.mxu0 0
        %609 = vmatprep.subr.bf16.mxu0 0
        %610 = vmatpush1.bf16.msra.mxu0 0
        %611 = vmatprep.subr.bf16.mxu0 0
        %612 = vmatpush1.bf16.msra.mxu0 0
        %613 = vmatprep.subr.bf16.mxu0 0
        %614 = vmatpush1.bf16.msra.mxu0 0
        %615 = vmatprep.subr.bf16.mxu0 0
        %616 = vmatpush1.bf16.msra.mxu0 0
        %617 = vmatprep.subr.bf16.mxu0 0
        %618 = vmatpush1.bf16.msra.mxu0 0
        %619 = vmatprep.subr.bf16.mxu0 0
        %620 = vmatpush1.bf16.msra.mxu0 0
        %621 = vmatprep.subr.bf16.mxu0 0
        %622 = vmatpush1.bf16.msra.mxu0 0
        %623 = vmatprep.subr.bf16.mxu0 0
        %624 = vmatpush1.bf16.msra.mxu0 0
        %625 = vmatprep.subr.bf16.mxu0 0
        %626 = vmatpush1.bf16.msra.mxu0 0
        %627 = vmatprep.mubr.bf16.mxu0 0
        %628 = vmatmul.mubr.bf16.gmra.mrb[0].mxu0 %v590
        %v629 = vpop.f32.mrb[0].mxu0
        %v630 = vadd.f32 0.0, %v629
        %v631 = vpop.f32.mrb[0].mxu0
        %v632 = vpop.f32.mrb[0].mxu0
        %v633 = vadd.f32 0.0, %v632
        %v634 = vpop.f32.mrb[0].mxu0
        %635 = vmatprep.mubr.bf16.mxu0 0
        %636 = vmatmul.mubr.bf16.gmra.mrb[0].mxu0 %v593
        %v637 = vpop.f32.mrb[0].mxu0
        %v638 = vadd.f32 0.0, %v637
        %v639 = vpop.f32.mrb[0].mxu0
        %v640 = vpop.f32.mrb[0].mxu0
        %v641 = vadd.f32 0.0, %v640
        %v642 = vpop.f32.mrb[0].mxu0
        %643 = vdwg.mxu0
        %v656 = vunpack.c.l.b16 %v499
        %v657 = vunpack.c.l.b16 %v500
        %v658 = vunpack.c.l.b16 %v501
        %v659 = vunpack.c.l.b16 %v502
        %v660 = vunpack.c.l.b16 %v503
        %v661 = vunpack.c.l.b16 %v504
        %v662 = vunpack.c.l.b16 %v505
        %v663 = vunpack.c.l.b16 %v506
        %v664 = vunpack.c.l.b16 %v507
        %v665 = vunpack.c.l.b16 %v508
        %v666 = vunpack.c.l.b16 %v509
        %v667 = vunpack.c.l.b16 %v510
        %v668 = vpack.c.b16 %v657, %v656
        %v669 = vpack.c.b16 %v659, %v658
        %v670 = vpack.c.b16 %v661, %v660
        %v671 = vpack.c.b16 %v663, %v662
        %v672 = vpack.c.b16 %v665, %v664
        %v673 = vpack.c.b16 %v667, %v666
        %v680 = vsel %vm588, %v497, 0
        %v682 = vsel %vm588, %v498, 0
        %684 = vmatprep.subr.bf16.mxu0 0
        %685 = vmatpush1.bf16.msra.mxu0 %v668
        %686 = vmatprep.subr.bf16.mxu0 0
        %687 = vmatpush1.bf16.msra.mxu0 %v669
        %688 = vmatprep.subr.bf16.mxu0 0
        %689 = vmatpush1.bf16.msra.mxu0 %v670
        %690 = vmatprep.subr.bf16.mxu0 0
        %691 = vmatpush1.bf16.msra.mxu0 %v671
        %692 = vmatprep.subr.bf16.mxu0 0
        %693 = vmatpush1.bf16.msra.mxu0 %v672
        %694 = vmatprep.subr.bf16.mxu0 0
        %695 = vmatpush1.bf16.msra.mxu0 %v673
        %696 = vmatprep.subr.bf16.mxu0 0
        %697 = vmatpush1.bf16.msra.mxu0 0
        %698 = vmatprep.subr.bf16.mxu0 0
        %699 = vmatpush1.bf16.msra.mxu0 0
        %700 = vmatprep.subr.bf16.mxu0 0
        %701 = vmatpush1.bf16.msra.mxu0 0
        %702 = vmatprep.subr.bf16.mxu0 0
        %703 = vmatpush1.bf16.msra.mxu0 0
        %704 = vmatprep.subr.bf16.mxu0 0
        %705 = vmatpush1.bf16.msra.mxu0 0
        %706 = vmatprep.subr.bf16.mxu0 0
        %707 = vmatpush1.bf16.msra.mxu0 0
        %708 = vmatprep.subr.bf16.mxu0 0
        %709 = vmatpush1.bf16.msra.mxu0 0
        %710 = vmatprep.subr.bf16.mxu0 0
        %711 = vmatpush1.bf16.msra.mxu0 0
        %712 = vmatprep.subr.bf16.mxu0 0
        %713 = vmatpush1.bf16.msra.mxu0 0
        %714 = vmatprep.subr.bf16.mxu0 0
        %715 = vmatpush1.bf16.msra.mxu0 0
        %716 = vmatprep.mubr.bf16.mxu0 0
        %717 = vmatmul.mubr.bf16.gmra.mrb[0].mxu0 %v680
        %v718 = vpop.f32.mrb[0].mxu0
        %v719 = vadd.f32 %v630, %v718
        %v720 = vpop.f32.mrb[0].mxu0
        %v721 = vpop.f32.mrb[0].mxu0
        %v722 = vadd.f32 %v633, %v721
        %v723 = vpop.f32.mrb[0].mxu0
        %724 = vmatprep.mubr.bf16.mxu0 0
        %725 = vmatmul.mubr.bf16.gmra.mrb[0].mxu0 %v682
        %v726 = vpop.f32.mrb[0].mxu0
        %v727 = vadd.f32 %v638, %v726
        %v728 = vpop.f32.mrb[0].mxu0
        %v729 = vpop.f32.mrb[0].mxu0
        %v730 = vadd.f32 %v641, %v729
        %v731 = vpop.f32.mrb[0].mxu0
        %732 = vdwg.mxu0
        %s733 = scalar_lea.vmem %s2, 48
        %v734 = vld [vmem:[%s733] sm:$0xf]
        %v735 = vld [vmem:[%s733 + $0x4] sm:$0xf]
        %v736 = vld [vmem:[%s733 + $0x8] sm:$0xf]
        %v737 = vld [vmem:[%s733 + $0xc] sm:$0xf]
        %v738 = vld [vmem:[%s733 + $0x10] sm:$0xf]
        %v739 = vld [vmem:[%s733 + $0x14] sm:$0xf]
        %v740 = vld [vmem:[%s733 + $0x18] sm:$0xf]
        %v741 = vld [vmem:[%s733 + $0x1c] sm:$0xf]
        %v742 = vld [vmem:[%s733 + $0x20] sm:$0xf]
        %v743 = vld [vmem:[%s733 + $0x24] sm:$0xf]
        %v744 = vld [vmem:[%s733 + $0x28] sm:$0xf]
        %v745 = vld [vmem:[%s733 + $0x2c] sm:$0xf]
        %v758 = vunpack.c.l.b16 %v734
        %v759 = vunpack.c.l.b16 %v735
        %v760 = vunpack.c.l.b16 %v736
        %v761 = vunpack.c.l.b16 %v737
        %v762 = vunpack.c.l.b16 %v738
        %v763 = vunpack.c.l.b16 %v739
        %v764 = vunpack.c.l.b16 %v740
        %v765 = vunpack.c.l.b16 %v741
        %v766 = vunpack.c.l.b16 %v742
        %v767 = vunpack.c.l.b16 %v743
        %v768 = vunpack.c.l.b16 %v744
        %v769 = vunpack.c.l.b16 %v745
        %v770 = vpack.c.b16 %v759, %v758
        %v771 = vpack.c.b16 %v761, %v760
        %v772 = vpack.c.b16 %v763, %v762
        %v773 = vpack.c.b16 %v765, %v764
        %v774 = vpack.c.b16 %v767, %v766
        %v775 = vpack.c.b16 %v769, %v768
        %782 = vmatprep.subr.bf16.mxu0 0
        %783 = vmatpush1.bf16.msra.mxu0 %v770
        %784 = vmatprep.subr.bf16.mxu0 0
        %785 = vmatpush1.bf16.msra.mxu0 %v771
        %786 = vmatprep.subr.bf16.mxu0 0
        %787 = vmatpush1.bf16.msra.mxu0 %v772
        %788 = vmatprep.subr.bf16.mxu0 0
        %789 = vmatpush1.bf16.msra.mxu0 %v773
        %790 = vmatprep.subr.bf16.mxu0 0
        %791 = vmatpush1.bf16.msra.mxu0 %v774
        %792 = vmatprep.subr.bf16.mxu0 0
        %793 = vmatpush1.bf16.msra.mxu0 %v775
        %794 = vmatprep.subr.bf16.mxu0 0
        %795 = vmatpush1.bf16.msra.mxu0 0
        %796 = vmatprep.subr.bf16.mxu0 0
        %797 = vmatpush1.bf16.msra.mxu0 0
        %798 = vmatprep.subr.bf16.mxu0 0
        %799 = vmatpush1.bf16.msra.mxu0 0
        %800 = vmatprep.subr.bf16.mxu0 0
        %801 = vmatpush1.bf16.msra.mxu0 0
        %802 = vmatprep.subr.bf16.mxu0 0
        %803 = vmatpush1.bf16.msra.mxu0 0
        %804 = vmatprep.subr.bf16.mxu0 0
        %805 = vmatpush1.bf16.msra.mxu0 0
        %806 = vmatprep.subr.bf16.mxu0 0
        %807 = vmatpush1.bf16.msra.mxu0 0
        %808 = vmatprep.subr.bf16.mxu0 0
        %809 = vmatpush1.bf16.msra.mxu0 0
        %810 = vmatprep.subr.bf16.mxu0 0
        %811 = vmatpush1.bf16.msra.mxu0 0
        %812 = vmatprep.subr.bf16.mxu0 0
        %813 = vmatpush1.bf16.msra.mxu0 0
        %814 = vmatprep.mubr.bf16.mxu0 0
        %815 = vmatmul.mubr.bf16.gmra.mrb[0].mxu0 %v590
        %v816 = vpop.f32.mrb[0].mxu0
        %v817 = vadd.f32 0.0, %v816
        %v818 = vpop.f32.mrb[0].mxu0
        %v819 = vpop.f32.mrb[0].mxu0
        %v820 = vadd.f32 0.0, %v819
        %v821 = vpop.f32.mrb[0].mxu0
        %822 = vmatprep.mubr.bf16.mxu0 0
        %823 = vmatmul.mubr.bf16.gmra.mrb[0].mxu0 %v593
        %v824 = vpop.f32.mrb[0].mxu0
        %v825 = vadd.f32 0.0, %v824
        %v826 = vpop.f32.mrb[0].mxu0
        %v827 = vpop.f32.mrb[0].mxu0
        %v828 = vadd.f32 0.0, %v827
        %v829 = vpop.f32.mrb[0].mxu0
        %830 = vdwg.mxu0
        %v843 = vunpack.c.l.b16 %v511
        %v844 = vunpack.c.l.b16 %v512
        %v845 = vunpack.c.l.b16 %v513
        %v846 = vunpack.c.l.b16 %v514
        %v847 = vunpack.c.l.b16 %v515
        %v848 = vunpack.c.l.b16 %v516
        %v849 = vunpack.c.l.b16 %v517
        %v850 = vunpack.c.l.b16 %v518
        %v851 = vunpack.c.l.b16 %v519
        %v852 = vunpack.c.l.b16 %v520
        %v853 = vunpack.c.l.b16 %v521
        %v854 = vunpack.c.l.b16 %v522
        %v855 = vpack.c.b16 %v844, %v843
        %v856 = vpack.c.b16 %v846, %v845
        %v857 = vpack.c.b16 %v848, %v847
        %v858 = vpack.c.b16 %v850, %v849
        %v859 = vpack.c.b16 %v852, %v851
        %v860 = vpack.c.b16 %v854, %v853
        %867 = vmatprep.subr.bf16.mxu0 0
        %868 = vmatpush1.bf16.msra.mxu0 %v855
        %869 = vmatprep.subr.bf16.mxu0 0
        %870 = vmatpush1.bf16.msra.mxu0 %v856
        %871 = vmatprep.subr.bf16.mxu0 0
        %872 = vmatpush1.bf16.msra.mxu0 %v857
        %873 = vmatprep.subr.bf16.mxu0 0
        %874 = vmatpush1.bf16.msra.mxu0 %v858
        %875 = vmatprep.subr.bf16.mxu0 0
        %876 = vmatpush1.bf16.msra.mxu0 %v859
        %877 = vmatprep.subr.bf16.mxu0 0
        %878 = vmatpush1.bf16.msra.mxu0 %v860
        %879 = vmatprep.subr.bf16.mxu0 0
        %880 = vmatpush1.bf16.msra.mxu0 0
        %881 = vmatprep.subr.bf16.mxu0 0
        %882 = vmatpush1.bf16.msra.mxu0 0
        %883 = vmatprep.subr.bf16.mxu0 0
        %884 = vmatpush1.bf16.msra.mxu0 0
        %885 = vmatprep.subr.bf16.mxu0 0
        %886 = vmatpush1.bf16.msra.mxu0 0
        %887 = vmatprep.subr.bf16.mxu0 0
        %888 = vmatpush1.bf16.msra.mxu0 0
        %889 = vmatprep.subr.bf16.mxu0 0
        %890 = vmatpush1.bf16.msra.mxu0 0
        %891 = vmatprep.subr.bf16.mxu0 0
        %892 = vmatpush1.bf16.msra.mxu0 0
        %893 = vmatprep.subr.bf16.mxu0 0
        %894 = vmatpush1.bf16.msra.mxu0 0
        %895 = vmatprep.subr.bf16.mxu0 0
        %896 = vmatpush1.bf16.msra.mxu0 0
        %897 = vmatprep.subr.bf16.mxu0 0
        %898 = vmatpush1.bf16.msra.mxu0 0
        %899 = vmatprep.mubr.bf16.mxu0 0
        %900 = vmatmul.mubr.bf16.gmra.mrb[0].mxu0 %v680
        %v901 = vpop.f32.mrb[0].mxu0
        %v902 = vadd.f32 %v817, %v901
        %v903 = vpop.f32.mrb[0].mxu0
        %v904 = vpop.f32.mrb[0].mxu0
        %v905 = vadd.f32 %v820, %v904
        %v906 = vpop.f32.mrb[0].mxu0
        %907 = vmatprep.mubr.bf16.mxu0 0
        %908 = vmatmul.mubr.bf16.gmra.mrb[0].mxu0 %v682
        %v909 = vpop.f32.mrb[0].mxu0
        %v910 = vadd.f32 %v825, %v909
        %v911 = vpop.f32.mrb[0].mxu0
        %v912 = vpop.f32.mrb[0].mxu0
        %v913 = vadd.f32 %v828, %v912
        %v914 = vpop.f32.mrb[0].mxu0
        %915 = vdwg.mxu0
        %s916 = scalar_lea.vmem %s1, 96
        %v917 = vld [vmem:[%s916] sm:$0xf]
        %v918 = vld [vmem:[%s916 + $0x4] sm:$0xf]
        %v919 = vld [vmem:[%s916 + $0x8] sm:$0xf]
        %v920 = vld [vmem:[%s916 + $0xc] sm:$0xf]
        %v921 = vld [vmem:[%s916 + $0x10] sm:$0xf]
        %v922 = vld [vmem:[%s916 + $0x14] sm:$0xf]
        %v923 = vld [vmem:[%s916 + $0x18] sm:$0xf]
        %v924 = vld [vmem:[%s916 + $0x1c] sm:$0xf]
        %v925 = vld [vmem:[%s916 + $0x20] sm:$0xf]
        %v926 = vld [vmem:[%s916 + $0x24] sm:$0xf]
        %v927 = vld [vmem:[%s916 + $0x28] sm:$0xf]
        %v928 = vld [vmem:[%s916 + $0x2c] sm:$0xf]
        %vm931 = vcmask 1046528
        %v932 = vrot.slane %v497, 1
        %v933 = vrot.slane %v498, 1
        %v934 = vsel %vm931, %v932, %v933
        %v947 = vunpack.c.l.b16 %v917
        %v948 = vunpack.c.l.b16 %v918
        %v949 = vunpack.c.l.b16 %v919
        %v950 = vunpack.c.l.b16 %v920
        %v951 = vunpack.c.l.b16 %v921
        %v952 = vunpack.c.l.b16 %v922
        %v953 = vunpack.c.l.b16 %v923
        %v954 = vunpack.c.l.b16 %v924
        %v955 = vunpack.c.l.b16 %v925
        %v956 = vunpack.c.l.b16 %v926
        %v957 = vunpack.c.l.b16 %v927
        %v958 = vunpack.c.l.b16 %v928
        %v959 = vpack.c.b16 %v948, %v947
        %v960 = vpack.c.b16 %v950, %v949
        %v961 = vpack.c.b16 %v952, %v951
        %v962 = vpack.c.b16 %v954, %v953
        %v963 = vpack.c.b16 %v956, %v955
        %v964 = vpack.c.b16 %v958, %v957
        %v972 = vsel %vm588, %v934, 0
        %v975 = vsel %vm588, %v933, 0
        %977 = vmatprep.subr.bf16.mxu0 0
        %978 = vmatpush1.bf16.msra.mxu0 %v959
        %979 = vmatprep.subr.bf16.mxu0 0
        %980 = vmatpush1.bf16.msra.mxu0 %v960
        %981 = vmatprep.subr.bf16.mxu0 0
        %982 = vmatpush1.bf16.msra.mxu0 %v961
        %983 = vmatprep.subr.bf16.mxu0 0
        %984 = vmatpush1.bf16.msra.mxu0 %v962
        %985 = vmatprep.subr.bf16.mxu0 0
        %986 = vmatpush1.bf16.msra.mxu0 %v963
        %987 = vmatprep.subr.bf16.mxu0 0
        %988 = vmatpush1.bf16.msra.mxu0 %v964
        %989 = vmatprep.subr.bf16.mxu0 0
        %990 = vmatpush1.bf16.msra.mxu0 0
        %991 = vmatprep.subr.bf16.mxu0 0
        %992 = vmatpush1.bf16.msra.mxu0 0
        %993 = vmatprep.subr.bf16.mxu0 0
        %994 = vmatpush1.bf16.msra.mxu0 0
        %995 = vmatprep.subr.bf16.mxu0 0
        %996 = vmatpush1.bf16.msra.mxu0 0
        %997 = vmatprep.subr.bf16.mxu0 0
        %998 = vmatpush1.bf16.msra.mxu0 0
        %999 = vmatprep.subr.bf16.mxu0 0
        %1000 = vmatpush1.bf16.msra.mxu0 0
        %1001 = vmatprep.subr.bf16.mxu0 0
        %1002 = vmatpush1.bf16.msra.mxu0 0
        %1003 = vmatprep.subr.bf16.mxu0 0
        %1004 = vmatpush1.bf16.msra.mxu0 0
        %1005 = vmatprep.subr.bf16.mxu0 0
        %1006 = vmatpush1.bf16.msra.mxu0 0
        %1007 = vmatprep.subr.bf16.mxu0 0
        %1008 = vmatpush1.bf16.msra.mxu0 0
        %1009 = vmatprep.mubr.bf16.mxu0 0
        %1010 = vmatmul.mubr.bf16.gmra.mrb[0].mxu0 %v972
        %v1011 = vpop.f32.mrb[0].mxu0
        %v1012 = vadd.f32 0.0, %v1011
        %v1013 = vpop.f32.mrb[0].mxu0
        %v1014 = vpop.f32.mrb[0].mxu0
        %v1015 = vadd.f32 0.0, %v1014
        %v1016 = vpop.f32.mrb[0].mxu0
        %1017 = vmatprep.mubr.bf16.mxu0 0
        %1018 = vmatmul.mubr.bf16.gmra.mrb[0].mxu0 %v975
        %v1019 = vpop.f32.mrb[0].mxu0
        %v1020 = vadd.f32 0.0, %v1019
        %v1021 = vpop.f32.mrb[0].mxu0
        %v1022 = vpop.f32.mrb[0].mxu0
        %v1023 = vadd.f32 0.0, %v1022
        %v1024 = vpop.f32.mrb[0].mxu0
        %1025 = vdwg.mxu0
        %v1026 = vadd.f32 %v719, %v1012
        %v1027 = vadd.f32 %v722, %v1015
        %v1028 = vadd.f32 %v727, %v1020
        %v1029 = vadd.f32 %v730, %v1023
        %s1030 = scalar_lea.vmem %s2, 96
        %v1031 = vld [vmem:[%s1030] sm:$0xf]
        %v1032 = vld [vmem:[%s1030 + $0x4] sm:$0xf]
        %v1033 = vld [vmem:[%s1030 + $0x8] sm:$0xf]
        %v1034 = vld [vmem:[%s1030 + $0xc] sm:$0xf]
        %v1035 = vld [vmem:[%s1030 + $0x10] sm:$0xf]
        %v1036 = vld [vmem:[%s1030 + $0x14] sm:$0xf]
        %v1037 = vld [vmem:[%s1030 + $0x18] sm:$0xf]
        %v1038 = vld [vmem:[%s1030 + $0x1c] sm:$0xf]
        %v1039 = vld [vmem:[%s1030 + $0x20] sm:$0xf]
        %v1040 = vld [vmem:[%s1030 + $0x24] sm:$0xf]
        %v1041 = vld [vmem:[%s1030 + $0x28] sm:$0xf]
        %v1042 = vld [vmem:[%s1030 + $0x2c] sm:$0xf]
        %v1055 = vunpack.c.l.b16 %v1031
        %v1056 = vunpack.c.l.b16 %v1032
        %v1057 = vunpack.c.l.b16 %v1033
        %v1058 = vunpack.c.l.b16 %v1034
        %v1059 = vunpack.c.l.b16 %v1035
        %v1060 = vunpack.c.l.b16 %v1036
        %v1061 = vunpack.c.l.b16 %v1037
        %v1062 = vunpack.c.l.b16 %v1038
        %v1063 = vunpack.c.l.b16 %v1039
        %v1064 = vunpack.c.l.b16 %v1040
        %v1065 = vunpack.c.l.b16 %v1041
        %v1066 = vunpack.c.l.b16 %v1042
        %v1067 = vpack.c.b16 %v1056, %v1055
        %v1068 = vpack.c.b16 %v1058, %v1057
        %v1069 = vpack.c.b16 %v1060, %v1059
        %v1070 = vpack.c.b16 %v1062, %v1061
        %v1071 = vpack.c.b16 %v1064, %v1063
        %v1072 = vpack.c.b16 %v1066, %v1065
        %1079 = vmatprep.subr.bf16.mxu0 0
        %1080 = vmatpush1.bf16.msra.mxu0 %v1067
        %1081 = vmatprep.subr.bf16.mxu0 0
        %1082 = vmatpush1.bf16.msra.mxu0 %v1068
        %1083 = vmatprep.subr.bf16.mxu0 0
        %1084 = vmatpush1.bf16.msra.mxu0 %v1069
        %1085 = vmatprep.subr.bf16.mxu0 0
        %1086 = vmatpush1.bf16.msra.mxu0 %v1070
        %1087 = vmatprep.subr.bf16.mxu0 0
        %1088 = vmatpush1.bf16.msra.mxu0 %v1071
        %1089 = vmatprep.subr.bf16.mxu0 0
        %1090 = vmatpush1.bf16.msra.mxu0 %v1072
        %1091 = vmatprep.subr.bf16.mxu0 0
        %1092 = vmatpush1.bf16.msra.mxu0 0
        %1093 = vmatprep.subr.bf16.mxu0 0
        %1094 = vmatpush1.bf16.msra.mxu0 0
        %1095 = vmatprep.subr.bf16.mxu0 0
        %1096 = vmatpush1.bf16.msra.mxu0 0
        %1097 = vmatprep.subr.bf16.mxu0 0
        %1098 = vmatpush1.bf16.msra.mxu0 0
        %1099 = vmatprep.subr.bf16.mxu0 0
        %1100 = vmatpush1.bf16.msra.mxu0 0
        %1101 = vmatprep.subr.bf16.mxu0 0
        %1102 = vmatpush1.bf16.msra.mxu0 0
        %1103 = vmatprep.subr.bf16.mxu0 0
        %1104 = vmatpush1.bf16.msra.mxu0 0
        %1105 = vmatprep.subr.bf16.mxu0 0
        %1106 = vmatpush1.bf16.msra.mxu0 0
        %1107 = vmatprep.subr.bf16.mxu0 0
        %1108 = vmatpush1.bf16.msra.mxu0 0
        %1109 = vmatprep.subr.bf16.mxu0 0
        %1110 = vmatpush1.bf16.msra.mxu0 0
        %1111 = vmatprep.mubr.bf16.mxu0 0
        %1112 = vmatmul.mubr.bf16.gmra.mrb[0].mxu0 %v972
        %v1113 = vpop.f32.mrb[0].mxu0
        %v1114 = vadd.f32 0.0, %v1113
        %v1115 = vpop.f32.mrb[0].mxu0
        %v1116 = vpop.f32.mrb[0].mxu0
        %v1117 = vadd.f32 0.0, %v1116
        %v1118 = vpop.f32.mrb[0].mxu0
        %1119 = vmatprep.mubr.bf16.mxu0 0
        %1120 = vmatmul.mubr.bf16.gmra.mrb[0].mxu0 %v975
        %v1121 = vpop.f32.mrb[0].mxu0
        %v1122 = vadd.f32 0.0, %v1121
        %v1123 = vpop.f32.mrb[0].mxu0
        %v1124 = vpop.f32.mrb[0].mxu0
        %v1125 = vadd.f32 0.0, %v1124
        %v1126 = vpop.f32.mrb[0].mxu0
        %1127 = vdwg.mxu0
        %v1128 = vadd.f32 %v902, %v1114
        %v1129 = vadd.f32 %v905, %v1117
        %v1130 = vadd.f32 %v910, %v1122
        %v1131 = vadd.f32 %v913, %v1125
        %s1132 = scalar_lea.vmem %s1, 144
        %v1133 = vld [vmem:[%s1132] sm:$0xf]
        %v1134 = vld [vmem:[%s1132 + $0x4] sm:$0xf]
        %v1135 = vld [vmem:[%s1132 + $0x8] sm:$0xf]
        %v1136 = vld [vmem:[%s1132 + $0xc] sm:$0xf]
        %v1137 = vld [vmem:[%s1132 + $0x10] sm:$0xf]
        %v1138 = vld [vmem:[%s1132 + $0x14] sm:$0xf]
        %v1139 = vld [vmem:[%s1132 + $0x18] sm:$0xf]
        %v1140 = vld [vmem:[%s1132 + $0x1c] sm:$0xf]
        %v1141 = vld [vmem:[%s1132 + $0x20] sm:$0xf]
        %v1142 = vld [vmem:[%s1132 + $0x24] sm:$0xf]
        %v1143 = vld [vmem:[%s1132 + $0x28] sm:$0xf]
        %v1144 = vld [vmem:[%s1132 + $0x2c] sm:$0xf]
        %vm1145 = vsmask.f32 6400
        %v1146 = vrot.slane %v538, 1
        %v1147 = vrot.slane %v540, 2
        %v1148 = vor.u32 %v1146, %v1147
        %v1149 = vrot.slane %v549, 1
        %v1150 = vrot.slane %v545, 2
        %v1151 = vor.u32 %v1149, %v1150
        %v1152 = vsel %vm1145, %v1148, %v1151
        %v1165 = vunpack.c.l.b16 %v1133
        %v1166 = vunpack.c.l.b16 %v1134
        %v1167 = vunpack.c.l.b16 %v1135
        %v1168 = vunpack.c.l.b16 %v1136
        %v1169 = vunpack.c.l.b16 %v1137
        %v1170 = vunpack.c.l.b16 %v1138
        %v1171 = vunpack.c.l.b16 %v1139
        %v1172 = vunpack.c.l.b16 %v1140
        %v1173 = vunpack.c.l.b16 %v1141
        %v1174 = vunpack.c.l.b16 %v1142
        %v1175 = vunpack.c.l.b16 %v1143
        %v1176 = vunpack.c.l.b16 %v1144
        %v1177 = vpack.c.b16 %v1166, %v1165
        %v1178 = vpack.c.b16 %v1168, %v1167
        %v1179 = vpack.c.b16 %v1170, %v1169
        %v1180 = vpack.c.b16 %v1172, %v1171
        %v1181 = vpack.c.b16 %v1174, %v1173
        %v1182 = vpack.c.b16 %v1176, %v1175
        %v1190 = vsel %vm588, %v1152, 0
        %v1193 = vsel %vm588, %v1151, 0
        %1195 = vmatprep.subr.bf16.mxu0 0
        %1196 = vmatpush1.bf16.msra.mxu0 %v1177
        %1197 = vmatprep.subr.bf16.mxu0 0
        %1198 = vmatpush1.bf16.msra.mxu0 %v1178
        %1199 = vmatprep.subr.bf16.mxu0 0
        %1200 = vmatpush1.bf16.msra.mxu0 %v1179
        %1201 = vmatprep.subr.bf16.mxu0 0
        %1202 = vmatpush1.bf16.msra.mxu0 %v1180
        %1203 = vmatprep.subr.bf16.mxu0 0
        %1204 = vmatpush1.bf16.msra.mxu0 %v1181
        %1205 = vmatprep.subr.bf16.mxu0 0
        %1206 = vmatpush1.bf16.msra.mxu0 %v1182
        %1207 = vmatprep.subr.bf16.mxu0 0
        %1208 = vmatpush1.bf16.msra.mxu0 0
        %1209 = vmatprep.subr.bf16.mxu0 0
        %1210 = vmatpush1.bf16.msra.mxu0 0
        %1211 = vmatprep.subr.bf16.mxu0 0
        %1212 = vmatpush1.bf16.msra.mxu0 0
        %1213 = vmatprep.subr.bf16.mxu0 0
        %1214 = vmatpush1.bf16.msra.mxu0 0
        %1215 = vmatprep.subr.bf16.mxu0 0
        %1216 = vmatpush1.bf16.msra.mxu0 0
        %1217 = vmatprep.subr.bf16.mxu0 0
        %1218 = vmatpush1.bf16.msra.mxu0 0
        %1219 = vmatprep.subr.bf16.mxu0 0
        %1220 = vmatpush1.bf16.msra.mxu0 0
        %1221 = vmatprep.subr.bf16.mxu0 0
        %1222 = vmatpush1.bf16.msra.mxu0 0
        %1223 = vmatprep.subr.bf16.mxu0 0
        %1224 = vmatpush1.bf16.msra.mxu0 0
        %1225 = vmatprep.subr.bf16.mxu0 0
        %1226 = vmatpush1.bf16.msra.mxu0 0
        %1227 = vmatprep.mubr.bf16.mxu0 0
        %1228 = vmatmul.mubr.bf16.gmra.mrb[0].mxu0 %v1190
        %v1229 = vpop.f32.mrb[0].mxu0
        %v1230 = vadd.f32 0.0, %v1229
        %v1231 = vpop.f32.mrb[0].mxu0
        %v1232 = vpop.f32.mrb[0].mxu0
        %v1233 = vadd.f32 0.0, %v1232
        %v1234 = vpop.f32.mrb[0].mxu0
        %1235 = vmatprep.mubr.bf16.mxu0 0
        %1236 = vmatmul.mubr.bf16.gmra.mrb[0].mxu0 %v1193
        %v1237 = vpop.f32.mrb[0].mxu0
        %v1238 = vadd.f32 0.0, %v1237
        %v1239 = vpop.f32.mrb[0].mxu0
        %v1240 = vpop.f32.mrb[0].mxu0
        %v1241 = vadd.f32 0.0, %v1240
        %v1242 = vpop.f32.mrb[0].mxu0
        %1243 = vdwg.mxu0
        %v1244 = vadd.f32 %v1026, %v1230
        %v1245 = vadd.f32 %v1027, %v1233
        %v1246 = vadd.f32 %v1028, %v1238
        %v1247 = vadd.f32 %v1029, %v1241
        %s1248 = scalar_lea.vmem %s2, 144
        %v1249 = vld [vmem:[%s1248] sm:$0xf]
        %v1250 = vld [vmem:[%s1248 + $0x4] sm:$0xf]
        %v1251 = vld [vmem:[%s1248 + $0x8] sm:$0xf]
        %v1252 = vld [vmem:[%s1248 + $0xc] sm:$0xf]
        %v1253 = vld [vmem:[%s1248 + $0x10] sm:$0xf]
        %v1254 = vld [vmem:[%s1248 + $0x14] sm:$0xf]
        %v1255 = vld [vmem:[%s1248 + $0x18] sm:$0xf]
        %v1256 = vld [vmem:[%s1248 + $0x1c] sm:$0xf]
        %v1257 = vld [vmem:[%s1248 + $0x20] sm:$0xf]
        %v1258 = vld [vmem:[%s1248 + $0x24] sm:$0xf]
        %v1259 = vld [vmem:[%s1248 + $0x28] sm:$0xf]
        %v1260 = vld [vmem:[%s1248 + $0x2c] sm:$0xf]
        %v1273 = vunpack.c.l.b16 %v1249
        %v1274 = vunpack.c.l.b16 %v1250
        %v1275 = vunpack.c.l.b16 %v1251
        %v1276 = vunpack.c.l.b16 %v1252
        %v1277 = vunpack.c.l.b16 %v1253
        %v1278 = vunpack.c.l.b16 %v1254
        %v1279 = vunpack.c.l.b16 %v1255
        %v1280 = vunpack.c.l.b16 %v1256
        %v1281 = vunpack.c.l.b16 %v1257
        %v1282 = vunpack.c.l.b16 %v1258
        %v1283 = vunpack.c.l.b16 %v1259
        %v1284 = vunpack.c.l.b16 %v1260
        %v1285 = vpack.c.b16 %v1274, %v1273
        %v1286 = vpack.c.b16 %v1276, %v1275
        %v1287 = vpack.c.b16 %v1278, %v1277
        %v1288 = vpack.c.b16 %v1280, %v1279
        %v1289 = vpack.c.b16 %v1282, %v1281
        %v1290 = vpack.c.b16 %v1284, %v1283
        %1297 = vmatprep.subr.bf16.mxu0 0
        %1298 = vmatpush1.bf16.msra.mxu0 %v1285
        %1299 = vmatprep.subr.bf16.mxu0 0
        %1300 = vmatpush1.bf16.msra.mxu0 %v1286
        %1301 = vmatprep.subr.bf16.mxu0 0
        %1302 = vmatpush1.bf16.msra.mxu0 %v1287
        %1303 = vmatprep.subr.bf16.mxu0 0
        %1304 = vmatpush1.bf16.msra.mxu0 %v1288
        %1305 = vmatprep.subr.bf16.mxu0 0
        %1306 = vmatpush1.bf16.msra.mxu0 %v1289
        %1307 = vmatprep.subr.bf16.mxu0 0
        %1308 = vmatpush1.bf16.msra.mxu0 %v1290
        %1309 = vmatprep.subr.bf16.mxu0 0
        %1310 = vmatpush1.bf16.msra.mxu0 0
        %1311 = vmatprep.subr.bf16.mxu0 0
        %1312 = vmatpush1.bf16.msra.mxu0 0
        %1313 = vmatprep.subr.bf16.mxu0 0
        %1314 = vmatpush1.bf16.msra.mxu0 0
        %1315 = vmatprep.subr.bf16.mxu0 0
        %1316 = vmatpush1.bf16.msra.mxu0 0
        %1317 = vmatprep.subr.bf16.mxu0 0
        %1318 = vmatpush1.bf16.msra.mxu0 0
        %1319 = vmatprep.subr.bf16.mxu0 0
        %1320 = vmatpush1.bf16.msra.mxu0 0
        %1321 = vmatprep.subr.bf16.mxu0 0
        %1322 = vmatpush1.bf16.msra.mxu0 0
        %1323 = vmatprep.subr.bf16.mxu0 0
        %1324 = vmatpush1.bf16.msra.mxu0 0
        %1325 = vmatprep.subr.bf16.mxu0 0
        %1326 = vmatpush1.bf16.msra.mxu0 0
        %1327 = vmatprep.subr.bf16.mxu0 0
        %1328 = vmatpush1.bf16.msra.mxu0 0
        %1329 = vmatprep.mubr.bf16.mxu0 0
        %1330 = vmatmul.mubr.bf16.gmra.mrb[0].mxu0 %v1190
        %v1331 = vpop.f32.mrb[0].mxu0
        %v1332 = vadd.f32 0.0, %v1331
        %v1333 = vpop.f32.mrb[0].mxu0
        %v1334 = vpop.f32.mrb[0].mxu0
        %v1335 = vadd.f32 0.0, %v1334
        %v1336 = vpop.f32.mrb[0].mxu0
        %1337 = vmatprep.mubr.bf16.mxu0 0
        %1338 = vmatmul.mubr.bf16.gmra.mrb[0].mxu0 %v1193
        %v1339 = vpop.f32.mrb[0].mxu0
        %v1340 = vadd.f32 0.0, %v1339
        %v1341 = vpop.f32.mrb[0].mxu0
        %v1342 = vpop.f32.mrb[0].mxu0
        %v1343 = vadd.f32 0.0, %v1342
        %v1344 = vpop.f32.mrb[0].mxu0
        %1345 = vdwg.mxu0
        %v1346 = vadd.f32 %v1128, %v1332
        %v1347 = vadd.f32 %v1129, %v1335
        %v1348 = vadd.f32 %v1130, %v1340
        %v1349 = vadd.f32 %v1131, %v1343
        %s1350 = scalar_lea.vmem %s1, 192
        %v1351 = vld [vmem:[%s1350] sm:$0xf]
        %v1352 = vld [vmem:[%s1350 + $0x4] sm:$0xf]
        %v1353 = vld [vmem:[%s1350 + $0x8] sm:$0xf]
        %v1354 = vld [vmem:[%s1350 + $0xc] sm:$0xf]
        %v1355 = vld [vmem:[%s1350 + $0x10] sm:$0xf]
        %v1356 = vld [vmem:[%s1350 + $0x14] sm:$0xf]
        %v1357 = vld [vmem:[%s1350 + $0x18] sm:$0xf]
        %v1358 = vld [vmem:[%s1350 + $0x1c] sm:$0xf]
        %v1359 = vld [vmem:[%s1350 + $0x20] sm:$0xf]
        %v1360 = vld [vmem:[%s1350 + $0x24] sm:$0xf]
        %v1361 = vld [vmem:[%s1350 + $0x28] sm:$0xf]
        %v1362 = vld [vmem:[%s1350 + $0x2c] sm:$0xf]
        %vm1363 = vcmask 1045504
        %v1364 = vrot.slane %v497, 2
        %v1365 = vrot.slane %v498, 2
        %v1366 = vsel %vm1363, %v1364, %v1365
        %v1379 = vunpack.c.l.b16 %v1351
        %v1380 = vunpack.c.l.b16 %v1352
        %v1381 = vunpack.c.l.b16 %v1353
        %v1382 = vunpack.c.l.b16 %v1354
        %v1383 = vunpack.c.l.b16 %v1355
        %v1384 = vunpack.c.l.b16 %v1356
        %v1385 = vunpack.c.l.b16 %v1357
        %v1386 = vunpack.c.l.b16 %v1358
        %v1387 = vunpack.c.l.b16 %v1359
        %v1388 = vunpack.c.l.b16 %v1360
        %v1389 = vunpack.c.l.b16 %v1361
        %v1390 = vunpack.c.l.b16 %v1362
        %v1391 = vpack.c.b16 %v1380, %v1379
        %v1392 = vpack.c.b16 %v1382, %v1381
        %v1393 = vpack.c.b16 %v1384, %v1383
        %v1394 = vpack.c.b16 %v1386, %v1385
        %v1395 = vpack.c.b16 %v1388, %v1387
        %v1396 = vpack.c.b16 %v1390, %v1389
        %v1404 = vsel %vm588, %v1366, 0
        %v1407 = vsel %vm588, %v1365, 0
        %1409 = vmatprep.subr.bf16.mxu0 0
        %1410 = vmatpush1.bf16.msra.mxu0 %v1391
        %1411 = vmatprep.subr.bf16.mxu0 0
        %1412 = vmatpush1.bf16.msra.mxu0 %v1392
        %1413 = vmatprep.subr.bf16.mxu0 0
        %1414 = vmatpush1.bf16.msra.mxu0 %v1393
        %1415 = vmatprep.subr.bf16.mxu0 0
        %1416 = vmatpush1.bf16.msra.mxu0 %v1394
        %1417 = vmatprep.subr.bf16.mxu0 0
        %1418 = vmatpush1.bf16.msra.mxu0 %v1395
        %1419 = vmatprep.subr.bf16.mxu0 0
        %1420 = vmatpush1.bf16.msra.mxu0 %v1396
        %1421 = vmatprep.subr.bf16.mxu0 0
        %1422 = vmatpush1.bf16.msra.mxu0 0
        %1423 = vmatprep.subr.bf16.mxu0 0
        %1424 = vmatpush1.bf16.msra.mxu0 0
        %1425 = vmatprep.subr.bf16.mxu0 0
        %1426 = vmatpush1.bf16.msra.mxu0 0
        %1427 = vmatprep.subr.bf16.mxu0 0
        %1428 = vmatpush1.bf16.msra.mxu0 0
        %1429 = vmatprep.subr.bf16.mxu0 0
        %1430 = vmatpush1.bf16.msra.mxu0 0
        %1431 = vmatprep.subr.bf16.mxu0 0
        %1432 = vmatpush1.bf16.msra.mxu0 0
        %1433 = vmatprep.subr.bf16.mxu0 0
        %1434 = vmatpush1.bf16.msra.mxu0 0
        %1435 = vmatprep.subr.bf16.mxu0 0
        %1436 = vmatpush1.bf16.msra.mxu0 0
        %1437 = vmatprep.subr.bf16.mxu0 0
        %1438 = vmatpush1.bf16.msra.mxu0 0
        %1439 = vmatprep.subr.bf16.mxu0 0
        %1440 = vmatpush1.bf16.msra.mxu0 0
        %1441 = vmatprep.mubr.bf16.mxu0 0
        %1442 = vmatmul.mubr.bf16.gmra.mrb[0].mxu0 %v1404
        %v1443 = vpop.f32.mrb[0].mxu0
        %v1444 = vadd.f32 0.0, %v1443
        %v1445 = vpop.f32.mrb[0].mxu0
        %v1446 = vpop.f32.mrb[0].mxu0
        %v1447 = vadd.f32 0.0, %v1446
        %v1448 = vpop.f32.mrb[0].mxu0
        %1449 = vmatprep.mubr.bf16.mxu0 0
        %1450 = vmatmul.mubr.bf16.gmra.mrb[0].mxu0 %v1407
        %v1451 = vpop.f32.mrb[0].mxu0
        %v1452 = vadd.f32 0.0, %v1451
        %v1453 = vpop.f32.mrb[0].mxu0
        %v1454 = vpop.f32.mrb[0].mxu0
        %v1455 = vadd.f32 0.0, %v1454
        %v1456 = vpop.f32.mrb[0].mxu0
        %1457 = vdwg.mxu0
        %v1458 = vadd.f32 %v1244, %v1444
        %v1459 = vadd.f32 %v1245, %v1447
        %v1460 = vadd.f32 %v1246, %v1452
        %v1461 = vadd.f32 %v1247, %v1455
        %s1462 = scalar_lea.vmem %s2, 192
        %v1463 = vld [vmem:[%s1462] sm:$0xf]
        %v1464 = vld [vmem:[%s1462 + $0x4] sm:$0xf]
        %v1465 = vld [vmem:[%s1462 + $0x8] sm:$0xf]
        %v1466 = vld [vmem:[%s1462 + $0xc] sm:$0xf]
        %v1467 = vld [vmem:[%s1462 + $0x10] sm:$0xf]
        %v1468 = vld [vmem:[%s1462 + $0x14] sm:$0xf]
        %v1469 = vld [vmem:[%s1462 + $0x18] sm:$0xf]
        %v1470 = vld [vmem:[%s1462 + $0x1c] sm:$0xf]
        %v1471 = vld [vmem:[%s1462 + $0x20] sm:$0xf]
        %v1472 = vld [vmem:[%s1462 + $0x24] sm:$0xf]
        %v1473 = vld [vmem:[%s1462 + $0x28] sm:$0xf]
        %v1474 = vld [vmem:[%s1462 + $0x2c] sm:$0xf]
        %v1487 = vunpack.c.l.b16 %v1463
        %v1488 = vunpack.c.l.b16 %v1464
        %v1489 = vunpack.c.l.b16 %v1465
        %v1490 = vunpack.c.l.b16 %v1466
        %v1491 = vunpack.c.l.b16 %v1467
        %v1492 = vunpack.c.l.b16 %v1468
        %v1493 = vunpack.c.l.b16 %v1469
        %v1494 = vunpack.c.l.b16 %v1470
        %v1495 = vunpack.c.l.b16 %v1471
        %v1496 = vunpack.c.l.b16 %v1472
        %v1497 = vunpack.c.l.b16 %v1473
        %v1498 = vunpack.c.l.b16 %v1474
        %v1499 = vpack.c.b16 %v1488, %v1487
        %v1500 = vpack.c.b16 %v1490, %v1489
        %v1501 = vpack.c.b16 %v1492, %v1491
        %v1502 = vpack.c.b16 %v1494, %v1493
        %v1503 = vpack.c.b16 %v1496, %v1495
        %v1504 = vpack.c.b16 %v1498, %v1497
        %1511 = vmatprep.subr.bf16.mxu0 0
        %1512 = vmatpush1.bf16.msra.mxu0 %v1499
        %1513 = vmatprep.subr.bf16.mxu0 0
        %1514 = vmatpush1.bf16.msra.mxu0 %v1500
        %1515 = vmatprep.subr.bf16.mxu0 0
        %1516 = vmatpush1.bf16.msra.mxu0 %v1501
        %1517 = vmatprep.subr.bf16.mxu0 0
        %1518 = vmatpush1.bf16.msra.mxu0 %v1502
        %1519 = vmatprep.subr.bf16.mxu0 0
        %1520 = vmatpush1.bf16.msra.mxu0 %v1503
        %1521 = vmatprep.subr.bf16.mxu0 0
        %1522 = vmatpush1.bf16.msra.mxu0 %v1504
        %1523 = vmatprep.subr.bf16.mxu0 0
        %1524 = vmatpush1.bf16.msra.mxu0 0
        %1525 = vmatprep.subr.bf16.mxu0 0
        %1526 = vmatpush1.bf16.msra.mxu0 0
        %1527 = vmatprep.subr.bf16.mxu0 0
        %1528 = vmatpush1.bf16.msra.mxu0 0
        %1529 = vmatprep.subr.bf16.mxu0 0
        %1530 = vmatpush1.bf16.msra.mxu0 0
        %1531 = vmatprep.subr.bf16.mxu0 0
        %1532 = vmatpush1.bf16.msra.mxu0 0
        %1533 = vmatprep.subr.bf16.mxu0 0
        %1534 = vmatpush1.bf16.msra.mxu0 0
        %1535 = vmatprep.subr.bf16.mxu0 0
        %1536 = vmatpush1.bf16.msra.mxu0 0
        %1537 = vmatprep.subr.bf16.mxu0 0
        %1538 = vmatpush1.bf16.msra.mxu0 0
        %1539 = vmatprep.subr.bf16.mxu0 0
        %1540 = vmatpush1.bf16.msra.mxu0 0
        %1541 = vmatprep.subr.bf16.mxu0 0
        %1542 = vmatpush1.bf16.msra.mxu0 0
        %1543 = vmatprep.mubr.bf16.mxu0 0
        %1544 = vmatmul.mubr.bf16.gmra.mrb[0].mxu0 %v1404
        %v1545 = vpop.f32.mrb[0].mxu0
        %v1546 = vadd.f32 0.0, %v1545
        %v1547 = vpop.f32.mrb[0].mxu0
        %v1548 = vpop.f32.mrb[0].mxu0
        %v1549 = vadd.f32 0.0, %v1548
        %v1550 = vpop.f32.mrb[0].mxu0
        %1551 = vmatprep.mubr.bf16.mxu0 0
        %1552 = vmatmul.mubr.bf16.gmra.mrb[0].mxu0 %v1407
        %v1553 = vpop.f32.mrb[0].mxu0
        %v1554 = vadd.f32 0.0, %v1553
        %v1555 = vpop.f32.mrb[0].mxu0
        %v1556 = vpop.f32.mrb[0].mxu0
        %v1557 = vadd.f32 0.0, %v1556
        %v1558 = vpop.f32.mrb[0].mxu0
        %1559 = vdwg.mxu0
        %v1560 = vadd.f32 %v1346, %v1546
        %v1561 = vadd.f32 %v1347, %v1549
        %v1562 = vadd.f32 %v1348, %v1554
        %v1563 = vadd.f32 %v1349, %v1557
        %v1564 = vmax.f32 %v1458, %v1560
        %v1565 = vmax.f32 %v1459, %v1561
        %v1566 = vmax.f32 %v1460, %v1562
        %v1567 = vmax.f32 %v1461, %v1563
        %v1568 = vld [vmem:[%s3] sm:$0x1]
        %v1570 = vlaneseq
        %v1571 = vshrl.u32 %v1570, 7
        %v1572 = vsub.s32 0, %v1571
        %v1573 = vrot.slane %v1568, %v1572
        %v1575 = vadd.f32 %v1564, %v1573
        %v1576 = vadd.f32 %v1565, %v1573
        %v1577 = vadd.f32 %v1566, %v1573
        %v1578 = vadd.f32 %v1567, %v1573
        %v1579 = vmax.f32 %v1575, 0.0
        %v1580 = vmax.f32 %v1576, 0.0
        %v1581 = vmax.f32 %v1577, 0.0
        %v1582 = vmax.f32 %v1578, 0.0
        %v1583 = vpack.c.bf16 %v1580, %v1579
        %v1584 = vpack.c.bf16 %v1582, %v1581
        %v1585 = vld [vmem:[%s4] sm:$0xf]
        %v1586 = vld [vmem:[%s4 + $0x4] sm:$0x7]
        %v1589 = vunpack.c.l.b16 %v1585
        %v1590 = vunpack.c.l.b16 %v1586
        %v1591 = vpack.c.b16 %v1590, %v1589
        %vm1592 = vcmask 228352
        %v1594 = vsel %vm1592, %v1591, 0
        %vm1596 = vcmask 1045504
        %v1598 = vsel %vm1596, %v1584, 0
        %1600 = vmatprep.subr.bf16.mxu0 0
        %1601 = vmatpush1.bf16.msra.mxu0 %v1583
        %1602 = vmatprep.subr.bf16.mxu0 0
        %1603 = vmatpush1.bf16.msra.mxu0 %v1598
        %1604 = vmatprep.subr.bf16.mxu0 0
        %1605 = vmatpush1.bf16.msra.mxu0 0
        %1606 = vmatprep.subr.bf16.mxu0 0
        %1607 = vmatpush1.bf16.msra.mxu0 0
        %1608 = vmatprep.subr.bf16.mxu0 0
        %1609 = vmatpush1.bf16.msra.mxu0 0
        %1610 = vmatprep.subr.bf16.mxu0 0
        %1611 = vmatpush1.bf16.msra.mxu0 0
        %1612 = vmatprep.subr.bf16.mxu0 0
        %1613 = vmatpush1.bf16.msra.mxu0 0
        %1614 = vmatprep.subr.bf16.mxu0 0
        %1615 = vmatpush1.bf16.msra.mxu0 0
        %1616 = vmatprep.subr.bf16.mxu0 0
        %1617 = vmatpush1.bf16.msra.mxu0 0
        %1618 = vmatprep.subr.bf16.mxu0 0
        %1619 = vmatpush1.bf16.msra.mxu0 0
        %1620 = vmatprep.subr.bf16.mxu0 0
        %1621 = vmatpush1.bf16.msra.mxu0 0
        %1622 = vmatprep.subr.bf16.mxu0 0
        %1623 = vmatpush1.bf16.msra.mxu0 0
        %1624 = vmatprep.subr.bf16.mxu0 0
        %1625 = vmatpush1.bf16.msra.mxu0 0
        %1626 = vmatprep.subr.bf16.mxu0 0
        %1627 = vmatpush1.bf16.msra.mxu0 0
        %1628 = vmatprep.subr.bf16.mxu0 0
        %1629 = vmatpush1.bf16.msra.mxu0 0
        %1630 = vmatprep.subr.bf16.mxu0 0
        %1631 = vmatpush1.bf16.msra.mxu0 0
        %1632 = vmatprep.mubr.bf16.mxu0 0
        %1633 = vmatmul.mubr.bf16.gmra.mrb[0].mxu0 %v1594
        %v1634 = vpop.f32.mrb[0].mxu0
        %v1635 = vadd.f32 0.0, %v1634
        %v1636 = vpop.f32.mrb[0].mxu0
        %v1637 = vpop.f32.mrb[0].mxu0
        %v1638 = vadd.f32 0.0, %v1637
        %v1639 = vpop.f32.mrb[0].mxu0
        %1640 = vdwg.mxu0
        %s1641 = scalar_lea.vmem %s4, 8
        %v1642 = vld [vmem:[%s1641] sm:$0xf]
        %v1643 = vld [vmem:[%s1641 + $0x4] sm:$0x7]
        %v1646 = vunpack.c.l.b16 %v1642
        %v1647 = vunpack.c.l.b16 %v1643
        %v1648 = vpack.c.b16 %v1647, %v1646
        %v1650 = vsel %vm1592, %v1648, 0
        %1652 = vmatprep.subr.bf16.mxu0 0
        %1653 = vmatpush1.bf16.msra.mxu0 %v1583
        %1654 = vmatprep.subr.bf16.mxu0 0
        %1655 = vmatpush1.bf16.msra.mxu0 %v1598
        %1656 = vmatprep.subr.bf16.mxu0 0
        %1657 = vmatpush1.bf16.msra.mxu0 0
        %1658 = vmatprep.subr.bf16.mxu0 0
        %1659 = vmatpush1.bf16.msra.mxu0 0
        %1660 = vmatprep.subr.bf16.mxu0 0
        %1661 = vmatpush1.bf16.msra.mxu0 0
        %1662 = vmatprep.subr.bf16.mxu0 0
        %1663 = vmatpush1.bf16.msra.mxu0 0
        %1664 = vmatprep.subr.bf16.mxu0 0
        %1665 = vmatpush1.bf16.msra.mxu0 0
        %1666 = vmatprep.subr.bf16.mxu0 0
        %1667 = vmatpush1.bf16.msra.mxu0 0
        %1668 = vmatprep.subr.bf16.mxu0 0
        %1669 = vmatpush1.bf16.msra.mxu0 0
        %1670 = vmatprep.subr.bf16.mxu0 0
        %1671 = vmatpush1.bf16.msra.mxu0 0
        %1672 = vmatprep.subr.bf16.mxu0 0
        %1673 = vmatpush1.bf16.msra.mxu0 0
        %1674 = vmatprep.subr.bf16.mxu0 0
        %1675 = vmatpush1.bf16.msra.mxu0 0
        %1676 = vmatprep.subr.bf16.mxu0 0
        %1677 = vmatpush1.bf16.msra.mxu0 0
        %1678 = vmatprep.subr.bf16.mxu0 0
        %1679 = vmatpush1.bf16.msra.mxu0 0
        %1680 = vmatprep.subr.bf16.mxu0 0
        %1681 = vmatpush1.bf16.msra.mxu0 0
        %1682 = vmatprep.subr.bf16.mxu0 0
        %1683 = vmatpush1.bf16.msra.mxu0 0
        %1684 = vmatprep.mubr.bf16.mxu0 0
        %1685 = vmatmul.mubr.bf16.gmra.mrb[0].mxu0 %v1650
        %v1686 = vpop.f32.mrb[0].mxu0
        %v1687 = vadd.f32 0.0, %v1686
        %v1688 = vpop.f32.mrb[0].mxu0
        %v1689 = vpop.f32.mrb[0].mxu0
        %v1690 = vadd.f32 0.0, %v1689
        %v1691 = vpop.f32.mrb[0].mxu0
        %1692 = vdwg.mxu0
        %v1693 = vmax.f32 %v1635, %v1687
        %v1694 = vmax.f32 %v1638, %v1690
        %v1695 = vpack.c.bf16 %v1694, %v1693
        %v1696 = vld [vmem:[%s5] sm:$0xf]
        %v1697 = vld [vmem:[%s5 + $0x4] sm:$0xf]
        %v1698 = vld [vmem:[%s5 + $0x8] sm:$0xf]
        %v1699 = vld [vmem:[%s5 + $0xc] sm:$0xf]
        %v1700 = vld [vmem:[%s5 + $0x10] sm:$0xf]
        %v1701 = vld [vmem:[%s5 + $0x14] sm:$0xf]
        %v1702 = vld [vmem:[%s5 + $0x18] sm:$0xf]
        %v1703 = vld [vmem:[%s5 + $0x1c] sm:$0xf]
        %v1704 = vld [vmem:[%s5 + $0x20] sm:$0xf]
        %v1705 = vld [vmem:[%s5 + $0x24] sm:$0xf]
        %v1706 = vld [vmem:[%s5 + $0x28] sm:$0xf]
        %v1707 = vld [vmem:[%s5 + $0x2c] sm:$0xf]
        %v1708 = vld [vmem:[%s5 + $0x30] sm:$0xf]
        %v1709 = vld [vmem:[%s5 + $0x34] sm:$0xf]
        %v1710 = vld [vmem:[%s6] sm:$0xf]
        %v1711 = vld [vmem:[%s6 + $0x4] sm:$0xf]
        %v1712 = vld [vmem:[%s6 + $0x8] sm:$0xf]
        %v1713 = vld [vmem:[%s6 + $0xc] sm:$0xf]
        %v1714 = vld [vmem:[%s6 + $0x10] sm:$0xf]
        %v1715 = vld [vmem:[%s6 + $0x14] sm:$0xf]
        %v1716 = vld [vmem:[%s6 + $0x18] sm:$0xf]
        %v1717 = vld [vmem:[%s6 + $0x1c] sm:$0xf]
        %v1718 = vld [vmem:[%s6 + $0x20] sm:$0xf]
        %v1719 = vld [vmem:[%s6 + $0x24] sm:$0xf]
        %v1720 = vld [vmem:[%s6 + $0x28] sm:$0xf]
        %v1721 = vld [vmem:[%s6 + $0x2c] sm:$0xf]
        %v1722 = vld [vmem:[%s6 + $0x30] sm:$0xf]
        %v1723 = vld [vmem:[%s6 + $0x34] sm:$0xf]
        %s1724 = scalar_lea.vmem %s5, 56
        %v1725 = vld [vmem:[%s1724] sm:$0xf]
        %v1726 = vld [vmem:[%s1724 + $0x4] sm:$0xf]
        %v1727 = vld [vmem:[%s1724 + $0x8] sm:$0xf]
        %v1728 = vld [vmem:[%s1724 + $0xc] sm:$0xf]
        %v1729 = vld [vmem:[%s1724 + $0x10] sm:$0xf]
        %v1730 = vld [vmem:[%s1724 + $0x14] sm:$0xf]
        %v1731 = vld [vmem:[%s1724 + $0x18] sm:$0xf]
        %v1732 = vld [vmem:[%s1724 + $0x1c] sm:$0xf]
        %v1733 = vld [vmem:[%s1724 + $0x20] sm:$0xf]
        %v1734 = vld [vmem:[%s1724 + $0x24] sm:$0xf]
        %v1735 = vld [vmem:[%s1724 + $0x28] sm:$0xf]
        %v1736 = vld [vmem:[%s1724 + $0x2c] sm:$0xf]
        %v1737 = vld [vmem:[%s1724 + $0x30] sm:$0xf]
        %v1738 = vld [vmem:[%s1724 + $0x34] sm:$0xf]
        %v1740 = vshrl.u32 %v1695, 16
        %v1742 = vshll.u32 %v1695, 16
        %v1744 = vrot.slane %v1742, 1
        %v1745 = vor.u32 %v1740, %v1744
        %v1760 = vunpack.c.l.b16 %v1725
        %v1761 = vunpack.c.l.b16 %v1726
        %v1762 = vunpack.c.l.b16 %v1727
        %v1763 = vunpack.c.l.b16 %v1728
        %v1764 = vunpack.c.l.b16 %v1729
        %v1765 = vunpack.c.l.b16 %v1730
        %v1766 = vunpack.c.l.b16 %v1731
        %v1767 = vunpack.c.l.b16 %v1732
        %v1768 = vunpack.c.l.b16 %v1733
        %v1769 = vunpack.c.l.b16 %v1734
        %v1770 = vunpack.c.l.b16 %v1735
        %v1771 = vunpack.c.l.b16 %v1736
        %v1772 = vunpack.c.l.b16 %v1737
        %v1773 = vunpack.c.l.b16 %v1738
        %v1774 = vpack.c.b16 %v1761, %v1760
        %v1775 = vpack.c.b16 %v1763, %v1762
        %v1776 = vpack.c.b16 %v1765, %v1764
        %v1777 = vpack.c.b16 %v1767, %v1766
        %v1778 = vpack.c.b16 %v1769, %v1768
        %v1779 = vpack.c.b16 %v1771, %v1770
        %v1780 = vpack.c.b16 %v1773, %v1772
        %vm1788 = vcmask 916480
        %v1790 = vsel %vm1788, %v1745, 0
        %1792 = vmatprep.subr.bf16.mxu0 0
        %1793 = vmatpush1.bf16.msra.mxu0 %v1774
        %1794 = vmatprep.subr.bf16.mxu0 0
        %1795 = vmatpush1.bf16.msra.mxu0 %v1775
        %1796 = vmatprep.subr.bf16.mxu0 0
        %1797 = vmatpush1.bf16.msra.mxu0 %v1776
        %1798 = vmatprep.subr.bf16.mxu0 0
        %1799 = vmatpush1.bf16.msra.mxu0 %v1777
        %1800 = vmatprep.subr.bf16.mxu0 0
        %1801 = vmatpush1.bf16.msra.mxu0 %v1778
        %1802 = vmatprep.subr.bf16.mxu0 0
        %1803 = vmatpush1.bf16.msra.mxu0 %v1779
        %1804 = vmatprep.subr.bf16.mxu0 0
        %1805 = vmatpush1.bf16.msra.mxu0 %v1780
        %1806 = vmatprep.subr.bf16.mxu0 0
        %1807 = vmatpush1.bf16.msra.mxu0 0
        %1808 = vmatprep.subr.bf16.mxu0 0
        %1809 = vmatpush1.bf16.msra.mxu0 0
        %1810 = vmatprep.subr.bf16.mxu0 0
        %1811 = vmatpush1.bf16.msra.mxu0 0
        %1812 = vmatprep.subr.bf16.mxu0 0
        %1813 = vmatpush1.bf16.msra.mxu0 0
        %1814 = vmatprep.subr.bf16.mxu0 0
        %1815 = vmatpush1.bf16.msra.mxu0 0
        %1816 = vmatprep.subr.bf16.mxu0 0
        %1817 = vmatpush1.bf16.msra.mxu0 0
        %1818 = vmatprep.subr.bf16.mxu0 0
        %1819 = vmatpush1.bf16.msra.mxu0 0
        %1820 = vmatprep.subr.bf16.mxu0 0
        %1821 = vmatpush1.bf16.msra.mxu0 0
        %1822 = vmatprep.subr.bf16.mxu0 0
        %1823 = vmatpush1.bf16.msra.mxu0 0
        %1824 = vmatprep.mubr.bf16.mxu0 0
        %1825 = vmatmul.mubr.bf16.gmra.mrb[0].mxu0 %v1790
        %v1826 = vpop.f32.mrb[0].mxu0
        %v1827 = vadd.f32 0.0, %v1826
        %v1828 = vpop.f32.mrb[0].mxu0
        %v1829 = vpop.f32.mrb[0].mxu0
        %v1830 = vadd.f32 0.0, %v1829
        %v1831 = vpop.f32.mrb[0].mxu0
        %1832 = vdwg.mxu0
        %v1847 = vunpack.c.l.b16 %v1696
        %v1848 = vunpack.c.l.b16 %v1697
        %v1849 = vunpack.c.l.b16 %v1698
        %v1850 = vunpack.c.l.b16 %v1699
        %v1851 = vunpack.c.l.b16 %v1700
        %v1852 = vunpack.c.l.b16 %v1701
        %v1853 = vunpack.c.l.b16 %v1702
        %v1854 = vunpack.c.l.b16 %v1703
        %v1855 = vunpack.c.l.b16 %v1704
        %v1856 = vunpack.c.l.b16 %v1705
        %v1857 = vunpack.c.l.b16 %v1706
        %v1858 = vunpack.c.l.b16 %v1707
        %v1859 = vunpack.c.l.b16 %v1708
        %v1860 = vunpack.c.l.b16 %v1709
        %v1861 = vpack.c.b16 %v1848, %v1847
        %v1862 = vpack.c.b16 %v1850, %v1849
        %v1863 = vpack.c.b16 %v1852, %v1851
        %v1864 = vpack.c.b16 %v1854, %v1853
        %v1865 = vpack.c.b16 %v1856, %v1855
        %v1866 = vpack.c.b16 %v1858, %v1857
        %v1867 = vpack.c.b16 %v1860, %v1859
        %v1875 = vsel %vm1788, %v1695, 0
        %1877 = vmatprep.subr.bf16.mxu0 0
        %1878 = vmatpush1.bf16.msra.mxu0 %v1861
        %1879 = vmatprep.subr.bf16.mxu0 0
        %1880 = vmatpush1.bf16.msra.mxu0 %v1862
        %1881 = vmatprep.subr.bf16.mxu0 0
        %1882 = vmatpush1.bf16.msra.mxu0 %v1863
        %1883 = vmatprep.subr.bf16.mxu0 0
        %1884 = vmatpush1.bf16.msra.mxu0 %v1864
        %1885 = vmatprep.subr.bf16.mxu0 0
        %1886 = vmatpush1.bf16.msra.mxu0 %v1865
        %1887 = vmatprep.subr.bf16.mxu0 0
        %1888 = vmatpush1.bf16.msra.mxu0 %v1866
        %1889 = vmatprep.subr.bf16.mxu0 0
        %1890 = vmatpush1.bf16.msra.mxu0 %v1867
        %1891 = vmatprep.subr.bf16.mxu0 0
        %1892 = vmatpush1.bf16.msra.mxu0 0
        %1893 = vmatprep.subr.bf16.mxu0 0
        %1894 = vmatpush1.bf16.msra.mxu0 0
        %1895 = vmatprep.subr.bf16.mxu0 0
        %1896 = vmatpush1.bf16.msra.mxu0 0
        %1897 = vmatprep.subr.bf16.mxu0 0
        %1898 = vmatpush1.bf16.msra.mxu0 0
        %1899 = vmatprep.subr.bf16.mxu0 0
        %1900 = vmatpush1.bf16.msra.mxu0 0
        %1901 = vmatprep.subr.bf16.mxu0 0
        %1902 = vmatpush1.bf16.msra.mxu0 0
        %1903 = vmatprep.subr.bf16.mxu0 0
        %1904 = vmatpush1.bf16.msra.mxu0 0
        %1905 = vmatprep.subr.bf16.mxu0 0
        %1906 = vmatpush1.bf16.msra.mxu0 0
        %1907 = vmatprep.subr.bf16.mxu0 0
        %1908 = vmatpush1.bf16.msra.mxu0 0
        %1909 = vmatprep.mubr.bf16.mxu0 0
        %1910 = vmatmul.mubr.bf16.gmra.mrb[0].mxu0 %v1875
        %v1911 = vpop.f32.mrb[0].mxu0
        %v1912 = vadd.f32 %v1827, %v1911
        %v1913 = vpop.f32.mrb[0].mxu0
        %v1914 = vpop.f32.mrb[0].mxu0
        %v1915 = vadd.f32 %v1830, %v1914
        %v1916 = vpop.f32.mrb[0].mxu0
        %1917 = vdwg.mxu0
        %s1918 = scalar_lea.vmem %s6, 56
        %v1919 = vld [vmem:[%s1918] sm:$0xf]
        %v1920 = vld [vmem:[%s1918 + $0x4] sm:$0xf]
        %v1921 = vld [vmem:[%s1918 + $0x8] sm:$0xf]
        %v1922 = vld [vmem:[%s1918 + $0xc] sm:$0xf]
        %v1923 = vld [vmem:[%s1918 + $0x10] sm:$0xf]
        %v1924 = vld [vmem:[%s1918 + $0x14] sm:$0xf]
        %v1925 = vld [vmem:[%s1918 + $0x18] sm:$0xf]
        %v1926 = vld [vmem:[%s1918 + $0x1c] sm:$0xf]
        %v1927 = vld [vmem:[%s1918 + $0x20] sm:$0xf]
        %v1928 = vld [vmem:[%s1918 + $0x24] sm:$0xf]
        %v1929 = vld [vmem:[%s1918 + $0x28] sm:$0xf]
        %v1930 = vld [vmem:[%s1918 + $0x2c] sm:$0xf]
        %v1931 = vld [vmem:[%s1918 + $0x30] sm:$0xf]
        %v1932 = vld [vmem:[%s1918 + $0x34] sm:$0xf]
        %v1947 = vunpack.c.l.b16 %v1919
        %v1948 = vunpack.c.l.b16 %v1920
        %v1949 = vunpack.c.l.b16 %v1921
        %v1950 = vunpack.c.l.b16 %v1922
        %v1951 = vunpack.c.l.b16 %v1923
        %v1952 = vunpack.c.l.b16 %v1924
        %v1953 = vunpack.c.l.b16 %v1925
        %v1954 = vunpack.c.l.b16 %v1926
        %v1955 = vunpack.c.l.b16 %v1927
        %v1956 = vunpack.c.l.b16 %v1928
        %v1957 = vunpack.c.l.b16 %v1929
        %v1958 = vunpack.c.l.b16 %v1930
        %v1959 = vunpack.c.l.b16 %v1931
        %v1960 = vunpack.c.l.b16 %v1932
        %v1961 = vpack.c.b16 %v1948, %v1947
        %v1962 = vpack.c.b16 %v1950, %v1949
        %v1963 = vpack.c.b16 %v1952, %v1951
        %v1964 = vpack.c.b16 %v1954, %v1953
        %v1965 = vpack.c.b16 %v1956, %v1955
        %v1966 = vpack.c.b16 %v1958, %v1957
        %v1967 = vpack.c.b16 %v1960, %v1959
        %1975 = vmatprep.subr.bf16.mxu0 0
        %1976 = vmatpush1.bf16.msra.mxu0 %v1961
        %1977 = vmatprep.subr.bf16.mxu0 0
        %1978 = vmatpush1.bf16.msra.mxu0 %v1962
        %1979 = vmatprep.subr.bf16.mxu0 0
        %1980 = vmatpush1.bf16.msra.mxu0 %v1963
        %1981 = vmatprep.subr.bf16.mxu0 0
        %1982 = vmatpush1.bf16.msra.mxu0 %v1964
        %1983 = vmatprep.subr.bf16.mxu0 0
        %1984 = vmatpush1.bf16.msra.mxu0 %v1965
        %1985 = vmatprep.subr.bf16.mxu0 0
        %1986 = vmatpush1.bf16.msra.mxu0 %v1966
        %1987 = vmatprep.subr.bf16.mxu0 0
        %1988 = vmatpush1.bf16.msra.mxu0 %v1967
        %1989 = vmatprep.subr.bf16.mxu0 0
        %1990 = vmatpush1.bf16.msra.mxu0 0
        %1991 = vmatprep.subr.bf16.mxu0 0
        %1992 = vmatpush1.bf16.msra.mxu0 0
        %1993 = vmatprep.subr.bf16.mxu0 0
        %1994 = vmatpush1.bf16.msra.mxu0 0
        %1995 = vmatprep.subr.bf16.mxu0 0
        %1996 = vmatpush1.bf16.msra.mxu0 0
        %1997 = vmatprep.subr.bf16.mxu0 0
        %1998 = vmatpush1.bf16.msra.mxu0 0
        %1999 = vmatprep.subr.bf16.mxu0 0
        %2000 = vmatpush1.bf16.msra.mxu0 0
        %2001 = vmatprep.subr.bf16.mxu0 0
        %2002 = vmatpush1.bf16.msra.mxu0 0
        %2003 = vmatprep.subr.bf16.mxu0 0
        %2004 = vmatpush1.bf16.msra.mxu0 0
        %2005 = vmatprep.subr.bf16.mxu0 0
        %2006 = vmatpush1.bf16.msra.mxu0 0
        %2007 = vmatprep.mubr.bf16.mxu0 0
        %2008 = vmatmul.mubr.bf16.gmra.mrb[0].mxu0 %v1790
        %v2009 = vpop.f32.mrb[0].mxu0
        %v2010 = vadd.f32 0.0, %v2009
        %v2011 = vpop.f32.mrb[0].mxu0
        %v2012 = vpop.f32.mrb[0].mxu0
        %v2013 = vadd.f32 0.0, %v2012
        %v2014 = vpop.f32.mrb[0].mxu0
        %2015 = vdwg.mxu0
        %v2030 = vunpack.c.l.b16 %v1710
        %v2031 = vunpack.c.l.b16 %v1711
        %v2032 = vunpack.c.l.b16 %v1712
        %v2033 = vunpack.c.l.b16 %v1713
        %v2034 = vunpack.c.l.b16 %v1714
        %v2035 = vunpack.c.l.b16 %v1715
        %v2036 = vunpack.c.l.b16 %v1716
        %v2037 = vunpack.c.l.b16 %v1717
        %v2038 = vunpack.c.l.b16 %v1718
        %v2039 = vunpack.c.l.b16 %v1719
        %v2040 = vunpack.c.l.b16 %v1720
        %v2041 = vunpack.c.l.b16 %v1721
        %v2042 = vunpack.c.l.b16 %v1722
        %v2043 = vunpack.c.l.b16 %v1723
        %v2044 = vpack.c.b16 %v2031, %v2030
        %v2045 = vpack.c.b16 %v2033, %v2032
        %v2046 = vpack.c.b16 %v2035, %v2034
        %v2047 = vpack.c.b16 %v2037, %v2036
        %v2048 = vpack.c.b16 %v2039, %v2038
        %v2049 = vpack.c.b16 %v2041, %v2040
        %v2050 = vpack.c.b16 %v2043, %v2042
        %2058 = vmatprep.subr.bf16.mxu0 0
        %2059 = vmatpush1.bf16.msra.mxu0 %v2044
        %2060 = vmatprep.subr.bf16.mxu0 0
        %2061 = vmatpush1.bf16.msra.mxu0 %v2045
        %2062 = vmatprep.subr.bf16.mxu0 0
        %2063 = vmatpush1.bf16.msra.mxu0 %v2046
        %2064 = vmatprep.subr.bf16.mxu0 0
        %2065 = vmatpush1.bf16.msra.mxu0 %v2047
        %2066 = vmatprep.subr.bf16.mxu0 0
        %2067 = vmatpush1.bf16.msra.mxu0 %v2048
        %2068 = vmatprep.subr.bf16.mxu0 0
        %2069 = vmatpush1.bf16.msra.mxu0 %v2049
        %2070 = vmatprep.subr.bf16.mxu0 0
        %2071 = vmatpush1.bf16.msra.mxu0 %v2050
        %2072 = vmatprep.subr.bf16.mxu0 0
        %2073 = vmatpush1.bf16.msra.mxu0 0
        %2074 = vmatprep.subr.bf16.mxu0 0
        %2075 = vmatpush1.bf16.msra.mxu0 0
        %2076 = vmatprep.subr.bf16.mxu0 0
        %2077 = vmatpush1.bf16.msra.mxu0 0
        %2078 = vmatprep.subr.bf16.mxu0 0
        %2079 = vmatpush1.bf16.msra.mxu0 0
        %2080 = vmatprep.subr.bf16.mxu0 0
        %2081 = vmatpush1.bf16.msra.mxu0 0
        %2082 = vmatprep.subr.bf16.mxu0 0
        %2083 = vmatpush1.bf16.msra.mxu0 0
        %2084 = vmatprep.subr.bf16.mxu0 0
        %2085 = vmatpush1.bf16.msra.mxu0 0
        %2086 = vmatprep.subr.bf16.mxu0 0
        %2087 = vmatpush1.bf16.msra.mxu0 0
        %2088 = vmatprep.subr.bf16.mxu0 0
        %2089 = vmatpush1.bf16.msra.mxu0 0
        %2090 = vmatprep.mubr.bf16.mxu0 0
        %2091 = vmatmul.mubr.bf16.gmra.mrb[0].mxu0 %v1875
        %v2092 = vpop.f32.mrb[0].mxu0
        %v2093 = vadd.f32 %v2010, %v2092
        %v2094 = vpop.f32.mrb[0].mxu0
        %v2095 = vpop.f32.mrb[0].mxu0
        %v2096 = vadd.f32 %v2013, %v2095
        %v2097 = vpop.f32.mrb[0].mxu0
        %2098 = vdwg.mxu0
        %s2099 = scalar_lea.vmem %s5, 112
        %v2100 = vld [vmem:[%s2099] sm:$0xf]
        %v2101 = vld [vmem:[%s2099 + $0x4] sm:$0xf]
        %v2102 = vld [vmem:[%s2099 + $0x8] sm:$0xf]
        %v2103 = vld [vmem:[%s2099 + $0xc] sm:$0xf]
        %v2104 = vld [vmem:[%s2099 + $0x10] sm:$0xf]
        %v2105 = vld [vmem:[%s2099 + $0x14] sm:$0xf]
        %v2106 = vld [vmem:[%s2099 + $0x18] sm:$0xf]
        %v2107 = vld [vmem:[%s2099 + $0x1c] sm:$0xf]
        %v2108 = vld [vmem:[%s2099 + $0x20] sm:$0xf]
        %v2109 = vld [vmem:[%s2099 + $0x24] sm:$0xf]
        %v2110 = vld [vmem:[%s2099 + $0x28] sm:$0xf]
        %v2111 = vld [vmem:[%s2099 + $0x2c] sm:$0xf]
        %v2112 = vld [vmem:[%s2099 + $0x30] sm:$0xf]
        %v2113 = vld [vmem:[%s2099 + $0x34] sm:$0xf]
        %v2115 = vrot.slane %v1695, 1
        %v2130 = vunpack.c.l.b16 %v2100
        %v2131 = vunpack.c.l.b16 %v2101
        %v2132 = vunpack.c.l.b16 %v2102
        %v2133 = vunpack.c.l.b16 %v2103
        %v2134 = vunpack.c.l.b16 %v2104
        %v2135 = vunpack.c.l.b16 %v2105
        %v2136 = vunpack.c.l.b16 %v2106
        %v2137 = vunpack.c.l.b16 %v2107
        %v2138 = vunpack.c.l.b16 %v2108
        %v2139 = vunpack.c.l.b16 %v2109
        %v2140 = vunpack.c.l.b16 %v2110
        %v2141 = vunpack.c.l.b16 %v2111
        %v2142 = vunpack.c.l.b16 %v2112
        %v2143 = vunpack.c.l.b16 %v2113
        %v2144 = vpack.c.b16 %v2131, %v2130
        %v2145 = vpack.c.b16 %v2133, %v2132
        %v2146 = vpack.c.b16 %v2135, %v2134
        %v2147 = vpack.c.b16 %v2137, %v2136
        %v2148 = vpack.c.b16 %v2139, %v2138
        %v2149 = vpack.c.b16 %v2141, %v2140
        %v2150 = vpack.c.b16 %v2143, %v2142
        %v2159 = vsel %vm1788, %v2115, 0
        %2161 = vmatprep.subr.bf16.mxu0 0
        %2162 = vmatpush1.bf16.msra.mxu0 %v2144
        %2163 = vmatprep.subr.bf16.mxu0 0
        %2164 = vmatpush1.bf16.msra.mxu0 %v2145
        %2165 = vmatprep.subr.bf16.mxu0 0
        %2166 = vmatpush1.bf16.msra.mxu0 %v2146
        %2167 = vmatprep.subr.bf16.mxu0 0
        %2168 = vmatpush1.bf16.msra.mxu0 %v2147
        %2169 = vmatprep.subr.bf16.mxu0 0
        %2170 = vmatpush1.bf16.msra.mxu0 %v2148
        %2171 = vmatprep.subr.bf16.mxu0 0
        %2172 = vmatpush1.bf16.msra.mxu0 %v2149
        %2173 = vmatprep.subr.bf16.mxu0 0
        %2174 = vmatpush1.bf16.msra.mxu0 %v2150
        %2175 = vmatprep.subr.bf16.mxu0 0
        %2176 = vmatpush1.bf16.msra.mxu0 0
        %2177 = vmatprep.subr.bf16.mxu0 0
        %2178 = vmatpush1.bf16.msra.mxu0 0
        %2179 = vmatprep.subr.bf16.mxu0 0
        %2180 = vmatpush1.bf16.msra.mxu0 0
        %2181 = vmatprep.subr.bf16.mxu0 0
        %2182 = vmatpush1.bf16.msra.mxu0 0
        %2183 = vmatprep.subr.bf16.mxu0 0
        %2184 = vmatpush1.bf16.msra.mxu0 0
        %2185 = vmatprep.subr.bf16.mxu0 0
        %2186 = vmatpush1.bf16.msra.mxu0 0
        %2187 = vmatprep.subr.bf16.mxu0 0
        %2188 = vmatpush1.bf16.msra.mxu0 0
        %2189 = vmatprep.subr.bf16.mxu0 0
        %2190 = vmatpush1.bf16.msra.mxu0 0
        %2191 = vmatprep.subr.bf16.mxu0 0
        %2192 = vmatpush1.bf16.msra.mxu0 0
        %2193 = vmatprep.mubr.bf16.mxu0 0
        %2194 = vmatmul.mubr.bf16.gmra.mrb[0].mxu0 %v2159
        %v2195 = vpop.f32.mrb[0].mxu0
        %v2196 = vadd.f32 0.0, %v2195
        %v2197 = vpop.f32.mrb[0].mxu0
        %v2198 = vpop.f32.mrb[0].mxu0
        %v2199 = vadd.f32 0.0, %v2198
        %v2200 = vpop.f32.mrb[0].mxu0
        %2201 = vdwg.mxu0
        %v2202 = vadd.f32 %v1912, %v2196
        %v2203 = vadd.f32 %v1915, %v2199
        %s2204 = scalar_lea.vmem %s6, 112
        %v2205 = vld [vmem:[%s2204] sm:$0xf]
        %v2206 = vld [vmem:[%s2204 + $0x4] sm:$0xf]
        %v2207 = vld [vmem:[%s2204 + $0x8] sm:$0xf]
        %v2208 = vld [vmem:[%s2204 + $0xc] sm:$0xf]
        %v2209 = vld [vmem:[%s2204 + $0x10] sm:$0xf]
        %v2210 = vld [vmem:[%s2204 + $0x14] sm:$0xf]
        %v2211 = vld [vmem:[%s2204 + $0x18] sm:$0xf]
        %v2212 = vld [vmem:[%s2204 + $0x1c] sm:$0xf]
        %v2213 = vld [vmem:[%s2204 + $0x20] sm:$0xf]
        %v2214 = vld [vmem:[%s2204 + $0x24] sm:$0xf]
        %v2215 = vld [vmem:[%s2204 + $0x28] sm:$0xf]
        %v2216 = vld [vmem:[%s2204 + $0x2c] sm:$0xf]
        %v2217 = vld [vmem:[%s2204 + $0x30] sm:$0xf]
        %v2218 = vld [vmem:[%s2204 + $0x34] sm:$0xf]
        %v2233 = vunpack.c.l.b16 %v2205
        %v2234 = vunpack.c.l.b16 %v2206
        %v2235 = vunpack.c.l.b16 %v2207
        %v2236 = vunpack.c.l.b16 %v2208
        %v2237 = vunpack.c.l.b16 %v2209
        %v2238 = vunpack.c.l.b16 %v2210
        %v2239 = vunpack.c.l.b16 %v2211
        %v2240 = vunpack.c.l.b16 %v2212
        %v2241 = vunpack.c.l.b16 %v2213
        %v2242 = vunpack.c.l.b16 %v2214
        %v2243 = vunpack.c.l.b16 %v2215
        %v2244 = vunpack.c.l.b16 %v2216
        %v2245 = vunpack.c.l.b16 %v2217
        %v2246 = vunpack.c.l.b16 %v2218
        %v2247 = vpack.c.b16 %v2234, %v2233
        %v2248 = vpack.c.b16 %v2236, %v2235
        %v2249 = vpack.c.b16 %v2238, %v2237
        %v2250 = vpack.c.b16 %v2240, %v2239
        %v2251 = vpack.c.b16 %v2242, %v2241
        %v2252 = vpack.c.b16 %v2244, %v2243
        %v2253 = vpack.c.b16 %v2246, %v2245
        %2261 = vmatprep.subr.bf16.mxu0 0
        %2262 = vmatpush1.bf16.msra.mxu0 %v2247
        %2263 = vmatprep.subr.bf16.mxu0 0
        %2264 = vmatpush1.bf16.msra.mxu0 %v2248
        %2265 = vmatprep.subr.bf16.mxu0 0
        %2266 = vmatpush1.bf16.msra.mxu0 %v2249
        %2267 = vmatprep.subr.bf16.mxu0 0
        %2268 = vmatpush1.bf16.msra.mxu0 %v2250
        %2269 = vmatprep.subr.bf16.mxu0 0
        %2270 = vmatpush1.bf16.msra.mxu0 %v2251
        %2271 = vmatprep.subr.bf16.mxu0 0
        %2272 = vmatpush1.bf16.msra.mxu0 %v2252
        %2273 = vmatprep.subr.bf16.mxu0 0
        %2274 = vmatpush1.bf16.msra.mxu0 %v2253
        %2275 = vmatprep.subr.bf16.mxu0 0
        %2276 = vmatpush1.bf16.msra.mxu0 0
        %2277 = vmatprep.subr.bf16.mxu0 0
        %2278 = vmatpush1.bf16.msra.mxu0 0
        %2279 = vmatprep.subr.bf16.mxu0 0
        %2280 = vmatpush1.bf16.msra.mxu0 0
        %2281 = vmatprep.subr.bf16.mxu0 0
        %2282 = vmatpush1.bf16.msra.mxu0 0
        %2283 = vmatprep.subr.bf16.mxu0 0
        %2284 = vmatpush1.bf16.msra.mxu0 0
        %2285 = vmatprep.subr.bf16.mxu0 0
        %2286 = vmatpush1.bf16.msra.mxu0 0
        %2287 = vmatprep.subr.bf16.mxu0 0
        %2288 = vmatpush1.bf16.msra.mxu0 0
        %2289 = vmatprep.subr.bf16.mxu0 0
        %2290 = vmatpush1.bf16.msra.mxu0 0
        %2291 = vmatprep.subr.bf16.mxu0 0
        %2292 = vmatpush1.bf16.msra.mxu0 0
        %2293 = vmatprep.mubr.bf16.mxu0 0
        %2294 = vmatmul.mubr.bf16.gmra.mrb[0].mxu0 %v2159
        %v2295 = vpop.f32.mrb[0].mxu0
        %v2296 = vadd.f32 0.0, %v2295
        %v2297 = vpop.f32.mrb[0].mxu0
        %v2298 = vpop.f32.mrb[0].mxu0
        %v2299 = vadd.f32 0.0, %v2298
        %v2300 = vpop.f32.mrb[0].mxu0
        %2301 = vdwg.mxu0
        %v2302 = vadd.f32 %v2093, %v2296
        %v2303 = vadd.f32 %v2096, %v2299
        %s2304 = scalar_lea.vmem %s5, 168
        %v2305 = vld [vmem:[%s2304] sm:$0xf]
        %v2306 = vld [vmem:[%s2304 + $0x4] sm:$0xf]
        %v2307 = vld [vmem:[%s2304 + $0x8] sm:$0xf]
        %v2308 = vld [vmem:[%s2304 + $0xc] sm:$0xf]
        %v2309 = vld [vmem:[%s2304 + $0x10] sm:$0xf]
        %v2310 = vld [vmem:[%s2304 + $0x14] sm:$0xf]
        %v2311 = vld [vmem:[%s2304 + $0x18] sm:$0xf]
        %v2312 = vld [vmem:[%s2304 + $0x1c] sm:$0xf]
        %v2313 = vld [vmem:[%s2304 + $0x20] sm:$0xf]
        %v2314 = vld [vmem:[%s2304 + $0x24] sm:$0xf]
        %v2315 = vld [vmem:[%s2304 + $0x28] sm:$0xf]
        %v2316 = vld [vmem:[%s2304 + $0x2c] sm:$0xf]
        %v2317 = vld [vmem:[%s2304 + $0x30] sm:$0xf]
        %v2318 = vld [vmem:[%s2304 + $0x34] sm:$0xf]
        %v2319 = vrot.slane %v1740, 1
        %v2320 = vrot.slane %v1742, 2
        %v2321 = vor.u32 %v2319, %v2320
        %v2336 = vunpack.c.l.b16 %v2305
        %v2337 = vunpack.c.l.b16 %v2306
        %v2338 = vunpack.c.l.b16 %v2307
        %v2339 = vunpack.c.l.b16 %v2308
        %v2340 = vunpack.c.l.b16 %v2309
        %v2341 = vunpack.c.l.b16 %v2310
        %v2342 = vunpack.c.l.b16 %v2311
        %v2343 = vunpack.c.l.b16 %v2312
        %v2344 = vunpack.c.l.b16 %v2313
        %v2345 = vunpack.c.l.b16 %v2314
        %v2346 = vunpack.c.l.b16 %v2315
        %v2347 = vunpack.c.l.b16 %v2316
        %v2348 = vunpack.c.l.b16 %v2317
        %v2349 = vunpack.c.l.b16 %v2318
        %v2350 = vpack.c.b16 %v2337, %v2336
        %v2351 = vpack.c.b16 %v2339, %v2338
        %v2352 = vpack.c.b16 %v2341, %v2340
        %v2353 = vpack.c.b16 %v2343, %v2342
        %v2354 = vpack.c.b16 %v2345, %v2344
        %v2355 = vpack.c.b16 %v2347, %v2346
        %v2356 = vpack.c.b16 %v2349, %v2348
        %v2365 = vsel %vm1788, %v2321, 0
        %2367 = vmatprep.subr.bf16.mxu0 0
        %2368 = vmatpush1.bf16.msra.mxu0 %v2350
        %2369 = vmatprep.subr.bf16.mxu0 0
        %2370 = vmatpush1.bf16.msra.mxu0 %v2351
        %2371 = vmatprep.subr.bf16.mxu0 0
        %2372 = vmatpush1.bf16.msra.mxu0 %v2352
        %2373 = vmatprep.subr.bf16.mxu0 0
        %2374 = vmatpush1.bf16.msra.mxu0 %v2353
        %2375 = vmatprep.subr.bf16.mxu0 0
        %2376 = vmatpush1.bf16.msra.mxu0 %v2354
        %2377 = vmatprep.subr.bf16.mxu0 0
        %2378 = vmatpush1.bf16.msra.mxu0 %v2355
        %2379 = vmatprep.subr.bf16.mxu0 0
        %2380 = vmatpush1.bf16.msra.mxu0 %v2356
        %2381 = vmatprep.subr.bf16.mxu0 0
        %2382 = vmatpush1.bf16.msra.mxu0 0
        %2383 = vmatprep.subr.bf16.mxu0 0
        %2384 = vmatpush1.bf16.msra.mxu0 0
        %2385 = vmatprep.subr.bf16.mxu0 0
        %2386 = vmatpush1.bf16.msra.mxu0 0
        %2387 = vmatprep.subr.bf16.mxu0 0
        %2388 = vmatpush1.bf16.msra.mxu0 0
        %2389 = vmatprep.subr.bf16.mxu0 0
        %2390 = vmatpush1.bf16.msra.mxu0 0
        %2391 = vmatprep.subr.bf16.mxu0 0
        %2392 = vmatpush1.bf16.msra.mxu0 0
        %2393 = vmatprep.subr.bf16.mxu0 0
        %2394 = vmatpush1.bf16.msra.mxu0 0
        %2395 = vmatprep.subr.bf16.mxu0 0
        %2396 = vmatpush1.bf16.msra.mxu0 0
        %2397 = vmatprep.subr.bf16.mxu0 0
        %2398 = vmatpush1.bf16.msra.mxu0 0
        %2399 = vmatprep.mubr.bf16.mxu0 0
        %2400 = vmatmul.mubr.bf16.gmra.mrb[0].mxu0 %v2365
        %v2401 = vpop.f32.mrb[0].mxu0
        %v2402 = vadd.f32 0.0, %v2401
        %v2403 = vpop.f32.mrb[0].mxu0
        %v2404 = vpop.f32.mrb[0].mxu0
        %v2405 = vadd.f32 0.0, %v2404
        %v2406 = vpop.f32.mrb[0].mxu0
        %2407 = vdwg.mxu0
        %v2408 = vadd.f32 %v2202, %v2402
        %v2409 = vadd.f32 %v2203, %v2405
        %s2410 = scalar_lea.vmem %s6, 168
        %v2411 = vld [vmem:[%s2410] sm:$0xf]
        %v2412 = vld [vmem:[%s2410 + $0x4] sm:$0xf]
        %v2413 = vld [vmem:[%s2410 + $0x8] sm:$0xf]
        %v2414 = vld [vmem:[%s2410 + $0xc] sm:$0xf]
        %v2415 = vld [vmem:[%s2410 + $0x10] sm:$0xf]
        %v2416 = vld [vmem:[%s2410 + $0x14] sm:$0xf]
        %v2417 = vld [vmem:[%s2410 + $0x18] sm:$0xf]
        %v2418 = vld [vmem:[%s2410 + $0x1c] sm:$0xf]
        %v2419 = vld [vmem:[%s2410 + $0x20] sm:$0xf]
        %v2420 = vld [vmem:[%s2410 + $0x24] sm:$0xf]
        %v2421 = vld [vmem:[%s2410 + $0x28] sm:$0xf]
        %v2422 = vld [vmem:[%s2410 + $0x2c] sm:$0xf]
        %v2423 = vld [vmem:[%s2410 + $0x30] sm:$0xf]
        %v2424 = vld [vmem:[%s2410 + $0x34] sm:$0xf]
        %v2439 = vunpack.c.l.b16 %v2411
        %v2440 = vunpack.c.l.b16 %v2412
        %v2441 = vunpack.c.l.b16 %v2413
        %v2442 = vunpack.c.l.b16 %v2414
        %v2443 = vunpack.c.l.b16 %v2415
        %v2444 = vunpack.c.l.b16 %v2416
        %v2445 = vunpack.c.l.b16 %v2417
        %v2446 = vunpack.c.l.b16 %v2418
        %v2447 = vunpack.c.l.b16 %v2419
        %v2448 = vunpack.c.l.b16 %v2420
        %v2449 = vunpack.c.l.b16 %v2421
        %v2450 = vunpack.c.l.b16 %v2422
        %v2451 = vunpack.c.l.b16 %v2423
        %v2452 = vunpack.c.l.b16 %v2424
        %v2453 = vpack.c.b16 %v2440, %v2439
        %v2454 = vpack.c.b16 %v2442, %v2441
        %v2455 = vpack.c.b16 %v2444, %v2443
        %v2456 = vpack.c.b16 %v2446, %v2445
        %v2457 = vpack.c.b16 %v2448, %v2447
        %v2458 = vpack.c.b16 %v2450, %v2449
        %v2459 = vpack.c.b16 %v2452, %v2451
        %2467 = vmatprep.subr.bf16.mxu0 0
        %2468 = vmatpush1.bf16.msra.mxu0 %v2453
        %2469 = vmatprep.subr.bf16.mxu0 0
        %2470 = vmatpush1.bf16.msra.mxu0 %v2454
        %2471 = vmatprep.subr.bf16.mxu0 0
        %2472 = vmatpush1.bf16.msra.mxu0 %v2455
        %2473 = vmatprep.subr.bf16.mxu0 0
        %2474 = vmatpush1.bf16.msra.mxu0 %v2456
        %2475 = vmatprep.subr.bf16.mxu0 0
        %2476 = vmatpush1.bf16.msra.mxu0 %v2457
        %2477 = vmatprep.subr.bf16.mxu0 0
        %2478 = vmatpush1.bf16.msra.mxu0 %v2458
        %2479 = vmatprep.subr.bf16.mxu0 0
        %2480 = vmatpush1.bf16.msra.mxu0 %v2459
        %2481 = vmatprep.subr.bf16.mxu0 0
        %2482 = vmatpush1.bf16.msra.mxu0 0
        %2483 = vmatprep.subr.bf16.mxu0 0
        %2484 = vmatpush1.bf16.msra.mxu0 0
        %2485 = vmatprep.subr.bf16.mxu0 0
        %2486 = vmatpush1.bf16.msra.mxu0 0
        %2487 = vmatprep.subr.bf16.mxu0 0
        %2488 = vmatpush1.bf16.msra.mxu0 0
        %2489 = vmatprep.subr.bf16.mxu0 0
        %2490 = vmatpush1.bf16.msra.mxu0 0
        %2491 = vmatprep.subr.bf16.mxu0 0
        %2492 = vmatpush1.bf16.msra.mxu0 0
        %2493 = vmatprep.subr.bf16.mxu0 0
        %2494 = vmatpush1.bf16.msra.mxu0 0
        %2495 = vmatprep.subr.bf16.mxu0 0
        %2496 = vmatpush1.bf16.msra.mxu0 0
        %2497 = vmatprep.subr.bf16.mxu0 0
        %2498 = vmatpush1.bf16.msra.mxu0 0
        %2499 = vmatprep.mubr.bf16.mxu0 0
        %2500 = vmatmul.mubr.bf16.gmra.mrb[0].mxu0 %v2365
        %v2501 = vpop.f32.mrb[0].mxu0
        %v2502 = vadd.f32 0.0, %v2501
        %v2503 = vpop.f32.mrb[0].mxu0
        %v2504 = vpop.f32.mrb[0].mxu0
        %v2505 = vadd.f32 0.0, %v2504
        %v2506 = vpop.f32.mrb[0].mxu0
        %2507 = vdwg.mxu0
        %v2508 = vadd.f32 %v2302, %v2502
        %v2509 = vadd.f32 %v2303, %v2505
        %s2510 = scalar_lea.vmem %s5, 224
        %v2511 = vld [vmem:[%s2510] sm:$0xf]
        %v2512 = vld [vmem:[%s2510 + $0x4] sm:$0xf]
        %v2513 = vld [vmem:[%s2510 + $0x8] sm:$0xf]
        %v2514 = vld [vmem:[%s2510 + $0xc] sm:$0xf]
        %v2515 = vld [vmem:[%s2510 + $0x10] sm:$0xf]
        %v2516 = vld [vmem:[%s2510 + $0x14] sm:$0xf]
        %v2517 = vld [vmem:[%s2510 + $0x18] sm:$0xf]
        %v2518 = vld [vmem:[%s2510 + $0x1c] sm:$0xf]
        %v2519 = vld [vmem:[%s2510 + $0x20] sm:$0xf]
        %v2520 = vld [vmem:[%s2510 + $0x24] sm:$0xf]
        %v2521 = vld [vmem:[%s2510 + $0x28] sm:$0xf]
        %v2522 = vld [vmem:[%s2510 + $0x2c] sm:$0xf]
        %v2523 = vld [vmem:[%s2510 + $0x30] sm:$0xf]
        %v2524 = vld [vmem:[%s2510 + $0x34] sm:$0xf]
        %v2525 = vrot.slane %v1695, 2
        %v2540 = vunpack.c.l.b16 %v2511
        %v2541 = vunpack.c.l.b16 %v2512
        %v2542 = vunpack.c.l.b16 %v2513
        %v2543 = vunpack.c.l.b16 %v2514
        %v2544 = vunpack.c.l.b16 %v2515
        %v2545 = vunpack.c.l.b16 %v2516
        %v2546 = vunpack.c.l.b16 %v2517
        %v2547 = vunpack.c.l.b16 %v2518
        %v2548 = vunpack.c.l.b16 %v2519
        %v2549 = vunpack.c.l.b16 %v2520
        %v2550 = vunpack.c.l.b16 %v2521
        %v2551 = vunpack.c.l.b16 %v2522
        %v2552 = vunpack.c.l.b16 %v2523
        %v2553 = vunpack.c.l.b16 %v2524
        %v2554 = vpack.c.b16 %v2541, %v2540
        %v2555 = vpack.c.b16 %v2543, %v2542
        %v2556 = vpack.c.b16 %v2545, %v2544
        %v2557 = vpack.c.b16 %v2547, %v2546
        %v2558 = vpack.c.b16 %v2549, %v2548
        %v2559 = vpack.c.b16 %v2551, %v2550
        %v2560 = vpack.c.b16 %v2553, %v2552
        %v2569 = vsel %vm1788, %v2525, 0
        %2571 = vmatprep.subr.bf16.mxu0 0
        %2572 = vmatpush1.bf16.msra.mxu0 %v2554
        %2573 = vmatprep.subr.bf16.mxu0 0
        %2574 = vmatpush1.bf16.msra.mxu0 %v2555
        %2575 = vmatprep.subr.bf16.mxu0 0
        %2576 = vmatpush1.bf16.msra.mxu0 %v2556
        %2577 = vmatprep.subr.bf16.mxu0 0
        %2578 = vmatpush1.bf16.msra.mxu0 %v2557
        %2579 = vmatprep.subr.bf16.mxu0 0
        %2580 = vmatpush1.bf16.msra.mxu0 %v2558
        %2581 = vmatprep.subr.bf16.mxu0 0
        %2582 = vmatpush1.bf16.msra.mxu0 %v2559
        %2583 = vmatprep.subr.bf16.mxu0 0
        %2584 = vmatpush1.bf16.msra.mxu0 %v2560
        %2585 = vmatprep.subr.bf16.mxu0 0
        %2586 = vmatpush1.bf16.msra.mxu0 0
        %2587 = vmatprep.subr.bf16.mxu0 0
        %2588 = vmatpush1.bf16.msra.mxu0 0
        %2589 = vmatprep.subr.bf16.mxu0 0
        %2590 = vmatpush1.bf16.msra.mxu0 0
        %2591 = vmatprep.subr.bf16.mxu0 0
        %2592 = vmatpush1.bf16.msra.mxu0 0
        %2593 = vmatprep.subr.bf16.mxu0 0
        %2594 = vmatpush1.bf16.msra.mxu0 0
        %2595 = vmatprep.subr.bf16.mxu0 0
        %2596 = vmatpush1.bf16.msra.mxu0 0
        %2597 = vmatprep.subr.bf16.mxu0 0
        %2598 = vmatpush1.bf16.msra.mxu0 0
        %2599 = vmatprep.subr.bf16.mxu0 0
        %2600 = vmatpush1.bf16.msra.mxu0 0
        %2601 = vmatprep.subr.bf16.mxu0 0
        %2602 = vmatpush1.bf16.msra.mxu0 0
        %2603 = vmatprep.mubr.bf16.mxu0 0
        %2604 = vmatmul.mubr.bf16.gmra.mrb[0].mxu0 %v2569
        %v2605 = vpop.f32.mrb[0].mxu0
        %v2606 = vadd.f32 0.0, %v2605
        %v2607 = vpop.f32.mrb[0].mxu0
        %v2608 = vpop.f32.mrb[0].mxu0
        %v2609 = vadd.f32 0.0, %v2608
        %v2610 = vpop.f32.mrb[0].mxu0
        %2611 = vdwg.mxu0
        %v2612 = vadd.f32 %v2408, %v2606
        %v2613 = vadd.f32 %v2409, %v2609
        %s2614 = scalar_lea.vmem %s6, 224
        %v2615 = vld [vmem:[%s2614] sm:$0xf]
        %v2616 = vld [vmem:[%s2614 + $0x4] sm:$0xf]
        %v2617 = vld [vmem:[%s2614 + $0x8] sm:$0xf]
        %v2618 = vld [vmem:[%s2614 + $0xc] sm:$0xf]
        %v2619 = vld [vmem:[%s2614 + $0x10] sm:$0xf]
        %v2620 = vld [vmem:[%s2614 + $0x14] sm:$0xf]
        %v2621 = vld [vmem:[%s2614 + $0x18] sm:$0xf]
        %v2622 = vld [vmem:[%s2614 + $0x1c] sm:$0xf]
        %v2623 = vld [vmem:[%s2614 + $0x20] sm:$0xf]
        %v2624 = vld [vmem:[%s2614 + $0x24] sm:$0xf]
        %v2625 = vld [vmem:[%s2614 + $0x28] sm:$0xf]
        %v2626 = vld [vmem:[%s2614 + $0x2c] sm:$0xf]
        %v2627 = vld [vmem:[%s2614 + $0x30] sm:$0xf]
        %v2628 = vld [vmem:[%s2614 + $0x34] sm:$0xf]
        %v2643 = vunpack.c.l.b16 %v2615
        %v2644 = vunpack.c.l.b16 %v2616
        %v2645 = vunpack.c.l.b16 %v2617
        %v2646 = vunpack.c.l.b16 %v2618
        %v2647 = vunpack.c.l.b16 %v2619
        %v2648 = vunpack.c.l.b16 %v2620
        %v2649 = vunpack.c.l.b16 %v2621
        %v2650 = vunpack.c.l.b16 %v2622
        %v2651 = vunpack.c.l.b16 %v2623
        %v2652 = vunpack.c.l.b16 %v2624
        %v2653 = vunpack.c.l.b16 %v2625
        %v2654 = vunpack.c.l.b16 %v2626
        %v2655 = vunpack.c.l.b16 %v2627
        %v2656 = vunpack.c.l.b16 %v2628
        %v2657 = vpack.c.b16 %v2644, %v2643
        %v2658 = vpack.c.b16 %v2646, %v2645
        %v2659 = vpack.c.b16 %v2648, %v2647
        %v2660 = vpack.c.b16 %v2650, %v2649
        %v2661 = vpack.c.b16 %v2652, %v2651
        %v2662 = vpack.c.b16 %v2654, %v2653
        %v2663 = vpack.c.b16 %v2656, %v2655
        %2671 = vmatprep.subr.bf16.mxu0 0
        %2672 = vmatpush1.bf16.msra.mxu0 %v2657
        %2673 = vmatprep.subr.bf16.mxu0 0
        %2674 = vmatpush1.bf16.msra.mxu0 %v2658
        %2675 = vmatprep.subr.bf16.mxu0 0
        %2676 = vmatpush1.bf16.msra.mxu0 %v2659
        %2677 = vmatprep.subr.bf16.mxu0 0
        %2678 = vmatpush1.bf16.msra.mxu0 %v2660
        %2679 = vmatprep.subr.bf16.mxu0 0
        %2680 = vmatpush1.bf16.msra.mxu0 %v2661
        %2681 = vmatprep.subr.bf16.mxu0 0
        %2682 = vmatpush1.bf16.msra.mxu0 %v2662
        %2683 = vmatprep.subr.bf16.mxu0 0
        %2684 = vmatpush1.bf16.msra.mxu0 %v2663
        %2685 = vmatprep.subr.bf16.mxu0 0
        %2686 = vmatpush1.bf16.msra.mxu0 0
        %2687 = vmatprep.subr.bf16.mxu0 0
        %2688 = vmatpush1.bf16.msra.mxu0 0
        %2689 = vmatprep.subr.bf16.mxu0 0
        %2690 = vmatpush1.bf16.msra.mxu0 0
        %2691 = vmatprep.subr.bf16.mxu0 0
        %2692 = vmatpush1.bf16.msra.mxu0 0
        %2693 = vmatprep.subr.bf16.mxu0 0
        %2694 = vmatpush1.bf16.msra.mxu0 0
        %2695 = vmatprep.subr.bf16.mxu0 0
        %2696 = vmatpush1.bf16.msra.mxu0 0
        %2697 = vmatprep.subr.bf16.mxu0 0
        %2698 = vmatpush1.bf16.msra.mxu0 0
        %2699 = vmatprep.subr.bf16.mxu0 0
        %2700 = vmatpush1.bf16.msra.mxu0 0
        %2701 = vmatprep.subr.bf16.mxu0 0
        %2702 = vmatpush1.bf16.msra.mxu0 0
        %2703 = vmatprep.mubr.bf16.mxu0 0
        %2704 = vmatmul.mubr.bf16.gmra.mrb[0].mxu0 %v2569
        %v2705 = vpop.f32.mrb[0].mxu0
        %v2706 = vadd.f32 0.0, %v2705
        %v2707 = vpop.f32.mrb[0].mxu0
        %v2708 = vpop.f32.mrb[0].mxu0
        %v2709 = vadd.f32 0.0, %v2708
        %v2710 = vpop.f32.mrb[0].mxu0
        %2711 = vdwg.mxu0
        %v2712 = vadd.f32 %v2508, %v2706
        %v2713 = vadd.f32 %v2509, %v2709
        %v2714 = vmax.f32 %v2612, %v2712
        %v2715 = vmax.f32 %v2613, %v2713
        %v2716 = vld [vmem:[%s7] sm:$0x1]
        %v2718 = vlaneseq
        %v2719 = vshrl.u32 %v2718, 7
        %v2720 = vsub.s32 0, %v2719
        %v2721 = vrot.slane %v2716, %v2720
        %v2723 = vadd.f32 %v2714, %v2721
        %v2724 = vadd.f32 %v2715, %v2721
        %v2725 = vmax.f32 %v2723, 0.0
        %v2726 = vmax.f32 %v2724, 0.0
        %v2727 = vpack.c.bf16 %v2726, %v2725
        %v2728 = vld [vmem:[%s8] sm:$0x7]
        %vm2729 = vcmask 80896
        %v2731 = vsel %vm2729, %v2728, 0
        %vm2733 = vcmask 1044480
        %v2735 = vsel %vm2733, %v2727, 0
        %2737 = vmatprep.subr.bf16.mxu0 0
        %2738 = vmatpush1.bf16.msra.mxu0 %v2735
        %2739 = vmatprep.subr.bf16.mxu0 0
        %2740 = vmatpush1.bf16.msra.mxu0 0
        %2741 = vmatprep.subr.bf16.mxu0 0
        %2742 = vmatpush1.bf16.msra.mxu0 0
        %2743 = vmatprep.subr.bf16.mxu0 0
        %2744 = vmatpush1.bf16.msra.mxu0 0
        %2745 = vmatprep.subr.bf16.mxu0 0
        %2746 = vmatpush1.bf16.msra.mxu0 0
        %2747 = vmatprep.subr.bf16.mxu0 0
        %2748 = vmatpush1.bf16.msra.mxu0 0
        %2749 = vmatprep.subr.bf16.mxu0 0
        %2750 = vmatpush1.bf16.msra.mxu0 0
        %2751 = vmatprep.subr.bf16.mxu0 0
        %2752 = vmatpush1.bf16.msra.mxu0 0
        %2753 = vmatprep.subr.bf16.mxu0 0
        %2754 = vmatpush1.bf16.msra.mxu0 0
        %2755 = vmatprep.subr.bf16.mxu0 0
        %2756 = vmatpush1.bf16.msra.mxu0 0
        %2757 = vmatprep.subr.bf16.mxu0 0
        %2758 = vmatpush1.bf16.msra.mxu0 0
        %2759 = vmatprep.subr.bf16.mxu0 0
        %2760 = vmatpush1.bf16.msra.mxu0 0
        %2761 = vmatprep.subr.bf16.mxu0 0
        %2762 = vmatpush1.bf16.msra.mxu0 0
        %2763 = vmatprep.subr.bf16.mxu0 0
        %2764 = vmatpush1.bf16.msra.mxu0 0
        %2765 = vmatprep.subr.bf16.mxu0 0
        %2766 = vmatpush1.bf16.msra.mxu0 0
        %2767 = vmatprep.subr.bf16.mxu0 0
        %2768 = vmatpush1.bf16.msra.mxu0 0
        %2769 = vmatprep.mubr.bf16.mxu0 0
        %2770 = vmatmul.mubr.bf16.gmra.mrb[0].mxu0 %v2731
        %v2771 = vpop.f32.mrb[0].mxu0
        %v2772 = vadd.f32 0.0, %v2771
        %v2773 = vpop.f32.mrb[0].mxu0
        %v2774 = vpop.f32.mrb[0].mxu0
        %v2775 = vpop.f32.mrb[0].mxu0
        %2776 = vdwg.mxu0
        %s2777 = scalar_lea.vmem %s8, 4
        %v2778 = vld [vmem:[%s2777] sm:$0x7]
        %v2780 = vsel %vm2729, %v2778, 0
        %2782 = vmatprep.subr.bf16.mxu0 0
        %2783 = vmatpush1.bf16.msra.mxu0 %v2735
        %2784 = vmatprep.subr.bf16.mxu0 0
        %2785 = vmatpush1.bf16.msra.mxu0 0
        %2786 = vmatprep.subr.bf16.mxu0 0
        %2787 = vmatpush1.bf16.msra.mxu0 0
        %2788 = vmatprep.subr.bf16.mxu0 0
        %2789 = vmatpush1.bf16.msra.mxu0 0
        %2790 = vmatprep.subr.bf16.mxu0 0
        %2791 = vmatpush1.bf16.msra.mxu0 0
        %2792 = vmatprep.subr.bf16.mxu0 0
        %2793 = vmatpush1.bf16.msra.mxu0 0
        %2794 = vmatprep.subr.bf16.mxu0 0
        %2795 = vmatpush1.bf16.msra.mxu0 0
        %2796 = vmatprep.subr.bf16.mxu0 0
        %2797 = vmatpush1.bf16.msra.mxu0 0
        %2798 = vmatprep.subr.bf16.mxu0 0
        %2799 = vmatpush1.bf16.msra.mxu0 0
        %2800 = vmatprep.subr.bf16.mxu0 0
        %2801 = vmatpush1.bf16.msra.mxu0 0
        %2802 = vmatprep.subr.bf16.mxu0 0
        %2803 = vmatpush1.bf16.msra.mxu0 0
        %2804 = vmatprep.subr.bf16.mxu0 0
        %2805 = vmatpush1.bf16.msra.mxu0 0
        %2806 = vmatprep.subr.bf16.mxu0 0
        %2807 = vmatpush1.bf16.msra.mxu0 0
        %2808 = vmatprep.subr.bf16.mxu0 0
        %2809 = vmatpush1.bf16.msra.mxu0 0
        %2810 = vmatprep.subr.bf16.mxu0 0
        %2811 = vmatpush1.bf16.msra.mxu0 0
        %2812 = vmatprep.subr.bf16.mxu0 0
        %2813 = vmatpush1.bf16.msra.mxu0 0
        %2814 = vmatprep.mubr.bf16.mxu0 0
        %2815 = vmatmul.mubr.bf16.gmra.mrb[0].mxu0 %v2780
        %v2816 = vpop.f32.mrb[0].mxu0
        %v2817 = vadd.f32 0.0, %v2816
        %v2818 = vpop.f32.mrb[0].mxu0
        %v2819 = vpop.f32.mrb[0].mxu0
        %v2820 = vpop.f32.mrb[0].mxu0
        %2821 = vdwg.mxu0
        %v2822 = vmax.f32 %v2772, %v2817
        %v2823 = vpack.c.bf16 %v2822, %v2822
        %v2824 = vld [vmem:[%s9] sm:$0xf]
        %v2825 = vld [vmem:[%s9 + $0x4] sm:$0xf]
        %v2826 = vld [vmem:[%s9 + $0x8] sm:$0xf]
        %v2827 = vld [vmem:[%s9 + $0xc] sm:$0xf]
        %v2828 = vld [vmem:[%s9 + $0x10] sm:$0xf]
        %v2829 = vld [vmem:[%s9 + $0x14] sm:$0xf]
        %v2830 = vld [vmem:[%s9 + $0x18] sm:$0xf]
        %v2831 = vld [vmem:[%s9 + $0x1c] sm:$0xf]
        %v2832 = vld [vmem:[%s9 + $0x20] sm:$0xf]
        %v2833 = vld [vmem:[%s9 + $0x24] sm:$0xf]
        %s2834 = scalar_lea.vmem %s9, 40
        %v2835 = vld [vmem:[%s2834] sm:$0xf]
        %v2836 = vld [vmem:[%s2834 + $0x4] sm:$0xf]
        %v2837 = vld [vmem:[%s2834 + $0x8] sm:$0xf]
        %v2838 = vld [vmem:[%s2834 + $0xc] sm:$0xf]
        %v2839 = vld [vmem:[%s2834 + $0x10] sm:$0xf]
        %v2840 = vld [vmem:[%s2834 + $0x14] sm:$0xf]
        %v2841 = vld [vmem:[%s2834 + $0x18] sm:$0xf]
        %v2842 = vld [vmem:[%s2834 + $0x1c] sm:$0xf]
        %v2843 = vld [vmem:[%s2834 + $0x20] sm:$0xf]
        %v2844 = vld [vmem:[%s2834 + $0x24] sm:$0xf]
        %v2846 = vshrl.u32 %v2823, 16
        %v2858 = vunpack.c.l.b16 %v2835
        %v2859 = vunpack.c.l.b16 %v2836
        %v2860 = vunpack.c.l.b16 %v2837
        %v2861 = vunpack.c.l.b16 %v2838
        %v2862 = vunpack.c.l.b16 %v2839
        %v2863 = vunpack.c.l.b16 %v2840
        %v2864 = vunpack.c.l.b16 %v2841
        %v2865 = vunpack.c.l.b16 %v2842
        %v2866 = vunpack.c.l.b16 %v2843
        %v2867 = vunpack.c.l.b16 %v2844
        %v2868 = vpack.c.b16 %v2859, %v2858
        %v2869 = vpack.c.b16 %v2861, %v2860
        %v2870 = vpack.c.b16 %v2863, %v2862
        %v2871 = vpack.c.b16 %v2865, %v2864
        %v2872 = vpack.c.b16 %v2867, %v2866
        %vm2878 = vcmask 654336
        %v2880 = vsel %vm2878, %v2846, 0
        %2882 = vmatprep.subr.bf16.mxu0 0
        %2883 = vmatpush1.bf16.msra.mxu0 %v2868
        %2884 = vmatprep.subr.bf16.mxu0 0
        %2885 = vmatpush1.bf16.msra.mxu0 %v2869
        %2886 = vmatprep.subr.bf16.mxu0 0
        %2887 = vmatpush1.bf16.msra.mxu0 %v2870
        %2888 = vmatprep.subr.bf16.mxu0 0
        %2889 = vmatpush1.bf16.msra.mxu0 %v2871
        %2890 = vmatprep.subr.bf16.mxu0 0
        %2891 = vmatpush1.bf16.msra.mxu0 %v2872
        %2892 = vmatprep.subr.bf16.mxu0 0
        %2893 = vmatpush1.bf16.msra.mxu0 0
        %2894 = vmatprep.subr.bf16.mxu0 0
        %2895 = vmatpush1.bf16.msra.mxu0 0
        %2896 = vmatprep.subr.bf16.mxu0 0
        %2897 = vmatpush1.bf16.msra.mxu0 0
        %2898 = vmatprep.subr.bf16.mxu0 0
        %2899 = vmatpush1.bf16.msra.mxu0 0
        %2900 = vmatprep.subr.bf16.mxu0 0
        %2901 = vmatpush1.bf16.msra.mxu0 0
        %2902 = vmatprep.subr.bf16.mxu0 0
        %2903 = vmatpush1.bf16.msra.mxu0 0
        %2904 = vmatprep.subr.bf16.mxu0 0
        %2905 = vmatpush1.bf16.msra.mxu0 0
        %2906 = vmatprep.subr.bf16.mxu0 0
        %2907 = vmatpush1.bf16.msra.mxu0 0
        %2908 = vmatprep.subr.bf16.mxu0 0
        %2909 = vmatpush1.bf16.msra.mxu0 0
        %2910 = vmatprep.subr.bf16.mxu0 0
        %2911 = vmatpush1.bf16.msra.mxu0 0
        %2912 = vmatprep.subr.bf16.mxu0 0
        %2913 = vmatpush1.bf16.msra.mxu0 0
        %2914 = vmatprep.mubr.bf16.mxu0 0
        %2915 = vmatmul.mubr.bf16.gmra.mrb[0].mxu0 %v2880
        %v2916 = vpop.f32.mrb[0].mxu0
        %v2917 = vadd.f32 0.0, %v2916
        %v2918 = vpop.f32.mrb[0].mxu0
        %v2919 = vpop.f32.mrb[0].mxu0
        %v2920 = vpop.f32.mrb[0].mxu0
        %2921 = vdwg.mxu0
        %v2932 = vunpack.c.l.b16 %v2824
        %v2933 = vunpack.c.l.b16 %v2825
        %v2934 = vunpack.c.l.b16 %v2826
        %v2935 = vunpack.c.l.b16 %v2827
        %v2936 = vunpack.c.l.b16 %v2828
        %v2937 = vunpack.c.l.b16 %v2829
        %v2938 = vunpack.c.l.b16 %v2830
        %v2939 = vunpack.c.l.b16 %v2831
        %v2940 = vunpack.c.l.b16 %v2832
        %v2941 = vunpack.c.l.b16 %v2833
        %v2942 = vpack.c.b16 %v2933, %v2932
        %v2943 = vpack.c.b16 %v2935, %v2934
        %v2944 = vpack.c.b16 %v2937, %v2936
        %v2945 = vpack.c.b16 %v2939, %v2938
        %v2946 = vpack.c.b16 %v2941, %v2940
        %v2952 = vsel %vm2878, %v2823, 0
        %2954 = vmatprep.subr.bf16.mxu0 0
        %2955 = vmatpush1.bf16.msra.mxu0 %v2942
        %2956 = vmatprep.subr.bf16.mxu0 0
        %2957 = vmatpush1.bf16.msra.mxu0 %v2943
        %2958 = vmatprep.subr.bf16.mxu0 0
        %2959 = vmatpush1.bf16.msra.mxu0 %v2944
        %2960 = vmatprep.subr.bf16.mxu0 0
        %2961 = vmatpush1.bf16.msra.mxu0 %v2945
        %2962 = vmatprep.subr.bf16.mxu0 0
        %2963 = vmatpush1.bf16.msra.mxu0 %v2946
        %2964 = vmatprep.subr.bf16.mxu0 0
        %2965 = vmatpush1.bf16.msra.mxu0 0
        %2966 = vmatprep.subr.bf16.mxu0 0
        %2967 = vmatpush1.bf16.msra.mxu0 0
        %2968 = vmatprep.subr.bf16.mxu0 0
        %2969 = vmatpush1.bf16.msra.mxu0 0
        %2970 = vmatprep.subr.bf16.mxu0 0
        %2971 = vmatpush1.bf16.msra.mxu0 0
        %2972 = vmatprep.subr.bf16.mxu0 0
        %2973 = vmatpush1.bf16.msra.mxu0 0
        %2974 = vmatprep.subr.bf16.mxu0 0
        %2975 = vmatpush1.bf16.msra.mxu0 0
        %2976 = vmatprep.subr.bf16.mxu0 0
        %2977 = vmatpush1.bf16.msra.mxu0 0
        %2978 = vmatprep.subr.bf16.mxu0 0
        %2979 = vmatpush1.bf16.msra.mxu0 0
        %2980 = vmatprep.subr.bf16.mxu0 0
        %2981 = vmatpush1.bf16.msra.mxu0 0
        %2982 = vmatprep.subr.bf16.mxu0 0
        %2983 = vmatpush1.bf16.msra.mxu0 0
        %2984 = vmatprep.subr.bf16.mxu0 0
        %2985 = vmatpush1.bf16.msra.mxu0 0
        %2986 = vmatprep.mubr.bf16.mxu0 0
        %2987 = vmatmul.mubr.bf16.gmra.mrb[0].mxu0 %v2952
        %v2988 = vpop.f32.mrb[0].mxu0
        %v2989 = vadd.f32 %v2917, %v2988
        %v2990 = vpop.f32.mrb[0].mxu0
        %v2991 = vpop.f32.mrb[0].mxu0
        %v2992 = vpop.f32.mrb[0].mxu0
        %2993 = vdwg.mxu0
        %s2994 = scalar_lea.vmem %s9, 80
        %v2995 = vld [vmem:[%s2994] sm:$0xf]
        %v2996 = vld [vmem:[%s2994 + $0x4] sm:$0xf]
        %v2997 = vld [vmem:[%s2994 + $0x8] sm:$0xf]
        %v2998 = vld [vmem:[%s2994 + $0xc] sm:$0xf]
        %v2999 = vld [vmem:[%s2994 + $0x10] sm:$0xf]
        %v3000 = vld [vmem:[%s2994 + $0x14] sm:$0xf]
        %v3001 = vld [vmem:[%s2994 + $0x18] sm:$0xf]
        %v3002 = vld [vmem:[%s2994 + $0x1c] sm:$0xf]
        %v3003 = vld [vmem:[%s2994 + $0x20] sm:$0xf]
        %v3004 = vld [vmem:[%s2994 + $0x24] sm:$0xf]
        %v3006 = vrot.slane %v2823, 1
        %v3017 = vunpack.c.l.b16 %v2995
        %v3018 = vunpack.c.l.b16 %v2996
        %v3019 = vunpack.c.l.b16 %v2997
        %v3020 = vunpack.c.l.b16 %v2998
        %v3021 = vunpack.c.l.b16 %v2999
        %v3022 = vunpack.c.l.b16 %v3000
        %v3023 = vunpack.c.l.b16 %v3001
        %v3024 = vunpack.c.l.b16 %v3002
        %v3025 = vunpack.c.l.b16 %v3003
        %v3026 = vunpack.c.l.b16 %v3004
        %v3027 = vpack.c.b16 %v3018, %v3017
        %v3028 = vpack.c.b16 %v3020, %v3019
        %v3029 = vpack.c.b16 %v3022, %v3021
        %v3030 = vpack.c.b16 %v3024, %v3023
        %v3031 = vpack.c.b16 %v3026, %v3025
        %v3038 = vsel %vm2878, %v3006, 0
        %3040 = vmatprep.subr.bf16.mxu0 0
        %3041 = vmatpush1.bf16.msra.mxu0 %v3027
        %3042 = vmatprep.subr.bf16.mxu0 0
        %3043 = vmatpush1.bf16.msra.mxu0 %v3028
        %3044 = vmatprep.subr.bf16.mxu0 0
        %3045 = vmatpush1.bf16.msra.mxu0 %v3029
        %3046 = vmatprep.subr.bf16.mxu0 0
        %3047 = vmatpush1.bf16.msra.mxu0 %v3030
        %3048 = vmatprep.subr.bf16.mxu0 0
        %3049 = vmatpush1.bf16.msra.mxu0 %v3031
        %3050 = vmatprep.subr.bf16.mxu0 0
        %3051 = vmatpush1.bf16.msra.mxu0 0
        %3052 = vmatprep.subr.bf16.mxu0 0
        %3053 = vmatpush1.bf16.msra.mxu0 0
        %3054 = vmatprep.subr.bf16.mxu0 0
        %3055 = vmatpush1.bf16.msra.mxu0 0
        %3056 = vmatprep.subr.bf16.mxu0 0
        %3057 = vmatpush1.bf16.msra.mxu0 0
        %3058 = vmatprep.subr.bf16.mxu0 0
        %3059 = vmatpush1.bf16.msra.mxu0 0
        %3060 = vmatprep.subr.bf16.mxu0 0
        %3061 = vmatpush1.bf16.msra.mxu0 0
        %3062 = vmatprep.subr.bf16.mxu0 0
        %3063 = vmatpush1.bf16.msra.mxu0 0
        %3064 = vmatprep.subr.bf16.mxu0 0
        %3065 = vmatpush1.bf16.msra.mxu0 0
        %3066 = vmatprep.subr.bf16.mxu0 0
        %3067 = vmatpush1.bf16.msra.mxu0 0
        %3068 = vmatprep.subr.bf16.mxu0 0
        %3069 = vmatpush1.bf16.msra.mxu0 0
        %3070 = vmatprep.subr.bf16.mxu0 0
        %3071 = vmatpush1.bf16.msra.mxu0 0
        %3072 = vmatprep.mubr.bf16.mxu0 0
        %3073 = vmatmul.mubr.bf16.gmra.mrb[0].mxu0 %v3038
        %v3074 = vpop.f32.mrb[0].mxu0
        %v3075 = vadd.f32 0.0, %v3074
        %v3076 = vpop.f32.mrb[0].mxu0
        %v3077 = vpop.f32.mrb[0].mxu0
        %v3078 = vpop.f32.mrb[0].mxu0
        %3079 = vdwg.mxu0
        %v3080 = vadd.f32 %v2989, %v3075
        %s3081 = scalar_lea.vmem %s9, 120
        %v3082 = vld [vmem:[%s3081] sm:$0xf]
        %v3083 = vld [vmem:[%s3081 + $0x4] sm:$0xf]
        %v3084 = vld [vmem:[%s3081 + $0x8] sm:$0xf]
        %v3085 = vld [vmem:[%s3081 + $0xc] sm:$0xf]
        %v3086 = vld [vmem:[%s3081 + $0x10] sm:$0xf]
        %v3087 = vld [vmem:[%s3081 + $0x14] sm:$0xf]
        %v3088 = vld [vmem:[%s3081 + $0x18] sm:$0xf]
        %v3089 = vld [vmem:[%s3081 + $0x1c] sm:$0xf]
        %v3090 = vld [vmem:[%s3081 + $0x20] sm:$0xf]
        %v3091 = vld [vmem:[%s3081 + $0x24] sm:$0xf]
        %v3092 = vrot.slane %v2846, 1
        %v3103 = vunpack.c.l.b16 %v3082
        %v3104 = vunpack.c.l.b16 %v3083
        %v3105 = vunpack.c.l.b16 %v3084
        %v3106 = vunpack.c.l.b16 %v3085
        %v3107 = vunpack.c.l.b16 %v3086
        %v3108 = vunpack.c.l.b16 %v3087
        %v3109 = vunpack.c.l.b16 %v3088
        %v3110 = vunpack.c.l.b16 %v3089
        %v3111 = vunpack.c.l.b16 %v3090
        %v3112 = vunpack.c.l.b16 %v3091
        %v3113 = vpack.c.b16 %v3104, %v3103
        %v3114 = vpack.c.b16 %v3106, %v3105
        %v3115 = vpack.c.b16 %v3108, %v3107
        %v3116 = vpack.c.b16 %v3110, %v3109
        %v3117 = vpack.c.b16 %v3112, %v3111
        %v3124 = vsel %vm2878, %v3092, 0
        %3126 = vmatprep.subr.bf16.mxu0 0
        %3127 = vmatpush1.bf16.msra.mxu0 %v3113
        %3128 = vmatprep.subr.bf16.mxu0 0
        %3129 = vmatpush1.bf16.msra.mxu0 %v3114
        %3130 = vmatprep.subr.bf16.mxu0 0
        %3131 = vmatpush1.bf16.msra.mxu0 %v3115
        %3132 = vmatprep.subr.bf16.mxu0 0
        %3133 = vmatpush1.bf16.msra.mxu0 %v3116
        %3134 = vmatprep.subr.bf16.mxu0 0
        %3135 = vmatpush1.bf16.msra.mxu0 %v3117
        %3136 = vmatprep.subr.bf16.mxu0 0
        %3137 = vmatpush1.bf16.msra.mxu0 0
        %3138 = vmatprep.subr.bf16.mxu0 0
        %3139 = vmatpush1.bf16.msra.mxu0 0
        %3140 = vmatprep.subr.bf16.mxu0 0
        %3141 = vmatpush1.bf16.msra.mxu0 0
        %3142 = vmatprep.subr.bf16.mxu0 0
        %3143 = vmatpush1.bf16.msra.mxu0 0
        %3144 = vmatprep.subr.bf16.mxu0 0
        %3145 = vmatpush1.bf16.msra.mxu0 0
        %3146 = vmatprep.subr.bf16.mxu0 0
        %3147 = vmatpush1.bf16.msra.mxu0 0
        %3148 = vmatprep.subr.bf16.mxu0 0
        %3149 = vmatpush1.bf16.msra.mxu0 0
        %3150 = vmatprep.subr.bf16.mxu0 0
        %3151 = vmatpush1.bf16.msra.mxu0 0
        %3152 = vmatprep.subr.bf16.mxu0 0
        %3153 = vmatpush1.bf16.msra.mxu0 0
        %3154 = vmatprep.subr.bf16.mxu0 0
        %3155 = vmatpush1.bf16.msra.mxu0 0
        %3156 = vmatprep.subr.bf16.mxu0 0
        %3157 = vmatpush1.bf16.msra.mxu0 0
        %3158 = vmatprep.mubr.bf16.mxu0 0
        %3159 = vmatmul.mubr.bf16.gmra.mrb[0].mxu0 %v3124
        %v3160 = vpop.f32.mrb[0].mxu0
        %v3161 = vadd.f32 0.0, %v3160
        %v3162 = vpop.f32.mrb[0].mxu0
        %v3163 = vpop.f32.mrb[0].mxu0
        %v3164 = vpop.f32.mrb[0].mxu0
        %3165 = vdwg.mxu0
        %v3166 = vadd.f32 %v3080, %v3161
        %s3167 = scalar_lea.vmem %s9, 160
        %v3168 = vld [vmem:[%s3167] sm:$0xf]
        %v3169 = vld [vmem:[%s3167 + $0x4] sm:$0xf]
        %v3170 = vld [vmem:[%s3167 + $0x8] sm:$0xf]
        %v3171 = vld [vmem:[%s3167 + $0xc] sm:$0xf]
        %v3172 = vld [vmem:[%s3167 + $0x10] sm:$0xf]
        %v3173 = vld [vmem:[%s3167 + $0x14] sm:$0xf]
        %v3174 = vld [vmem:[%s3167 + $0x18] sm:$0xf]
        %v3175 = vld [vmem:[%s3167 + $0x1c] sm:$0xf]
        %v3176 = vld [vmem:[%s3167 + $0x20] sm:$0xf]
        %v3177 = vld [vmem:[%s3167 + $0x24] sm:$0xf]
        %v3178 = vrot.slane %v2823, 2
        %v3189 = vunpack.c.l.b16 %v3168
        %v3190 = vunpack.c.l.b16 %v3169
        %v3191 = vunpack.c.l.b16 %v3170
        %v3192 = vunpack.c.l.b16 %v3171
        %v3193 = vunpack.c.l.b16 %v3172
        %v3194 = vunpack.c.l.b16 %v3173
        %v3195 = vunpack.c.l.b16 %v3174
        %v3196 = vunpack.c.l.b16 %v3175
        %v3197 = vunpack.c.l.b16 %v3176
        %v3198 = vunpack.c.l.b16 %v3177
        %v3199 = vpack.c.b16 %v3190, %v3189
        %v3200 = vpack.c.b16 %v3192, %v3191
        %v3201 = vpack.c.b16 %v3194, %v3193
        %v3202 = vpack.c.b16 %v3196, %v3195
        %v3203 = vpack.c.b16 %v3198, %v3197
        %v3210 = vsel %vm2878, %v3178, 0
        %3212 = vmatprep.subr.bf16.mxu0 0
        %3213 = vmatpush1.bf16.msra.mxu0 %v3199
        %3214 = vmatprep.subr.bf16.mxu0 0
        %3215 = vmatpush1.bf16.msra.mxu0 %v3200
        %3216 = vmatprep.subr.bf16.mxu0 0
        %3217 = vmatpush1.bf16.msra.mxu0 %v3201
        %3218 = vmatprep.subr.bf16.mxu0 0
        %3219 = vmatpush1.bf16.msra.mxu0 %v3202
        %3220 = vmatprep.subr.bf16.mxu0 0
        %3221 = vmatpush1.bf16.msra.mxu0 %v3203
        %3222 = vmatprep.subr.bf16.mxu0 0
        %3223 = vmatpush1.bf16.msra.mxu0 0
        %3224 = vmatprep.subr.bf16.mxu0 0
        %3225 = vmatpush1.bf16.msra.mxu0 0
        %3226 = vmatprep.subr.bf16.mxu0 0
        %3227 = vmatpush1.bf16.msra.mxu0 0
        %3228 = vmatprep.subr.bf16.mxu0 0
        %3229 = vmatpush1.bf16.msra.mxu0 0
        %3230 = vmatprep.subr.bf16.mxu0 0
        %3231 = vmatpush1.bf16.msra.mxu0 0
        %3232 = vmatprep.subr.bf16.mxu0 0
        %3233 = vmatpush1.bf16.msra.mxu0 0
        %3234 = vmatprep.subr.bf16.mxu0 0
        %3235 = vmatpush1.bf16.msra.mxu0 0
        %3236 = vmatprep.subr.bf16.mxu0 0
        %3237 = vmatpush1.bf16.msra.mxu0 0
        %3238 = vmatprep.subr.bf16.mxu0 0
        %3239 = vmatpush1.bf16.msra.mxu0 0
        %3240 = vmatprep.subr.bf16.mxu0 0
        %3241 = vmatpush1.bf16.msra.mxu0 0
        %3242 = vmatprep.subr.bf16.mxu0 0
        %3243 = vmatpush1.bf16.msra.mxu0 0
        %3244 = vmatprep.mubr.bf16.mxu0 0
        %3245 = vmatmul.mubr.bf16.gmra.mrb[0].mxu0 %v3210
        %v3246 = vpop.f32.mrb[0].mxu0
        %v3247 = vadd.f32 0.0, %v3246
        %v3248 = vpop.f32.mrb[0].mxu0
        %v3249 = vpop.f32.mrb[0].mxu0
        %v3250 = vpop.f32.mrb[0].mxu0
        %3251 = vdwg.mxu0
        %v3252 = vadd.f32 %v3166, %v3247
        %v3253 = vld [vmem:[%s10] sm:$0x1]
        %v3254 = vadd.f32 %v3252, %v3253
        %v3255 = vmax.f32 %v3254, 0.0
        %v3256 = vpack.c.bf16 %v3255, %v3255
        %v3257 = vld [vmem:[%s11] sm:$0xf]
        %v3258 = vld [vmem:[%s11 + $0x4] sm:$0xf]
        %v3259 = vld [vmem:[%s11 + $0x8] sm:$0xf]
        %v3260 = vld [vmem:[%s11 + $0xc] sm:$0xf]
        %v3261 = vld [vmem:[%s11 + $0x10] sm:$0xf]
        %v3262 = vld [vmem:[%s11 + $0x14] sm:$0xf]
        %v3263 = vld [vmem:[%s11 + $0x18] sm:$0xf]
        %v3264 = vld [vmem:[%s11 + $0x1c] sm:$0xf]
        %v3265 = vld [vmem:[%s11 + $0x20] sm:$0xf]
        %v3266 = vld [vmem:[%s11 + $0x24] sm:$0xf]
        %v3267 = vld [vmem:[%s11 + $0x28] sm:$0xf]
        %v3268 = vld [vmem:[%s11 + $0x2c] sm:$0xf]
        %v3269 = vld [vmem:[%s11 + $0x30] sm:$0xf]
        %v3270 = vld [vmem:[%s11 + $0x34] sm:$0xf]
        %v3271 = vld [vmem:[%s11 + $0x38] sm:$0xf]
        %v3272 = vld [vmem:[%s12] sm:$0x1]
        %v3288 = vunpack.c.l.b16 %v3257
        %v3289 = vunpack.c.l.b16 %v3258
        %v3290 = vunpack.c.l.b16 %v3259
        %v3291 = vunpack.c.l.b16 %v3260
        %v3292 = vunpack.c.l.b16 %v3261
        %v3293 = vunpack.c.l.b16 %v3262
        %v3294 = vunpack.c.l.b16 %v3263
        %v3295 = vunpack.c.l.b16 %v3264
        %v3296 = vunpack.c.l.b16 %v3265
        %v3297 = vunpack.c.l.b16 %v3266
        %v3298 = vunpack.c.l.b16 %v3267
        %v3299 = vunpack.c.l.b16 %v3268
        %v3300 = vunpack.c.l.b16 %v3269
        %v3301 = vunpack.c.l.b16 %v3270
        %v3302 = vunpack.c.l.b16 %v3271
        %v3303 = vpack.c.b16 %v3289, %v3288
        %v3304 = vpack.c.b16 %v3291, %v3290
        %v3305 = vpack.c.b16 %v3293, %v3292
        %v3306 = vpack.c.b16 %v3295, %v3294
        %v3307 = vpack.c.b16 %v3297, %v3296
        %v3308 = vpack.c.b16 %v3299, %v3298
        %v3309 = vpack.c.b16 %v3301, %v3300
        %v3310 = vpack.c.b16 %v3302, %v3302
        %vm3318 = vcmask 982016
        %v3320 = vsel %vm3318, %v3256, 0
        %vm3322 = vcmask 1043456
        %v3324 = vsel %vm3322, %v3310, 0
        %3326 = vmatprep.subr.bf16.mxu0 0
        %3327 = vmatpush1.bf16.msra.mxu0 %v3303
        %3328 = vmatprep.subr.bf16.mxu0 0
        %3329 = vmatpush1.bf16.msra.mxu0 %v3304
        %3330 = vmatprep.subr.bf16.mxu0 0
        %3331 = vmatpush1.bf16.msra.mxu0 %v3305
        %3332 = vmatprep.subr.bf16.mxu0 0
        %3333 = vmatpush1.bf16.msra.mxu0 %v3306
        %3334 = vmatprep.subr.bf16.mxu0 0
        %3335 = vmatpush1.bf16.msra.mxu0 %v3307
        %3336 = vmatprep.subr.bf16.mxu0 0
        %3337 = vmatpush1.bf16.msra.mxu0 %v3308
        %3338 = vmatprep.subr.bf16.mxu0 0
        %3339 = vmatpush1.bf16.msra.mxu0 %v3309
        %3340 = vmatprep.subr.bf16.mxu0 0
        %3341 = vmatpush1.bf16.msra.mxu0 %v3324
        %3342 = vmatprep.subr.bf16.mxu0 0
        %3343 = vmatpush1.bf16.msra.mxu0 0
        %3344 = vmatprep.subr.bf16.mxu0 0
        %3345 = vmatpush1.bf16.msra.mxu0 0
        %3346 = vmatprep.subr.bf16.mxu0 0
        %3347 = vmatpush1.bf16.msra.mxu0 0
        %3348 = vmatprep.subr.bf16.mxu0 0
        %3349 = vmatpush1.bf16.msra.mxu0 0
        %3350 = vmatprep.subr.bf16.mxu0 0
        %3351 = vmatpush1.bf16.msra.mxu0 0
        %3352 = vmatprep.subr.bf16.mxu0 0
        %3353 = vmatpush1.bf16.msra.mxu0 0
        %3354 = vmatprep.subr.bf16.mxu0 0
        %3355 = vmatpush1.bf16.msra.mxu0 0
        %3356 = vmatprep.subr.bf16.mxu0 0
        %3357 = vmatpush1.bf16.msra.mxu0 0
        %3358 = vmatprep.mubr.bf16.mxu0 0
        %3359 = vmatmul.mubr.bf16.gmra.mrb[0].mxu0 %v3320
        %v3360 = vpop.f32.mrb[0].mxu0
        %v3361 = vadd.f32 %v3272, %v3360
        %v3362 = vpop.f32.mrb[0].mxu0
        %v3363 = vpop.f32.mrb[0].mxu0
        %v3364 = vpop.f32.mrb[0].mxu0
        %3365 = vdwg.mxu0
        %v3366 = vmax.f32 %v3361, 0.0
        %v3367 = vpack.c.bf16 %v3366, %v3366
        %v3368 = vld [vmem:[%s13] sm:$0xf]
        %v3369 = vld [vmem:[%s13 + $0x4] sm:$0xf]
        %v3370 = vld [vmem:[%s13 + $0x8] sm:$0xf]
        %v3371 = vld [vmem:[%s13 + $0xc] sm:$0xf]
        %v3372 = vld [vmem:[%s13 + $0x10] sm:$0xf]
        %v3373 = vld [vmem:[%s13 + $0x14] sm:$0xf]
        %v3374 = vld [vmem:[%s13 + $0x18] sm:$0xf]
        %v3375 = vld [vmem:[%s13 + $0x1c] sm:$0xf]
        %v3376 = vld [vmem:[%s13 + $0x20] sm:$0xf]
        %v3377 = vld [vmem:[%s13 + $0x24] sm:$0xf]
        %v3378 = vld [vmem:[%s13 + $0x28] sm:$0x3]
        %v3379 = vld [vmem:[%s14] sm:$0x1]
        %v3391 = vunpack.c.l.b16 %v3368
        %v3392 = vunpack.c.l.b16 %v3369
        %v3393 = vunpack.c.l.b16 %v3370
        %v3394 = vunpack.c.l.b16 %v3371
        %v3395 = vunpack.c.l.b16 %v3372
        %v3396 = vunpack.c.l.b16 %v3373
        %v3397 = vunpack.c.l.b16 %v3374
        %v3398 = vunpack.c.l.b16 %v3375
        %v3399 = vunpack.c.l.b16 %v3376
        %v3400 = vunpack.c.l.b16 %v3377
        %v3401 = vunpack.c.l.b16 %v3378
        %v3402 = vpack.c.b16 %v3392, %v3391
        %v3403 = vpack.c.b16 %v3394, %v3393
        %v3404 = vpack.c.b16 %v3396, %v3395
        %v3405 = vpack.c.b16 %v3398, %v3397
        %v3406 = vpack.c.b16 %v3400, %v3399
        %v3407 = vpack.c.b16 %v3401, %v3401
        %vm3413 = vcmask 687104
        %v3415 = vsel %vm3413, %v3367, 0
        %vm3417 = vcmask 1041408
        %v3419 = vsel %vm3417, %v3407, 0
        %3421 = vmatprep.subr.bf16.mxu0 0
        %3422 = vmatpush1.bf16.msra.mxu0 %v3402
        %3423 = vmatprep.subr.bf16.mxu0 0
        %3424 = vmatpush1.bf16.msra.mxu0 %v3403
        %3425 = vmatprep.subr.bf16.mxu0 0
        %3426 = vmatpush1.bf16.msra.mxu0 %v3404
        %3427 = vmatprep.subr.bf16.mxu0 0
        %3428 = vmatpush1.bf16.msra.mxu0 %v3405
        %3429 = vmatprep.subr.bf16.mxu0 0
        %3430 = vmatpush1.bf16.msra.mxu0 %v3406
        %3431 = vmatprep.subr.bf16.mxu0 0
        %3432 = vmatpush1.bf16.msra.mxu0 %v3419
        %3433 = vmatprep.subr.bf16.mxu0 0
        %3434 = vmatpush1.bf16.msra.mxu0 0
        %3435 = vmatprep.subr.bf16.mxu0 0
        %3436 = vmatpush1.bf16.msra.mxu0 0
        %3437 = vmatprep.subr.bf16.mxu0 0
        %3438 = vmatpush1.bf16.msra.mxu0 0
        %3439 = vmatprep.subr.bf16.mxu0 0
        %3440 = vmatpush1.bf16.msra.mxu0 0
        %3441 = vmatprep.subr.bf16.mxu0 0
        %3442 = vmatpush1.bf16.msra.mxu0 0
        %3443 = vmatprep.subr.bf16.mxu0 0
        %3444 = vmatpush1.bf16.msra.mxu0 0
        %3445 = vmatprep.subr.bf16.mxu0 0
        %3446 = vmatpush1.bf16.msra.mxu0 0
        %3447 = vmatprep.subr.bf16.mxu0 0
        %3448 = vmatpush1.bf16.msra.mxu0 0
        %3449 = vmatprep.subr.bf16.mxu0 0
        %3450 = vmatpush1.bf16.msra.mxu0 0
        %3451 = vmatprep.subr.bf16.mxu0 0
        %3452 = vmatpush1.bf16.msra.mxu0 0
        %3453 = vmatprep.mubr.bf16.mxu0 0
        %3454 = vmatmul.mubr.bf16.gmra.mrb[0].mxu0 %v3415
        %v3455 = vpop.f32.mrb[0].mxu0
        %v3456 = vadd.f32 %v3379, %v3455
        %v3457 = vpop.f32.mrb[0].mxu0
        %v3458 = vpop.f32.mrb[0].mxu0
        %v3459 = vpop.f32.mrb[0].mxu0
        %3460 = vdwg.mxu0
        %vm3461 = vcmask 73728
        %3462 = vst.msk [vmem:[%s486] sm:$0x1] %vm3461, %v3456
        %s3463 = sand.u32 %s357, 1
        %s3464 = scalar_lea.sflag [#allocation3], %s3463
        %s3465 = sand.u32 %s357, 1
        %s3466 = scalar_lea.vmem [#allocation2], %s3465
        // Predicated region
        $region81: #{net1_forward.1} parent=79 // pred_check
          %p3467 = pneg %p367
        $region82: #{net1_forward.1} parent=79 // pred_check_branch
          %3469 = sbr.rel (%p3467) target = $region84
        $region83: #{net1_forward.1} parent=79 // pred_region
          %s3471 = ssub.s32 16, 16
          %3472 = vsyncadd %s3464, %s3471
          %s3473 = smul.addr %s29, 16
          %s3474 = scalar_lea.hbm %s15, %s3473
          %s3476 = sshll.u32 %s3466, 4
          %s3477 = int_to_ptr.vmem [resolvable:$true] %s3476
          %3479 = dma.vmem_to_hbm [thread:$0]  %s3477, 16, %s3474, %s3464
        $region84: #{net1_forward.1} parent=79 // pred_fallthru
          _
      $region80: #{net1_forward.1} parent=5 // pred_fallthru
        _
      %p3480 = scmp.le.s32.totalorder 2, %s24
      // Predicated region
      $region85: #{net1_forward.1} parent=5 // pred_check
        %p3481 = pneg %p3480
      $region86: #{net1_forward.1} parent=5 // pred_check_branch
        %3483 = sbr.rel (%p3481) target = $region88
      $region87: #{net1_forward.1} parent=5 // pred_region
        %s3484 = ssub.s32 %s24, 2
        // Predicated region
        $region89: #{net1_forward.1} parent=87 // pred_check
          %p3485 = pneg %p373
        $region90: #{net1_forward.1} parent=87 // pred_check_branch
          %3487 = sbr.rel (%p3485) target = $region92
        $region91: #{net1_forward.1} parent=87 // pred_region
          %s3488 = sand.u32 %s358, 1
          %s3489 = scalar_lea.sflag [#allocation3], %s3488
          %s3490 = sand.u32 %s358, 1
          %s3491 = scalar_lea.vmem [#allocation2], %s3490
          %3492 = dma.done %s3489, 16
        $region92: #{net1_forward.1} parent=87 // pred_fallthru
          _
      $region88: #{net1_forward.1} parent=5 // pred_fallthru
        _
    $region6: #{net1_forward.1} parent=1 // loop_footer
      %s28 = sadd.s32 1, %s24
    $region7: #{net1_forward.1} parent=1 // loop_footer_branch
      %23 = sbr.rel target = $region3
    $region8: #{net1_forward.1} parent=1 // loop_exit
      _
    %3493 = vsyncpa [#allocation3], 1
    %s3494 = scalar_lea.sflag [#allocation3], 1
    %3495 = vsyncpa %s3494, 1

</llo_original>
